<compile_context>
chip_gen: v7x
topology: tpu7x:2x2x1
jax: 0.10.0
libtpu: 0.0.40
codegen_flags: <defaults>
</compile_context>

<pallas_src>
import math

import jax
import jax.numpy as jnp
from jax.experimental import pallas as pl
from jax.experimental.pallas import tpu as pltpu

NEG_SLOPE = 0.2   # LeakyReLU slope used by GAT attention
NEG_INF = -1e30


# ---------------------------------------------------------------------------
# In-kernel per-layer body (operates on values, not refs)
# ---------------------------------------------------------------------------
def _gat_layer_body(x, mask, w, a_src_bd, a_dst, bias, scale, shift, *,
                    H, F_out, concat, apply_elu):
    """One GAT layer, all heads fused.

    x        : (N, F_in)      f32
    mask     : (N, N)         bool, mask[i, j] = True iff edge j -> i (incl. self-loops)
    w        : (F_in, H*F_out)
    a_src_bd : (H, H*F_out)   block-diagonal source attention (row h holds a_src_h in block h)
    a_dst    : (1, H*F_out)   destination attention, head-major
    bias     : (1, H*F_out) if concat else (1, F_out)
    scale/shift : (1, C) folded eval-BatchNorm, or None
    """
    # Single lane-dense projection for all heads (feeds the full MXU width).
    wh = jnp.dot(x, w, preferred_element_type=jnp.float32)            # (N, H*F_out)

    # src_rows[h, j] = a_src_h . Wh_j(h)  -- one small MXU contraction for all heads.
    src_rows = jax.lax.dot_general(
        a_src_bd, wh, (((1,), (1,)), ((), ())),
        preferred_element_type=jnp.float32)                            # (H, N)

    dst_full = wh * a_dst                                              # (N, H*F_out) (VPU)

    head_outs = []
    for h in range(H):  # static unroll (H is small)
        lo, hi = h * F_out, (h + 1) * F_out
        wh_h = wh[:, lo:hi]                                            # (N, F_out)
        alpha_dst_h = jnp.sum(dst_full[:, lo:hi], axis=-1,
                              keepdims=True)                           # (N, 1)  (XLU reduce)
        src_row_h = src_rows[h:h + 1, :]                               # (1, N)

        s = alpha_dst_h + src_row_h                                    # (N, N) broadcast
        s = jnp.where(s > 0, s, NEG_SLOPE * s)                         # LeakyReLU
        s = jnp.where(mask, s, NEG_INF)

        # softmax over source axis (self-loops guarantee >= 1 valid entry per row).
        s_max = jnp.max(s, axis=-1, keepdims=True)
        p = jnp.exp(s - s_max)
        p = jnp.where(mask, p, 0.0)
        denom = jnp.sum(p, axis=-1, keepdims=True)
        attn = p * pl.reciprocal(denom, approx=True)                   # EUP vrcp

        # bf16 operands into the MXU (2x rate), f32 accumulation.
        out_h = jnp.dot(attn.astype(jnp.bfloat16), wh_h.astype(jnp.bfloat16),
                        preferred_element_type=jnp.float32)            # (N, F_out)
        head_outs.append(out_h)

    if concat:
        y = jnp.concatenate(head_outs, axis=-1) + bias                 # (N, H*F_out)
    else:
        acc = head_outs[0]
        for t in head_outs[1:]:
            acc = acc + t
        y = acc * jnp.float32(1.0 / H) + bias                          # (N, F_out), shared bias

    if scale is not None:                                              # eval BatchNorm (folded)
        y = y * scale + shift
    if apply_elu:
        y = jnp.where(y > 0, y, jnp.exp(jnp.minimum(y, 0.0)) - 1.0)    # ELU
    return y


# ---------------------------------------------------------------------------
# Whole-network fused kernel
# ---------------------------------------------------------------------------
def make_net_kernel(layer_cfgs):
    """layer_cfgs: per-layer static config dicts (H, F_out, concat, apply_bn, apply_elu)."""

    def kernel(x_ref, mask_ref, *refs):
        out_ref = refs[-1]
        prm = refs[:-1]

        x = x_ref[...]
        mask = mask_ref[...] > 0                                       # int32 -> bool once

        idx = 0
        for cfg in layer_cfgs:
            w = prm[idx][...]
            a_src_bd = prm[idx + 1][...]
            a_dst = prm[idx + 2][...]
            bias = prm[idx + 3][...]
            idx += 4
            if cfg["apply_bn"]:
                scale = prm[idx][...]
                shift = prm[idx + 1][...]
                idx += 2
            else:
                scale = shift = None
            # F.dropout(..., training=False) -> identity (eval mode)
            x = _gat_layer_body(x, mask, w, a_src_bd, a_dst, bias, scale, shift,
                                H=cfg["H"], F_out=cfg["F_out"],
                                concat=cfg["concat"], apply_elu=cfg["apply_elu"])

        out_ref[...] = x.astype(out_ref.dtype)

    return kernel


def large_super_gat_forward(x, adj_mask, params):
    """x: (N, F0) f32, adj_mask: (N, N) int32, params: list of per-layer dicts."""
    N = x.shape[0]
    n_layers = len(params)

    layer_cfgs = []
    flat = []
    for li, p in enumerate(params):
        layer_cfgs.append(dict(H=p["H"], F_out=p["F_out"], concat=p["concat"],
                               apply_bn=p["bn"] is not None,
                               apply_elu=(li != n_layers - 1)))
        flat += [p["W"], p["a_src_bd"], p["a_dst"], p["bias"]]
        if p["bn"] is not None:
            flat += [p["bn"][0], p["bn"][1]]

    last = params[-1]
    out_dim = last["H"] * last["F_out"] if last["concat"] else last["F_out"]
    # NOTE: out_dim = num_classes (=7) < 128 lanes -> masked stores; negligible at this N.

    kernel = make_net_kernel(layer_cfgs)
    in_specs = [pl.BlockSpec(x.shape, lambda: (0, 0)),
                pl.BlockSpec(adj_mask.shape, lambda: (0, 0))]
    in_specs += [pl.BlockSpec(a.shape, lambda: (0, 0)) for a in flat]

    return pl.pallas_call(
        kernel,
        out_shape=jax.ShapeDtypeStruct((N, out_dim), jnp.float32),
        in_specs=in_specs,
        out_specs=pl.BlockSpec((N, out_dim), lambda: (0, 0)),
        compiler_params=pltpu.CompilerParams(vmem_limit_bytes=64 * 1024 * 1024),
    )(x, adj_mask, *flat)


# ---------------------------------------------------------------------------
# Parameter init (deterministic, mirrors module __init__ shapes)
# ---------------------------------------------------------------------------
def init_params(key, *, num_layers, num_features, hidden, heads, out_heads,
                num_classes, use_bn):
    params = []
    for conv_id in range(1, num_layers + 1):
        if conv_id == 1:
            in_c, out_c, H, concat = num_features, hidden, heads, True
        elif conv_id == num_layers:
            in_c, out_c, H, concat = hidden * heads, num_classes, (out_heads or heads), False
        else:
            in_c, out_c, H, concat = hidden * heads, hidden, heads, True

        key, kw, ka = jax.random.split(key, 3)
        # glorot uniform on the (in_c, H*out_c) projection (head-major columns, as in PyG)
        lim_w = math.sqrt(6.0 / (in_c + H * out_c))
        W = jax.random.uniform(kw, (in_c, H * out_c), jnp.float32, -lim_w, lim_w)
        # glorot uniform on the (1, H, 2*out_c) attention vector
        lim_a = math.sqrt(6.0 / (1 + 2 * out_c))
        att = jax.random.uniform(ka, (H, 2 * out_c), jnp.float32, -lim_a, lim_a)
        a_src = att[:, :out_c]                               # (H, out_c)
        a_dst = att[:, out_c:].reshape(1, H * out_c)         # (1, H*out_c) head-major
        eye = jnp.eye(H, dtype=jnp.float32)
        a_src_bd = (eye[:, :, None] * a_src[None, :, :]).reshape(H, H * out_c)

        c_out = H * out_c if concat else out_c               # PyG: shared bias when concat=False
        bias = jnp.zeros((1, c_out), jnp.float32)            # PyG inits bias to zeros

        bn = None
        if use_bn and conv_id != num_layers:
            C = H * out_c
            gamma = jnp.ones((C,), jnp.float32)
            beta = jnp.zeros((C,), jnp.float32)
            run_mean = jnp.zeros((C,), jnp.float32)
            run_var = jnp.ones((C,), jnp.float32)
            eps = 1e-5
            scale = (gamma / jnp.sqrt(run_var + eps)).reshape(1, C)
            shift = (beta - run_mean * scale[0]).reshape(1, C)
            bn = (scale, shift)

        params.append(dict(W=W, a_src_bd=a_src_bd, a_dst=a_dst, bias=bias,
                           H=H, F_out=out_c, concat=concat, bn=bn))
    return params


def build_adj_mask(edge_index, num_nodes):
    """edge_index: (2, E) int32, row 0 = src, row 1 = dst.  mask[dst, src] = 1 (int32)."""
    src, dst = edge_index[0], edge_index[1]
    mask = jnp.zeros((num_nodes, num_nodes), jnp.int32)
    mask = mask.at[dst, src].set(1)
    idx = jnp.arange(num_nodes)
    mask = mask.at[idx, idx].set(1)  # add self-loops (as SuperGAT/GATConv does)
    return mask


# ---------------------------------------------------------------------------
# Pure-JAX reference (f32 everywhere, exact math) for validation
# ---------------------------------------------------------------------------
def reference_forward(x, adj_mask, params):
    mask = adj_mask > 0
    n_layers = len(params)
    for li, prm in enumerate(params):
        H, F_out, concat = prm["H"], prm["F_out"], prm["concat"]
        wh = x @ prm["W"]
        src_rows = prm["a_src_bd"] @ wh.T                    # (H, N)
        outs = []
        for h in range(H):
            lo, hi = h * F_out, (h + 1) * F_out
            wh_h = wh[:, lo:hi]
            ad = jnp.sum(wh_h * prm["a_dst"][:, lo:hi], axis=-1, keepdims=True)
            s = ad + src_rows[h][None, :]
            s = jnp.where(s > 0, s, NEG_SLOPE * s)
            s = jnp.where(mask, s, NEG_INF)
            att = jax.nn.softmax(s, axis=-1)
            att = jnp.where(mask, att, 0.0)
            outs.append(att @ wh_h)
        if concat:
            y = jnp.concatenate(outs, axis=-1) + prm["bias"]
        else:
            y = sum(outs) / H + prm["bias"]
        if prm["bn"] is not None:
            y = y * prm["bn"][0] + prm["bn"][1]
        if li != n_layers - 1:
            y = jnp.where(y > 0, y, jnp.exp(jnp.minimum(y, 0.0)) - 1.0)
        x = y
    return x


# ---------------------------------------------------------------------------
# Main
# ---------------------------------------------------------------------------
if __name__ == "__main__":
    NUM_LAYERS = 3
    NUM_FEATURES = 16
    HIDDEN = 32
    HEADS = 4
    OUT_HEADS = None
    NUM_CLASSES = 7
    USE_BN = True
    N_NODES = 32
    N_EDGES = 64

    key = jax.random.PRNGKey(0)
    kx, ke, kp = jax.random.split(key, 3)

    x = jax.random.normal(kx, (N_NODES, NUM_FEATURES), jnp.float32)
    edge_index = jax.random.randint(ke, (2, N_EDGES), 0, N_NODES, jnp.int32)

    params = init_params(kp, num_layers=NUM_LAYERS, num_features=NUM_FEATURES,
                         hidden=HIDDEN, heads=HEADS, out_heads=OUT_HEADS,
                         num_classes=NUM_CLASSES, use_bn=USE_BN)

    adj_mask = build_adj_mask(edge_index, N_NODES)

    fwd = jax.jit(lambda a, m: large_super_gat_forward(a, m, params))
    out = jax.block_until_ready(fwd(x, adj_mask))

    assert out.shape == (N_NODES, NUM_CLASSES), out.shape
    assert jnp.all(jnp.isfinite(out))

    ref = reference_forward(x, adj_mask, params)
    max_err = float(jnp.max(jnp.abs(out - ref)))
    assert max_err < 1e-1, f"max abs err vs reference: {max_err}"

    print("KERNEL_OK")
</pallas_src>

<mosaic_0001>
module attributes {stable_mosaic.version = 11 : i64} {
  func.func @kernel(%arg0: memref<32x16xf32, #tpu.memory_space<vmem>>, %arg1: memref<32x32xi32, #tpu.memory_space<vmem>>, %arg2: memref<16x128xf32, #tpu.memory_space<vmem>>, %arg3: memref<4x128xf32, #tpu.memory_space<vmem>>, %arg4: memref<1x128xf32, #tpu.memory_space<vmem>>, %arg5: memref<1x128xf32, #tpu.memory_space<vmem>>, %arg6: memref<1x128xf32, #tpu.memory_space<vmem>>, %arg7: memref<1x128xf32, #tpu.memory_space<vmem>>, %arg8: memref<128x128xf32, #tpu.memory_space<vmem>>, %arg9: memref<4x128xf32, #tpu.memory_space<vmem>>, %arg10: memref<1x128xf32, #tpu.memory_space<vmem>>, %arg11: memref<1x128xf32, #tpu.memory_space<vmem>>, %arg12: memref<1x128xf32, #tpu.memory_space<vmem>>, %arg13: memref<1x128xf32, #tpu.memory_space<vmem>>, %arg14: memref<128x28xf32, #tpu.memory_space<vmem>>, %arg15: memref<4x28xf32, #tpu.memory_space<vmem>>, %arg16: memref<1x28xf32, #tpu.memory_space<vmem>>, %arg17: memref<1x7xf32, #tpu.memory_space<vmem>>, %arg18: memref<32x7xf32, #tpu.memory_space<vmem>>) attributes {dimension_semantics = [], scalar_prefetch = 0 : i64, scratch_operands = 0 : i64, tpu.core_type = #tpu.core_type<tc>} {
    %c0 = arith.constant 0 : index
    %c0_0 = arith.constant 0 : index
    %0 = vector.load %arg0[%c0, %c0_0] : memref<32x16xf32, #tpu.memory_space<vmem>>, vector<32x16xf32>
    %c0_1 = arith.constant 0 : index
    %c0_2 = arith.constant 0 : index
    %1 = vector.load %arg1[%c0_1, %c0_2] : memref<32x32xi32, #tpu.memory_space<vmem>>, vector<32x32xi32>
    %c0_i32 = arith.constant 0 : i32
    %2 = vector.broadcast %c0_i32 : i32 to vector<32x32xi32>
    %3 = arith.cmpi sgt, %1, %2 : vector<32x32xi32>
    %c0_3 = arith.constant 0 : index
    %c0_4 = arith.constant 0 : index
    %4 = vector.load %arg2[%c0_3, %c0_4] : memref<16x128xf32, #tpu.memory_space<vmem>>, vector<16x128xf32>
    %c0_5 = arith.constant 0 : index
    %c0_6 = arith.constant 0 : index
    %5 = vector.load %arg3[%c0_5, %c0_6] : memref<4x128xf32, #tpu.memory_space<vmem>>, vector<4x128xf32>
    %c0_7 = arith.constant 0 : index
    %c0_8 = arith.constant 0 : index
    %6 = vector.load %arg4[%c0_7, %c0_8] : memref<1x128xf32, #tpu.memory_space<vmem>>, vector<1x128xf32>
    %c0_9 = arith.constant 0 : index
    %c0_10 = arith.constant 0 : index
    %7 = vector.load %arg5[%c0_9, %c0_10] : memref<1x128xf32, #tpu.memory_space<vmem>>, vector<1x128xf32>
    %c0_11 = arith.constant 0 : index
    %c0_12 = arith.constant 0 : index
    %8 = vector.load %arg6[%c0_11, %c0_12] : memref<1x128xf32, #tpu.memory_space<vmem>>, vector<1x128xf32>
    %c0_13 = arith.constant 0 : index
    %c0_14 = arith.constant 0 : index
    %9 = vector.load %arg7[%c0_13, %c0_14] : memref<1x128xf32, #tpu.memory_space<vmem>>, vector<1x128xf32>
    %cst = arith.constant dense<0.000000e+00> : vector<32x128xf32>
    %10 = tpu.matmul %0, %4, %cst {dimension_numbers = #tpu.dot_dimension_numbers<[1], [0], [0], [1], [0, 0, 1, 1], [], []>} : vector<32x16xf32>, vector<16x128xf32>, vector<32x128xf32> -> vector<32x128xf32>
    %cst_15 = arith.constant dense<0.000000e+00> : vector<4x32xf32>
    %11 = tpu.matmul %5, %10, %cst_15 {dimension_numbers = #tpu.dot_dimension_numbers<[1], [1], [0], [0], [0, 0, 1, 0], [], []>} : vector<4x128xf32>, vector<32x128xf32>, vector<4x32xf32> -> vector<4x32xf32>
    %12 = vector.broadcast %6 : vector<1x128xf32> to vector<32x128xf32>
    %13 = arith.mulf %10, %12 : vector<32x128xf32>
    %14 = vector.extract_strided_slice %10 {offsets = [0, 0], sizes = [32, 32], strides = [1, 1]} : vector<32x128xf32> to vector<32x32xf32>
    %15 = vector.extract_strided_slice %13 {offsets = [0, 0], sizes = [32, 32], strides = [1, 1]} : vector<32x128xf32> to vector<32x32xf32>
    %cst_16 = arith.constant dense<0.000000e+00> : vector<32xf32>
    %16 = vector.multi_reduction <add>, %15, %cst_16 [1] : vector<32x32xf32> to vector<32xf32>
    %17 = vector.shape_cast %16 : vector<32xf32> to vector<32x1xf32>
    %18 = vector.extract_strided_slice %11 {offsets = [0, 0], sizes = [1, 32], strides = [1, 1]} : vector<4x32xf32> to vector<1x32xf32>
    %19 = vector.broadcast %17 : vector<32x1xf32> to vector<32x32xf32>
    %20 = vector.broadcast %18 : vector<1x32xf32> to vector<32x32xf32>
    %21 = arith.addf %19, %20 : vector<32x32xf32>
    %cst_17 = arith.constant 0.000000e+00 : f32
    %22 = vector.broadcast %cst_17 : f32 to vector<32x32xf32>
    %23 = arith.cmpf ogt, %21, %22 : vector<32x32xf32>
    %cst_18 = arith.constant 2.000000e-01 : f32
    %24 = vector.broadcast %cst_18 : f32 to vector<32x32xf32>
    %25 = arith.mulf %24, %21 : vector<32x32xf32>
    %26 = arith.select %23, %21, %25 : vector<32x32xi1>, vector<32x32xf32>
    %cst_19 = arith.constant -1.000000e+30 : f32
    %27 = vector.broadcast %cst_19 : f32 to vector<32x32xf32>
    %28 = arith.select %3, %26, %27 : vector<32x32xi1>, vector<32x32xf32>
    %cst_20 = arith.constant dense<0xFF800000> : vector<32xf32>
    %29 = vector.multi_reduction <maximumf>, %28, %cst_20 [1] : vector<32x32xf32> to vector<32xf32>
    %30 = vector.shape_cast %29 : vector<32xf32> to vector<32x1xf32>
    %31 = vector.broadcast %30 : vector<32x1xf32> to vector<32x32xf32>
    %32 = arith.subf %28, %31 : vector<32x32xf32>
    %33 = math.exp %32 : vector<32x32xf32>
    %cst_21 = arith.constant 0.000000e+00 : f32
    %34 = vector.broadcast %cst_21 : f32 to vector<32x32xf32>
    %35 = arith.select %3, %33, %34 : vector<32x32xi1>, vector<32x32xf32>
    %cst_22 = arith.constant dense<0.000000e+00> : vector<32xf32>
    %36 = vector.multi_reduction <add>, %35, %cst_22 [1] : vector<32x32xf32> to vector<32xf32>
    %37 = vector.shape_cast %36 : vector<32xf32> to vector<32x1xf32>
    %38 = tpu.reciprocal %37 {approx = true} : vector<32x1xf32> -> vector<32x1xf32>
    %39 = vector.broadcast %38 : vector<32x1xf32> to vector<32x32xf32>
    %40 = arith.mulf %35, %39 : vector<32x32xf32>
    %41 = arith.truncf %40 : vector<32x32xf32> to vector<32x32xbf16>
    %42 = arith.truncf %14 : vector<32x32xf32> to vector<32x32xbf16>
    %cst_23 = arith.constant dense<0.000000e+00> : vector<32x32xf32>
    %43 = tpu.matmul %41, %42, %cst_23 {dimension_numbers = #tpu.dot_dimension_numbers<[1], [0], [0], [1], [0, 0, 1, 1], [], []>} : vector<32x32xbf16>, vector<32x32xbf16>, vector<32x32xf32> -> vector<32x32xf32>
    %44 = vector.extract_strided_slice %10 {offsets = [0, 32], sizes = [32, 32], strides = [1, 1]} : vector<32x128xf32> to vector<32x32xf32>
    %45 = vector.extract_strided_slice %13 {offsets = [0, 32], sizes = [32, 32], strides = [1, 1]} : vector<32x128xf32> to vector<32x32xf32>
    %cst_24 = arith.constant dense<0.000000e+00> : vector<32xf32>
    %46 = vector.multi_reduction <add>, %45, %cst_24 [1] : vector<32x32xf32> to vector<32xf32>
    %47 = vector.shape_cast %46 : vector<32xf32> to vector<32x1xf32>
    %48 = vector.extract_strided_slice %11 {offsets = [1, 0], sizes = [1, 32], strides = [1, 1]} : vector<4x32xf32> to vector<1x32xf32>
    %49 = vector.broadcast %47 : vector<32x1xf32> to vector<32x32xf32>
    %50 = vector.broadcast %48 : vector<1x32xf32> to vector<32x32xf32>
    %51 = arith.addf %49, %50 : vector<32x32xf32>
    %cst_25 = arith.constant 0.000000e+00 : f32
    %52 = vector.broadcast %cst_25 : f32 to vector<32x32xf32>
    %53 = arith.cmpf ogt, %51, %52 : vector<32x32xf32>
    %cst_26 = arith.constant 2.000000e-01 : f32
    %54 = vector.broadcast %cst_26 : f32 to vector<32x32xf32>
    %55 = arith.mulf %54, %51 : vector<32x32xf32>
    %56 = arith.select %53, %51, %55 : vector<32x32xi1>, vector<32x32xf32>
    %cst_27 = arith.constant -1.000000e+30 : f32
    %57 = vector.broadcast %cst_27 : f32 to vector<32x32xf32>
    %58 = arith.select %3, %56, %57 : vector<32x32xi1>, vector<32x32xf32>
    %cst_28 = arith.constant dense<0xFF800000> : vector<32xf32>
    %59 = vector.multi_reduction <maximumf>, %58, %cst_28 [1] : vector<32x32xf32> to vector<32xf32>
    %60 = vector.shape_cast %59 : vector<32xf32> to vector<32x1xf32>
    %61 = vector.broadcast %60 : vector<32x1xf32> to vector<32x32xf32>
    %62 = arith.subf %58, %61 : vector<32x32xf32>
    %63 = math.exp %62 : vector<32x32xf32>
    %cst_29 = arith.constant 0.000000e+00 : f32
    %64 = vector.broadcast %cst_29 : f32 to vector<32x32xf32>
    %65 = arith.select %3, %63, %64 : vector<32x32xi1>, vector<32x32xf32>
    %cst_30 = arith.constant dense<0.000000e+00> : vector<32xf32>
    %66 = vector.multi_reduction <add>, %65, %cst_30 [1] : vector<32x32xf32> to vector<32xf32>
    %67 = vector.shape_cast %66 : vector<32xf32> to vector<32x1xf32>
    %68 = tpu.reciprocal %67 {approx = true} : vector<32x1xf32> -> vector<32x1xf32>
    %69 = vector.broadcast %68 : vector<32x1xf32> to vector<32x32xf32>
    %70 = arith.mulf %65, %69 : vector<32x32xf32>
    %71 = arith.truncf %70 : vector<32x32xf32> to vector<32x32xbf16>
    %72 = arith.truncf %44 : vector<32x32xf32> to vector<32x32xbf16>
    %cst_31 = arith.constant dense<0.000000e+00> : vector<32x32xf32>
    %73 = tpu.matmul %71, %72, %cst_31 {dimension_numbers = #tpu.dot_dimension_numbers<[1], [0], [0], [1], [0, 0, 1, 1], [], []>} : vector<32x32xbf16>, vector<32x32xbf16>, vector<32x32xf32> -> vector<32x32xf32>
    %74 = vector.extract_strided_slice %10 {offsets = [0, 64], sizes = [32, 32], strides = [1, 1]} : vector<32x128xf32> to vector<32x32xf32>
    %75 = vector.extract_strided_slice %13 {offsets = [0, 64], sizes = [32, 32], strides = [1, 1]} : vector<32x128xf32> to vector<32x32xf32>
    %cst_32 = arith.constant dense<0.000000e+00> : vector<32xf32>
    %76 = vector.multi_reduction <add>, %75, %cst_32 [1] : vector<32x32xf32> to vector<32xf32>
    %77 = vector.shape_cast %76 : vector<32xf32> to vector<32x1xf32>
    %78 = vector.extract_strided_slice %11 {offsets = [2, 0], sizes = [1, 32], strides = [1, 1]} : vector<4x32xf32> to vector<1x32xf32>
    %79 = vector.broadcast %77 : vector<32x1xf32> to vector<32x32xf32>
    %80 = vector.broadcast %78 : vector<1x32xf32> to vector<32x32xf32>
    %81 = arith.addf %79, %80 : vector<32x32xf32>
    %cst_33 = arith.constant 0.000000e+00 : f32
    %82 = vector.broadcast %cst_33 : f32 to vector<32x32xf32>
    %83 = arith.cmpf ogt, %81, %82 : vector<32x32xf32>
    %cst_34 = arith.constant 2.000000e-01 : f32
    %84 = vector.broadcast %cst_34 : f32 to vector<32x32xf32>
    %85 = arith.mulf %84, %81 : vector<32x32xf32>
    %86 = arith.select %83, %81, %85 : vector<32x32xi1>, vector<32x32xf32>
    %cst_35 = arith.constant -1.000000e+30 : f32
    %87 = vector.broadcast %cst_35 : f32 to vector<32x32xf32>
    %88 = arith.select %3, %86, %87 : vector<32x32xi1>, vector<32x32xf32>
    %cst_36 = arith.constant dense<0xFF800000> : vector<32xf32>
    %89 = vector.multi_reduction <maximumf>, %88, %cst_36 [1] : vector<32x32xf32> to vector<32xf32>
    %90 = vector.shape_cast %89 : vector<32xf32> to vector<32x1xf32>
    %91 = vector.broadcast %90 : vector<32x1xf32> to vector<32x32xf32>
    %92 = arith.subf %88, %91 : vector<32x32xf32>
    %93 = math.exp %92 : vector<32x32xf32>
    %cst_37 = arith.constant 0.000000e+00 : f32
    %94 = vector.broadcast %cst_37 : f32 to vector<32x32xf32>
    %95 = arith.select %3, %93, %94 : vector<32x32xi1>, vector<32x32xf32>
    %cst_38 = arith.constant dense<0.000000e+00> : vector<32xf32>
    %96 = vector.multi_reduction <add>, %95, %cst_38 [1] : vector<32x32xf32> to vector<32xf32>
    %97 = vector.shape_cast %96 : vector<32xf32> to vector<32x1xf32>
    %98 = tpu.reciprocal %97 {approx = true} : vector<32x1xf32> -> vector<32x1xf32>
    %99 = vector.broadcast %98 : vector<32x1xf32> to vector<32x32xf32>
    %100 = arith.mulf %95, %99 : vector<32x32xf32>
    %101 = arith.truncf %100 : vector<32x32xf32> to vector<32x32xbf16>
    %102 = arith.truncf %74 : vector<32x32xf32> to vector<32x32xbf16>
    %cst_39 = arith.constant dense<0.000000e+00> : vector<32x32xf32>
    %103 = tpu.matmul %101, %102, %cst_39 {dimension_numbers = #tpu.dot_dimension_numbers<[1], [0], [0], [1], [0, 0, 1, 1], [], []>} : vector<32x32xbf16>, vector<32x32xbf16>, vector<32x32xf32> -> vector<32x32xf32>
    %104 = vector.extract_strided_slice %10 {offsets = [0, 96], sizes = [32, 32], strides = [1, 1]} : vector<32x128xf32> to vector<32x32xf32>
    %105 = vector.extract_strided_slice %13 {offsets = [0, 96], sizes = [32, 32], strides = [1, 1]} : vector<32x128xf32> to vector<32x32xf32>
    %cst_40 = arith.constant dense<0.000000e+00> : vector<32xf32>
    %106 = vector.multi_reduction <add>, %105, %cst_40 [1] : vector<32x32xf32> to vector<32xf32>
    %107 = vector.shape_cast %106 : vector<32xf32> to vector<32x1xf32>
    %108 = vector.extract_strided_slice %11 {offsets = [3, 0], sizes = [1, 32], strides = [1, 1]} : vector<4x32xf32> to vector<1x32xf32>
    %109 = vector.broadcast %107 : vector<32x1xf32> to vector<32x32xf32>
    %110 = vector.broadcast %108 : vector<1x32xf32> to vector<32x32xf32>
    %111 = arith.addf %109, %110 : vector<32x32xf32>
    %cst_41 = arith.constant 0.000000e+00 : f32
    %112 = vector.broadcast %cst_41 : f32 to vector<32x32xf32>
    %113 = arith.cmpf ogt, %111, %112 : vector<32x32xf32>
    %cst_42 = arith.constant 2.000000e-01 : f32
    %114 = vector.broadcast %cst_42 : f32 to vector<32x32xf32>
    %115 = arith.mulf %114, %111 : vector<32x32xf32>
    %116 = arith.select %113, %111, %115 : vector<32x32xi1>, vector<32x32xf32>
    %cst_43 = arith.constant -1.000000e+30 : f32
    %117 = vector.broadcast %cst_43 : f32 to vector<32x32xf32>
    %118 = arith.select %3, %116, %117 : vector<32x32xi1>, vector<32x32xf32>
    %cst_44 = arith.constant dense<0xFF800000> : vector<32xf32>
    %119 = vector.multi_reduction <maximumf>, %118, %cst_44 [1] : vector<32x32xf32> to vector<32xf32>
    %120 = vector.shape_cast %119 : vector<32xf32> to vector<32x1xf32>
    %121 = vector.broadcast %120 : vector<32x1xf32> to vector<32x32xf32>
    %122 = arith.subf %118, %121 : vector<32x32xf32>
    %123 = math.exp %122 : vector<32x32xf32>
    %cst_45 = arith.constant 0.000000e+00 : f32
    %124 = vector.broadcast %cst_45 : f32 to vector<32x32xf32>
    %125 = arith.select %3, %123, %124 : vector<32x32xi1>, vector<32x32xf32>
    %cst_46 = arith.constant dense<0.000000e+00> : vector<32xf32>
    %126 = vector.multi_reduction <add>, %125, %cst_46 [1] : vector<32x32xf32> to vector<32xf32>
    %127 = vector.shape_cast %126 : vector<32xf32> to vector<32x1xf32>
    %128 = tpu.reciprocal %127 {approx = true} : vector<32x1xf32> -> vector<32x1xf32>
    %129 = vector.broadcast %128 : vector<32x1xf32> to vector<32x32xf32>
    %130 = arith.mulf %125, %129 : vector<32x32xf32>
    %131 = arith.truncf %130 : vector<32x32xf32> to vector<32x32xbf16>
    %132 = arith.truncf %104 : vector<32x32xf32> to vector<32x32xbf16>
    %cst_47 = arith.constant dense<0.000000e+00> : vector<32x32xf32>
    %133 = tpu.matmul %131, %132, %cst_47 {dimension_numbers = #tpu.dot_dimension_numbers<[1], [0], [0], [1], [0, 0, 1, 1], [], []>} : vector<32x32xbf16>, vector<32x32xbf16>, vector<32x32xf32> -> vector<32x32xf32>
    %134 = tpu.concatenate %43, %73, %103, %133 in 1 : vector<32x32xf32>, vector<32x32xf32>, vector<32x32xf32>, vector<32x32xf32> -> vector<32x128xf32>
    %135 = vector.broadcast %7 : vector<1x128xf32> to vector<32x128xf32>
    %136 = arith.addf %134, %135 : vector<32x128xf32>
    %137 = vector.broadcast %8 : vector<1x128xf32> to vector<32x128xf32>
    %138 = arith.mulf %136, %137 : vector<32x128xf32>
    %139 = vector.broadcast %9 : vector<1x128xf32> to vector<32x128xf32>
    %140 = arith.addf %138, %139 : vector<32x128xf32>
    %cst_48 = arith.constant 0.000000e+00 : f32
    %141 = vector.broadcast %cst_48 : f32 to vector<32x128xf32>
    %142 = arith.cmpf ogt, %140, %141 : vector<32x128xf32>
    %cst_49 = arith.constant 0.000000e+00 : f32
    %143 = vector.broadcast %cst_49 : f32 to vector<32x128xf32>
    %144 = arith.minimumf %140, %143 : vector<32x128xf32>
    %145 = math.exp %144 : vector<32x128xf32>
    %cst_50 = arith.constant 1.000000e+00 : f32
    %146 = vector.broadcast %cst_50 : f32 to vector<32x128xf32>
    %147 = arith.subf %145, %146 : vector<32x128xf32>
    %148 = arith.select %142, %140, %147 : vector<32x128xi1>, vector<32x128xf32>
    %c0_51 = arith.constant 0 : index
    %c0_52 = arith.constant 0 : index
    %149 = vector.load %arg8[%c0_51, %c0_52] : memref<128x128xf32, #tpu.memory_space<vmem>>, vector<128x128xf32>
    %c0_53 = arith.constant 0 : index
    %c0_54 = arith.constant 0 : index
    %150 = vector.load %arg9[%c0_53, %c0_54] : memref<4x128xf32, #tpu.memory_space<vmem>>, vector<4x128xf32>
    %c0_55 = arith.constant 0 : index
    %c0_56 = arith.constant 0 : index
    %151 = vector.load %arg10[%c0_55, %c0_56] : memref<1x128xf32, #tpu.memory_space<vmem>>, vector<1x128xf32>
    %c0_57 = arith.constant 0 : index
    %c0_58 = arith.constant 0 : index
    %152 = vector.load %arg11[%c0_57, %c0_58] : memref<1x128xf32, #tpu.memory_space<vmem>>, vector<1x128xf32>
    %c0_59 = arith.constant 0 : index
    %c0_60 = arith.constant 0 : index
    %153 = vector.load %arg12[%c0_59, %c0_60] : memref<1x128xf32, #tpu.memory_space<vmem>>, vector<1x128xf32>
    %c0_61 = arith.constant 0 : index
    %c0_62 = arith.constant 0 : index
    %154 = vector.load %arg13[%c0_61, %c0_62] : memref<1x128xf32, #tpu.memory_space<vmem>>, vector<1x128xf32>
    %cst_63 = arith.constant dense<0.000000e+00> : vector<32x128xf32>
    %155 = tpu.matmul %148, %149, %cst_63 {dimension_numbers = #tpu.dot_dimension_numbers<[1], [0], [0], [1], [0, 0, 1, 1], [], []>} : vector<32x128xf32>, vector<128x128xf32>, vector<32x128xf32> -> vector<32x128xf32>
    %cst_64 = arith.constant dense<0.000000e+00> : vector<4x32xf32>
    %156 = tpu.matmul %150, %155, %cst_64 {dimension_numbers = #tpu.dot_dimension_numbers<[1], [1], [0], [0], [0, 0, 1, 0], [], []>} : vector<4x128xf32>, vector<32x128xf32>, vector<4x32xf32> -> vector<4x32xf32>
    %157 = vector.broadcast %151 : vector<1x128xf32> to vector<32x128xf32>
    %158 = arith.mulf %155, %157 : vector<32x128xf32>
    %159 = vector.extract_strided_slice %155 {offsets = [0, 0], sizes = [32, 32], strides = [1, 1]} : vector<32x128xf32> to vector<32x32xf32>
    %160 = vector.extract_strided_slice %158 {offsets = [0, 0], sizes = [32, 32], strides = [1, 1]} : vector<32x128xf32> to vector<32x32xf32>
    %cst_65 = arith.constant dense<0.000000e+00> : vector<32xf32>
    %161 = vector.multi_reduction <add>, %160, %cst_65 [1] : vector<32x32xf32> to vector<32xf32>
    %162 = vector.shape_cast %161 : vector<32xf32> to vector<32x1xf32>
    %163 = vector.extract_strided_slice %156 {offsets = [0, 0], sizes = [1, 32], strides = [1, 1]} : vector<4x32xf32> to vector<1x32xf32>
    %164 = vector.broadcast %162 : vector<32x1xf32> to vector<32x32xf32>
    %165 = vector.broadcast %163 : vector<1x32xf32> to vector<32x32xf32>
    %166 = arith.addf %164, %165 : vector<32x32xf32>
    %cst_66 = arith.constant 0.000000e+00 : f32
    %167 = vector.broadcast %cst_66 : f32 to vector<32x32xf32>
    %168 = arith.cmpf ogt, %166, %167 : vector<32x32xf32>
    %cst_67 = arith.constant 2.000000e-01 : f32
    %169 = vector.broadcast %cst_67 : f32 to vector<32x32xf32>
    %170 = arith.mulf %169, %166 : vector<32x32xf32>
    %171 = arith.select %168, %166, %170 : vector<32x32xi1>, vector<32x32xf32>
    %cst_68 = arith.constant -1.000000e+30 : f32
    %172 = vector.broadcast %cst_68 : f32 to vector<32x32xf32>
    %173 = arith.select %3, %171, %172 : vector<32x32xi1>, vector<32x32xf32>
    %cst_69 = arith.constant dense<0xFF800000> : vector<32xf32>
    %174 = vector.multi_reduction <maximumf>, %173, %cst_69 [1] : vector<32x32xf32> to vector<32xf32>
    %175 = vector.shape_cast %174 : vector<32xf32> to vector<32x1xf32>
    %176 = vector.broadcast %175 : vector<32x1xf32> to vector<32x32xf32>
    %177 = arith.subf %173, %176 : vector<32x32xf32>
    %178 = math.exp %177 : vector<32x32xf32>
    %cst_70 = arith.constant 0.000000e+00 : f32
    %179 = vector.broadcast %cst_70 : f32 to vector<32x32xf32>
    %180 = arith.select %3, %178, %179 : vector<32x32xi1>, vector<32x32xf32>
    %cst_71 = arith.constant dense<0.000000e+00> : vector<32xf32>
    %181 = vector.multi_reduction <add>, %180, %cst_71 [1] : vector<32x32xf32> to vector<32xf32>
    %182 = vector.shape_cast %181 : vector<32xf32> to vector<32x1xf32>
    %183 = tpu.reciprocal %182 {approx = true} : vector<32x1xf32> -> vector<32x1xf32>
    %184 = vector.broadcast %183 : vector<32x1xf32> to vector<32x32xf32>
    %185 = arith.mulf %180, %184 : vector<32x32xf32>
    %186 = arith.truncf %185 : vector<32x32xf32> to vector<32x32xbf16>
    %187 = arith.truncf %159 : vector<32x32xf32> to vector<32x32xbf16>
    %cst_72 = arith.constant dense<0.000000e+00> : vector<32x32xf32>
    %188 = tpu.matmul %186, %187, %cst_72 {dimension_numbers = #tpu.dot_dimension_numbers<[1], [0], [0], [1], [0, 0, 1, 1], [], []>} : vector<32x32xbf16>, vector<32x32xbf16>, vector<32x32xf32> -> vector<32x32xf32>
    %189 = vector.extract_strided_slice %155 {offsets = [0, 32], sizes = [32, 32], strides = [1, 1]} : vector<32x128xf32> to vector<32x32xf32>
    %190 = vector.extract_strided_slice %158 {offsets = [0, 32], sizes = [32, 32], strides = [1, 1]} : vector<32x128xf32> to vector<32x32xf32>
    %cst_73 = arith.constant dense<0.000000e+00> : vector<32xf32>
    %191 = vector.multi_reduction <add>, %190, %cst_73 [1] : vector<32x32xf32> to vector<32xf32>
    %192 = vector.shape_cast %191 : vector<32xf32> to vector<32x1xf32>
    %193 = vector.extract_strided_slice %156 {offsets = [1, 0], sizes = [1, 32], strides = [1, 1]} : vector<4x32xf32> to vector<1x32xf32>
    %194 = vector.broadcast %192 : vector<32x1xf32> to vector<32x32xf32>
    %195 = vector.broadcast %193 : vector<1x32xf32> to vector<32x32xf32>
    %196 = arith.addf %194, %195 : vector<32x32xf32>
    %cst_74 = arith.constant 0.000000e+00 : f32
    %197 = vector.broadcast %cst_74 : f32 to vector<32x32xf32>
    %198 = arith.cmpf ogt, %196, %197 : vector<32x32xf32>
    %cst_75 = arith.constant 2.000000e-01 : f32
    %199 = vector.broadcast %cst_75 : f32 to vector<32x32xf32>
    %200 = arith.mulf %199, %196 : vector<32x32xf32>
    %201 = arith.select %198, %196, %200 : vector<32x32xi1>, vector<32x32xf32>
    %cst_76 = arith.constant -1.000000e+30 : f32
    %202 = vector.broadcast %cst_76 : f32 to vector<32x32xf32>
    %203 = arith.select %3, %201, %202 : vector<32x32xi1>, vector<32x32xf32>
    %cst_77 = arith.constant dense<0xFF800000> : vector<32xf32>
    %204 = vector.multi_reduction <maximumf>, %203, %cst_77 [1] : vector<32x32xf32> to vector<32xf32>
    %205 = vector.shape_cast %204 : vector<32xf32> to vector<32x1xf32>
    %206 = vector.broadcast %205 : vector<32x1xf32> to vector<32x32xf32>
    %207 = arith.subf %203, %206 : vector<32x32xf32>
    %208 = math.exp %207 : vector<32x32xf32>
    %cst_78 = arith.constant 0.000000e+00 : f32
    %209 = vector.broadcast %cst_78 : f32 to vector<32x32xf32>
    %210 = arith.select %3, %208, %209 : vector<32x32xi1>, vector<32x32xf32>
    %cst_79 = arith.constant dense<0.000000e+00> : vector<32xf32>
    %211 = vector.multi_reduction <add>, %210, %cst_79 [1] : vector<32x32xf32> to vector<32xf32>
    %212 = vector.shape_cast %211 : vector<32xf32> to vector<32x1xf32>
    %213 = tpu.reciprocal %212 {approx = true} : vector<32x1xf32> -> vector<32x1xf32>
    %214 = vector.broadcast %213 : vector<32x1xf32> to vector<32x32xf32>
    %215 = arith.mulf %210, %214 : vector<32x32xf32>
    %216 = arith.truncf %215 : vector<32x32xf32> to vector<32x32xbf16>
    %217 = arith.truncf %189 : vector<32x32xf32> to vector<32x32xbf16>
    %cst_80 = arith.constant dense<0.000000e+00> : vector<32x32xf32>
    %218 = tpu.matmul %216, %217, %cst_80 {dimension_numbers = #tpu.dot_dimension_numbers<[1], [0], [0], [1], [0, 0, 1, 1], [], []>} : vector<32x32xbf16>, vector<32x32xbf16>, vector<32x32xf32> -> vector<32x32xf32>
    %219 = vector.extract_strided_slice %155 {offsets = [0, 64], sizes = [32, 32], strides = [1, 1]} : vector<32x128xf32> to vector<32x32xf32>
    %220 = vector.extract_strided_slice %158 {offsets = [0, 64], sizes = [32, 32], strides = [1, 1]} : vector<32x128xf32> to vector<32x32xf32>
    %cst_81 = arith.constant dense<0.000000e+00> : vector<32xf32>
    %221 = vector.multi_reduction <add>, %220, %cst_81 [1] : vector<32x32xf32> to vector<32xf32>
    %222 = vector.shape_cast %221 : vector<32xf32> to vector<32x1xf32>
    %223 = vector.extract_strided_slice %156 {offsets = [2, 0], sizes = [1, 32], strides = [1, 1]} : vector<4x32xf32> to vector<1x32xf32>
    %224 = vector.broadcast %222 : vector<32x1xf32> to vector<32x32xf32>
    %225 = vector.broadcast %223 : vector<1x32xf32> to vector<32x32xf32>
    %226 = arith.addf %224, %225 : vector<32x32xf32>
    %cst_82 = arith.constant 0.000000e+00 : f32
    %227 = vector.broadcast %cst_82 : f32 to vector<32x32xf32>
    %228 = arith.cmpf ogt, %226, %227 : vector<32x32xf32>
    %cst_83 = arith.constant 2.000000e-01 : f32
    %229 = vector.broadcast %cst_83 : f32 to vector<32x32xf32>
    %230 = arith.mulf %229, %226 : vector<32x32xf32>
    %231 = arith.select %228, %226, %230 : vector<32x32xi1>, vector<32x32xf32>
    %cst_84 = arith.constant -1.000000e+30 : f32
    %232 = vector.broadcast %cst_84 : f32 to vector<32x32xf32>
    %233 = arith.select %3, %231, %232 : vector<32x32xi1>, vector<32x32xf32>
    %cst_85 = arith.constant dense<0xFF800000> : vector<32xf32>
    %234 = vector.multi_reduction <maximumf>, %233, %cst_85 [1] : vector<32x32xf32> to vector<32xf32>
    %235 = vector.shape_cast %234 : vector<32xf32> to vector<32x1xf32>
    %236 = vector.broadcast %235 : vector<32x1xf32> to vector<32x32xf32>
    %237 = arith.subf %233, %236 : vector<32x32xf32>
    %238 = math.exp %237 : vector<32x32xf32>
    %cst_86 = arith.constant 0.000000e+00 : f32
    %239 = vector.broadcast %cst_86 : f32 to vector<32x32xf32>
    %240 = arith.select %3, %238, %239 : vector<32x32xi1>, vector<32x32xf32>
    %cst_87 = arith.constant dense<0.000000e+00> : vector<32xf32>
    %241 = vector.multi_reduction <add>, %240, %cst_87 [1] : vector<32x32xf32> to vector<32xf32>
    %242 = vector.shape_cast %241 : vector<32xf32> to vector<32x1xf32>
    %243 = tpu.reciprocal %242 {approx = true} : vector<32x1xf32> -> vector<32x1xf32>
    %244 = vector.broadcast %243 : vector<32x1xf32> to vector<32x32xf32>
    %245 = arith.mulf %240, %244 : vector<32x32xf32>
    %246 = arith.truncf %245 : vector<32x32xf32> to vector<32x32xbf16>
    %247 = arith.truncf %219 : vector<32x32xf32> to vector<32x32xbf16>
    %cst_88 = arith.constant dense<0.000000e+00> : vector<32x32xf32>
    %248 = tpu.matmul %246, %247, %cst_88 {dimension_numbers = #tpu.dot_dimension_numbers<[1], [0], [0], [1], [0, 0, 1, 1], [], []>} : vector<32x32xbf16>, vector<32x32xbf16>, vector<32x32xf32> -> vector<32x32xf32>
    %249 = vector.extract_strided_slice %155 {offsets = [0, 96], sizes = [32, 32], strides = [1, 1]} : vector<32x128xf32> to vector<32x32xf32>
    %250 = vector.extract_strided_slice %158 {offsets = [0, 96], sizes = [32, 32], strides = [1, 1]} : vector<32x128xf32> to vector<32x32xf32>
    %cst_89 = arith.constant dense<0.000000e+00> : vector<32xf32>
    %251 = vector.multi_reduction <add>, %250, %cst_89 [1] : vector<32x32xf32> to vector<32xf32>
    %252 = vector.shape_cast %251 : vector<32xf32> to vector<32x1xf32>
    %253 = vector.extract_strided_slice %156 {offsets = [3, 0], sizes = [1, 32], strides = [1, 1]} : vector<4x32xf32> to vector<1x32xf32>
    %254 = vector.broadcast %252 : vector<32x1xf32> to vector<32x32xf32>
    %255 = vector.broadcast %253 : vector<1x32xf32> to vector<32x32xf32>
    %256 = arith.addf %254, %255 : vector<32x32xf32>
    %cst_90 = arith.constant 0.000000e+00 : f32
    %257 = vector.broadcast %cst_90 : f32 to vector<32x32xf32>
    %258 = arith.cmpf ogt, %256, %257 : vector<32x32xf32>
    %cst_91 = arith.constant 2.000000e-01 : f32
    %259 = vector.broadcast %cst_91 : f32 to vector<32x32xf32>
    %260 = arith.mulf %259, %256 : vector<32x32xf32>
    %261 = arith.select %258, %256, %260 : vector<32x32xi1>, vector<32x32xf32>
    %cst_92 = arith.constant -1.000000e+30 : f32
    %262 = vector.broadcast %cst_92 : f32 to vector<32x32xf32>
    %263 = arith.select %3, %261, %262 : vector<32x32xi1>, vector<32x32xf32>
    %cst_93 = arith.constant dense<0xFF800000> : vector<32xf32>
    %264 = vector.multi_reduction <maximumf>, %263, %cst_93 [1] : vector<32x32xf32> to vector<32xf32>
    %265 = vector.shape_cast %264 : vector<32xf32> to vector<32x1xf32>
    %266 = vector.broadcast %265 : vector<32x1xf32> to vector<32x32xf32>
    %267 = arith.subf %263, %266 : vector<32x32xf32>
    %268 = math.exp %267 : vector<32x32xf32>
    %cst_94 = arith.constant 0.000000e+00 : f32
    %269 = vector.broadcast %cst_94 : f32 to vector<32x32xf32>
    %270 = arith.select %3, %268, %269 : vector<32x32xi1>, vector<32x32xf32>
    %cst_95 = arith.constant dense<0.000000e+00> : vector<32xf32>
    %271 = vector.multi_reduction <add>, %270, %cst_95 [1] : vector<32x32xf32> to vector<32xf32>
    %272 = vector.shape_cast %271 : vector<32xf32> to vector<32x1xf32>
    %273 = tpu.reciprocal %272 {approx = true} : vector<32x1xf32> -> vector<32x1xf32>
    %274 = vector.broadcast %273 : vector<32x1xf32> to vector<32x32xf32>
    %275 = arith.mulf %270, %274 : vector<32x32xf32>
    %276 = arith.truncf %275 : vector<32x32xf32> to vector<32x32xbf16>
    %277 = arith.truncf %249 : vector<32x32xf32> to vector<32x32xbf16>
    %cst_96 = arith.constant dense<0.000000e+00> : vector<32x32xf32>
    %278 = tpu.matmul %276, %277, %cst_96 {dimension_numbers = #tpu.dot_dimension_numbers<[1], [0], [0], [1], [0, 0, 1, 1], [], []>} : vector<32x32xbf16>, vector<32x32xbf16>, vector<32x32xf32> -> vector<32x32xf32>
    %279 = tpu.concatenate %188, %218, %248, %278 in 1 : vector<32x32xf32>, vector<32x32xf32>, vector<32x32xf32>, vector<32x32xf32> -> vector<32x128xf32>
    %280 = vector.broadcast %152 : vector<1x128xf32> to vector<32x128xf32>
    %281 = arith.addf %279, %280 : vector<32x128xf32>
    %282 = vector.broadcast %153 : vector<1x128xf32> to vector<32x128xf32>
    %283 = arith.mulf %281, %282 : vector<32x128xf32>
    %284 = vector.broadcast %154 : vector<1x128xf32> to vector<32x128xf32>
    %285 = arith.addf %283, %284 : vector<32x128xf32>
    %cst_97 = arith.constant 0.000000e+00 : f32
    %286 = vector.broadcast %cst_97 : f32 to vector<32x128xf32>
    %287 = arith.cmpf ogt, %285, %286 : vector<32x128xf32>
    %cst_98 = arith.constant 0.000000e+00 : f32
    %288 = vector.broadcast %cst_98 : f32 to vector<32x128xf32>
    %289 = arith.minimumf %285, %288 : vector<32x128xf32>
    %290 = math.exp %289 : vector<32x128xf32>
    %cst_99 = arith.constant 1.000000e+00 : f32
    %291 = vector.broadcast %cst_99 : f32 to vector<32x128xf32>
    %292 = arith.subf %290, %291 : vector<32x128xf32>
    %293 = arith.select %287, %285, %292 : vector<32x128xi1>, vector<32x128xf32>
    %c0_100 = arith.constant 0 : index
    %c0_101 = arith.constant 0 : index
    %294 = vector.load %arg14[%c0_100, %c0_101] : memref<128x28xf32, #tpu.memory_space<vmem>>, vector<128x28xf32>
    %c0_102 = arith.constant 0 : index
    %c0_103 = arith.constant 0 : index
    %295 = vector.load %arg15[%c0_102, %c0_103] : memref<4x28xf32, #tpu.memory_space<vmem>>, vector<4x28xf32>
    %c0_104 = arith.constant 0 : index
    %c0_105 = arith.constant 0 : index
    %296 = vector.load %arg16[%c0_104, %c0_105] : memref<1x28xf32, #tpu.memory_space<vmem>>, vector<1x28xf32>
    %c0_106 = arith.constant 0 : index
    %c0_107 = arith.constant 0 : index
    %297 = vector.load %arg17[%c0_106, %c0_107] : memref<1x7xf32, #tpu.memory_space<vmem>>, vector<1x7xf32>
    %cst_108 = arith.constant dense<0.000000e+00> : vector<32x28xf32>
    %298 = tpu.matmul %293, %294, %cst_108 {dimension_numbers = #tpu.dot_dimension_numbers<[1], [0], [0], [1], [0, 0, 1, 1], [], []>} : vector<32x128xf32>, vector<128x28xf32>, vector<32x28xf32> -> vector<32x28xf32>
    %cst_109 = arith.constant dense<0.000000e+00> : vector<4x32xf32>
    %299 = tpu.matmul %295, %298, %cst_109 {dimension_numbers = #tpu.dot_dimension_numbers<[1], [1], [0], [0], [0, 0, 1, 0], [], []>} : vector<4x28xf32>, vector<32x28xf32>, vector<4x32xf32> -> vector<4x32xf32>
    %300 = vector.broadcast %296 : vector<1x28xf32> to vector<32x28xf32>
    %301 = arith.mulf %298, %300 : vector<32x28xf32>
    %302 = vector.extract_strided_slice %298 {offsets = [0, 0], sizes = [32, 7], strides = [1, 1]} : vector<32x28xf32> to vector<32x7xf32>
    %303 = vector.extract_strided_slice %301 {offsets = [0, 0], sizes = [32, 7], strides = [1, 1]} : vector<32x28xf32> to vector<32x7xf32>
    %cst_110 = arith.constant dense<0.000000e+00> : vector<32xf32>
    %304 = vector.multi_reduction <add>, %303, %cst_110 [1] : vector<32x7xf32> to vector<32xf32>
    %305 = vector.shape_cast %304 : vector<32xf32> to vector<32x1xf32>
    %306 = vector.extract_strided_slice %299 {offsets = [0, 0], sizes = [1, 32], strides = [1, 1]} : vector<4x32xf32> to vector<1x32xf32>
    %307 = vector.broadcast %305 : vector<32x1xf32> to vector<32x32xf32>
    %308 = vector.broadcast %306 : vector<1x32xf32> to vector<32x32xf32>
    %309 = arith.addf %307, %308 : vector<32x32xf32>
    %cst_111 = arith.constant 0.000000e+00 : f32
    %310 = vector.broadcast %cst_111 : f32 to vector<32x32xf32>
    %311 = arith.cmpf ogt, %309, %310 : vector<32x32xf32>
    %cst_112 = arith.constant 2.000000e-01 : f32
    %312 = vector.broadcast %cst_112 : f32 to vector<32x32xf32>
    %313 = arith.mulf %312, %309 : vector<32x32xf32>
    %314 = arith.select %311, %309, %313 : vector<32x32xi1>, vector<32x32xf32>
    %cst_113 = arith.constant -1.000000e+30 : f32
    %315 = vector.broadcast %cst_113 : f32 to vector<32x32xf32>
    %316 = arith.select %3, %314, %315 : vector<32x32xi1>, vector<32x32xf32>
    %cst_114 = arith.constant dense<0xFF800000> : vector<32xf32>
    %317 = vector.multi_reduction <maximumf>, %316, %cst_114 [1] : vector<32x32xf32> to vector<32xf32>
    %318 = vector.shape_cast %317 : vector<32xf32> to vector<32x1xf32>
    %319 = vector.broadcast %318 : vector<32x1xf32> to vector<32x32xf32>
    %320 = arith.subf %316, %319 : vector<32x32xf32>
    %321 = math.exp %320 : vector<32x32xf32>
    %cst_115 = arith.constant 0.000000e+00 : f32
    %322 = vector.broadcast %cst_115 : f32 to vector<32x32xf32>
    %323 = arith.select %3, %321, %322 : vector<32x32xi1>, vector<32x32xf32>
    %cst_116 = arith.constant dense<0.000000e+00> : vector<32xf32>
    %324 = vector.multi_reduction <add>, %323, %cst_116 [1] : vector<32x32xf32> to vector<32xf32>
    %325 = vector.shape_cast %324 : vector<32xf32> to vector<32x1xf32>
    %326 = tpu.reciprocal %325 {approx = true} : vector<32x1xf32> -> vector<32x1xf32>
    %327 = vector.broadcast %326 : vector<32x1xf32> to vector<32x32xf32>
    %328 = arith.mulf %323, %327 : vector<32x32xf32>
    %329 = arith.truncf %328 : vector<32x32xf32> to vector<32x32xbf16>
    %330 = arith.truncf %302 : vector<32x7xf32> to vector<32x7xbf16>
    %cst_117 = arith.constant dense<0.000000e+00> : vector<32x7xf32>
    %331 = tpu.matmul %329, %330, %cst_117 {dimension_numbers = #tpu.dot_dimension_numbers<[1], [0], [0], [1], [0, 0, 1, 1], [], []>} : vector<32x32xbf16>, vector<32x7xbf16>, vector<32x7xf32> -> vector<32x7xf32>
    %332 = vector.extract_strided_slice %298 {offsets = [0, 7], sizes = [32, 7], strides = [1, 1]} : vector<32x28xf32> to vector<32x7xf32>
    %333 = vector.extract_strided_slice %301 {offsets = [0, 7], sizes = [32, 7], strides = [1, 1]} : vector<32x28xf32> to vector<32x7xf32>
    %cst_118 = arith.constant dense<0.000000e+00> : vector<32xf32>
    %334 = vector.multi_reduction <add>, %333, %cst_118 [1] : vector<32x7xf32> to vector<32xf32>
    %335 = vector.shape_cast %334 : vector<32xf32> to vector<32x1xf32>
    %336 = vector.extract_strided_slice %299 {offsets = [1, 0], sizes = [1, 32], strides = [1, 1]} : vector<4x32xf32> to vector<1x32xf32>
    %337 = vector.broadcast %335 : vector<32x1xf32> to vector<32x32xf32>
    %338 = vector.broadcast %336 : vector<1x32xf32> to vector<32x32xf32>
    %339 = arith.addf %337, %338 : vector<32x32xf32>
    %cst_119 = arith.constant 0.000000e+00 : f32
    %340 = vector.broadcast %cst_119 : f32 to vector<32x32xf32>
    %341 = arith.cmpf ogt, %339, %340 : vector<32x32xf32>
    %cst_120 = arith.constant 2.000000e-01 : f32
    %342 = vector.broadcast %cst_120 : f32 to vector<32x32xf32>
    %343 = arith.mulf %342, %339 : vector<32x32xf32>
    %344 = arith.select %341, %339, %343 : vector<32x32xi1>, vector<32x32xf32>
    %cst_121 = arith.constant -1.000000e+30 : f32
    %345 = vector.broadcast %cst_121 : f32 to vector<32x32xf32>
    %346 = arith.select %3, %344, %345 : vector<32x32xi1>, vector<32x32xf32>
    %cst_122 = arith.constant dense<0xFF800000> : vector<32xf32>
    %347 = vector.multi_reduction <maximumf>, %346, %cst_122 [1] : vector<32x32xf32> to vector<32xf32>
    %348 = vector.shape_cast %347 : vector<32xf32> to vector<32x1xf32>
    %349 = vector.broadcast %348 : vector<32x1xf32> to vector<32x32xf32>
    %350 = arith.subf %346, %349 : vector<32x32xf32>
    %351 = math.exp %350 : vector<32x32xf32>
    %cst_123 = arith.constant 0.000000e+00 : f32
    %352 = vector.broadcast %cst_123 : f32 to vector<32x32xf32>
    %353 = arith.select %3, %351, %352 : vector<32x32xi1>, vector<32x32xf32>
    %cst_124 = arith.constant dense<0.000000e+00> : vector<32xf32>
    %354 = vector.multi_reduction <add>, %353, %cst_124 [1] : vector<32x32xf32> to vector<32xf32>
    %355 = vector.shape_cast %354 : vector<32xf32> to vector<32x1xf32>
    %356 = tpu.reciprocal %355 {approx = true} : vector<32x1xf32> -> vector<32x1xf32>
    %357 = vector.broadcast %356 : vector<32x1xf32> to vector<32x32xf32>
    %358 = arith.mulf %353, %357 : vector<32x32xf32>
    %359 = arith.truncf %358 : vector<32x32xf32> to vector<32x32xbf16>
    %360 = arith.truncf %332 : vector<32x7xf32> to vector<32x7xbf16>
    %cst_125 = arith.constant dense<0.000000e+00> : vector<32x7xf32>
    %361 = tpu.matmul %359, %360, %cst_125 {dimension_numbers = #tpu.dot_dimension_numbers<[1], [0], [0], [1], [0, 0, 1, 1], [], []>} : vector<32x32xbf16>, vector<32x7xbf16>, vector<32x7xf32> -> vector<32x7xf32>
    %362 = vector.extract_strided_slice %298 {offsets = [0, 14], sizes = [32, 7], strides = [1, 1]} : vector<32x28xf32> to vector<32x7xf32>
    %363 = vector.extract_strided_slice %301 {offsets = [0, 14], sizes = [32, 7], strides = [1, 1]} : vector<32x28xf32> to vector<32x7xf32>
    %cst_126 = arith.constant dense<0.000000e+00> : vector<32xf32>
    %364 = vector.multi_reduction <add>, %363, %cst_126 [1] : vector<32x7xf32> to vector<32xf32>
    %365 = vector.shape_cast %364 : vector<32xf32> to vector<32x1xf32>
    %366 = vector.extract_strided_slice %299 {offsets = [2, 0], sizes = [1, 32], strides = [1, 1]} : vector<4x32xf32> to vector<1x32xf32>
    %367 = vector.broadcast %365 : vector<32x1xf32> to vector<32x32xf32>
    %368 = vector.broadcast %366 : vector<1x32xf32> to vector<32x32xf32>
    %369 = arith.addf %367, %368 : vector<32x32xf32>
    %cst_127 = arith.constant 0.000000e+00 : f32
    %370 = vector.broadcast %cst_127 : f32 to vector<32x32xf32>
    %371 = arith.cmpf ogt, %369, %370 : vector<32x32xf32>
    %cst_128 = arith.constant 2.000000e-01 : f32
    %372 = vector.broadcast %cst_128 : f32 to vector<32x32xf32>
    %373 = arith.mulf %372, %369 : vector<32x32xf32>
    %374 = arith.select %371, %369, %373 : vector<32x32xi1>, vector<32x32xf32>
    %cst_129 = arith.constant -1.000000e+30 : f32
    %375 = vector.broadcast %cst_129 : f32 to vector<32x32xf32>
    %376 = arith.select %3, %374, %375 : vector<32x32xi1>, vector<32x32xf32>
    %cst_130 = arith.constant dense<0xFF800000> : vector<32xf32>
    %377 = vector.multi_reduction <maximumf>, %376, %cst_130 [1] : vector<32x32xf32> to vector<32xf32>
    %378 = vector.shape_cast %377 : vector<32xf32> to vector<32x1xf32>
    %379 = vector.broadcast %378 : vector<32x1xf32> to vector<32x32xf32>
    %380 = arith.subf %376, %379 : vector<32x32xf32>
    %381 = math.exp %380 : vector<32x32xf32>
    %cst_131 = arith.constant 0.000000e+00 : f32
    %382 = vector.broadcast %cst_131 : f32 to vector<32x32xf32>
    %383 = arith.select %3, %381, %382 : vector<32x32xi1>, vector<32x32xf32>
    %cst_132 = arith.constant dense<0.000000e+00> : vector<32xf32>
    %384 = vector.multi_reduction <add>, %383, %cst_132 [1] : vector<32x32xf32> to vector<32xf32>
    %385 = vector.shape_cast %384 : vector<32xf32> to vector<32x1xf32>
    %386 = tpu.reciprocal %385 {approx = true} : vector<32x1xf32> -> vector<32x1xf32>
    %387 = vector.broadcast %386 : vector<32x1xf32> to vector<32x32xf32>
    %388 = arith.mulf %383, %387 : vector<32x32xf32>
    %389 = arith.truncf %388 : vector<32x32xf32> to vector<32x32xbf16>
    %390 = arith.truncf %362 : vector<32x7xf32> to vector<32x7xbf16>
    %cst_133 = arith.constant dense<0.000000e+00> : vector<32x7xf32>
    %391 = tpu.matmul %389, %390, %cst_133 {dimension_numbers = #tpu.dot_dimension_numbers<[1], [0], [0], [1], [0, 0, 1, 1], [], []>} : vector<32x32xbf16>, vector<32x7xbf16>, vector<32x7xf32> -> vector<32x7xf32>
    %392 = vector.extract_strided_slice %298 {offsets = [0, 21], sizes = [32, 7], strides = [1, 1]} : vector<32x28xf32> to vector<32x7xf32>
    %393 = vector.extract_strided_slice %301 {offsets = [0, 21], sizes = [32, 7], strides = [1, 1]} : vector<32x28xf32> to vector<32x7xf32>
    %cst_134 = arith.constant dense<0.000000e+00> : vector<32xf32>
    %394 = vector.multi_reduction <add>, %393, %cst_134 [1] : vector<32x7xf32> to vector<32xf32>
    %395 = vector.shape_cast %394 : vector<32xf32> to vector<32x1xf32>
    %396 = vector.extract_strided_slice %299 {offsets = [3, 0], sizes = [1, 32], strides = [1, 1]} : vector<4x32xf32> to vector<1x32xf32>
    %397 = vector.broadcast %395 : vector<32x1xf32> to vector<32x32xf32>
    %398 = vector.broadcast %396 : vector<1x32xf32> to vector<32x32xf32>
    %399 = arith.addf %397, %398 : vector<32x32xf32>
    %cst_135 = arith.constant 0.000000e+00 : f32
    %400 = vector.broadcast %cst_135 : f32 to vector<32x32xf32>
    %401 = arith.cmpf ogt, %399, %400 : vector<32x32xf32>
    %cst_136 = arith.constant 2.000000e-01 : f32
    %402 = vector.broadcast %cst_136 : f32 to vector<32x32xf32>
    %403 = arith.mulf %402, %399 : vector<32x32xf32>
    %404 = arith.select %401, %399, %403 : vector<32x32xi1>, vector<32x32xf32>
    %cst_137 = arith.constant -1.000000e+30 : f32
    %405 = vector.broadcast %cst_137 : f32 to vector<32x32xf32>
    %406 = arith.select %3, %404, %405 : vector<32x32xi1>, vector<32x32xf32>
    %cst_138 = arith.constant dense<0xFF800000> : vector<32xf32>
    %407 = vector.multi_reduction <maximumf>, %406, %cst_138 [1] : vector<32x32xf32> to vector<32xf32>
    %408 = vector.shape_cast %407 : vector<32xf32> to vector<32x1xf32>
    %409 = vector.broadcast %408 : vector<32x1xf32> to vector<32x32xf32>
    %410 = arith.subf %406, %409 : vector<32x32xf32>
    %411 = math.exp %410 : vector<32x32xf32>
    %cst_139 = arith.constant 0.000000e+00 : f32
    %412 = vector.broadcast %cst_139 : f32 to vector<32x32xf32>
    %413 = arith.select %3, %411, %412 : vector<32x32xi1>, vector<32x32xf32>
    %cst_140 = arith.constant dense<0.000000e+00> : vector<32xf32>
    %414 = vector.multi_reduction <add>, %413, %cst_140 [1] : vector<32x32xf32> to vector<32xf32>
    %415 = vector.shape_cast %414 : vector<32xf32> to vector<32x1xf32>
    %416 = tpu.reciprocal %415 {approx = true} : vector<32x1xf32> -> vector<32x1xf32>
    %417 = vector.broadcast %416 : vector<32x1xf32> to vector<32x32xf32>
    %418 = arith.mulf %413, %417 : vector<32x32xf32>
    %419 = arith.truncf %418 : vector<32x32xf32> to vector<32x32xbf16>
    %420 = arith.truncf %392 : vector<32x7xf32> to vector<32x7xbf16>
    %cst_141 = arith.constant dense<0.000000e+00> : vector<32x7xf32>
    %421 = tpu.matmul %419, %420, %cst_141 {dimension_numbers = #tpu.dot_dimension_numbers<[1], [0], [0], [1], [0, 0, 1, 1], [], []>} : vector<32x32xbf16>, vector<32x7xbf16>, vector<32x7xf32> -> vector<32x7xf32>
    %422 = arith.addf %331, %361 : vector<32x7xf32>
    %423 = arith.addf %422, %391 : vector<32x7xf32>
    %424 = arith.addf %423, %421 : vector<32x7xf32>
    %cst_142 = arith.constant 2.500000e-01 : f32
    %425 = vector.broadcast %cst_142 : f32 to vector<32x7xf32>
    %426 = arith.mulf %424, %425 : vector<32x7xf32>
    %427 = vector.broadcast %297 : vector<1x7xf32> to vector<32x7xf32>
    %428 = arith.addf %426, %427 : vector<32x7xf32>
    %c0_143 = arith.constant 0 : index
    %c0_144 = arith.constant 0 : index
    %429 = vector.load %arg18[%c0_143, %c0_144] : memref<32x7xf32, #tpu.memory_space<vmem>>, vector<32x7xf32>
    tpu.vector_store %arg18[%c0_143, %c0_144], %428 {strides = array<i32>} : memref<32x7xf32, #tpu.memory_space<vmem>>, vector<32x7xf32>,
    return
  }
}

</mosaic_0001>

<llo_original>
// kernel: _lambda_.1
$region0: #{_lambda_.1}
  #allocation0 [shape = 'u32[]', space=smem, size = 0x4, offset = 0x4, fixed_abs, tag = 'smem constant byte address 0x4 - core index']
  #allocation1 [shape = 'u32[144,128]{1,0:T(1,128)}', space=vmem, size = 0x12000, scoped, tag = 'internal scratch']
  %s0 = inlined_call_operand.hbm [shape: f32[32,16], index: 0, kind: input, shape index: {}]
  %s1 = inlined_call_operand.hbm [shape: s32[32,32], index: 1, kind: input, shape index: {}]
  %s2 = inlined_call_operand.hbm [shape: f32[16,128], index: 2, kind: input, shape index: {}]
  %s3 = inlined_call_operand.hbm [shape: f32[4,128], index: 3, kind: input, shape index: {}]
  %s4 = inlined_call_operand.hbm [shape: f32[1,128], index: 4, kind: input, shape index: {}]
  %s5 = inlined_call_operand.hbm [shape: f32[1,128], index: 5, kind: input, shape index: {}, may-alias: {5,7,11,13}]
  %s6 = inlined_call_operand.hbm [shape: f32[1,128], index: 6, kind: input, shape index: {}, may-alias: {6,12}]
  %s7 = inlined_call_operand.hbm [shape: f32[1,128], index: 7, kind: input, shape index: {}, may-alias: {5,7,11,13}]
  %s8 = inlined_call_operand.hbm [shape: f32[128,128], index: 8, kind: input, shape index: {}]
  %s9 = inlined_call_operand.hbm [shape: f32[4,128], index: 9, kind: input, shape index: {}]
  %s10 = inlined_call_operand.hbm [shape: f32[1,128], index: 10, kind: input, shape index: {}]
  %s11 = inlined_call_operand.hbm [shape: f32[1,128], index: 11, kind: input, shape index: {}, may-alias: {5,7,11,13}]
  %s12 = inlined_call_operand.hbm [shape: f32[1,128], index: 12, kind: input, shape index: {}, may-alias: {6,12}]
  %s13 = inlined_call_operand.hbm [shape: f32[1,128], index: 13, kind: input, shape index: {}, may-alias: {5,7,11,13}]
  %s14 = inlined_call_operand.hbm [shape: f32[128,28], index: 14, kind: input, shape index: {}]
  %s15 = inlined_call_operand.hbm [shape: f32[4,28], index: 15, kind: input, shape index: {}]
  %s16 = inlined_call_operand.hbm [shape: f32[1,28], index: 16, kind: input, shape index: {}]
  %s17 = inlined_call_operand.hbm [shape: f32[1,7], index: 17, kind: input, shape index: {}]
  %s18 = inlined_call_operand.hbm [shape: f32[32,7], index: 18, kind: output, shape index: {}]
  %s19 = sld [smem:[#allocation0]]
  $region154: #{_lambda_.1} parent=0
    _
  %s21 = ssub.s32 1, %s19
  %s22 = scalar_select 0, %s21, %s19
  $region1: #{_lambda_.1} parent=0
    #allocation2 [shape = 'u8[16384]{0}', space=vmem, size = 0x4000, scoped, tag = 'input window, operand 0, single buffered']
    #allocation3 [shape = 's32[1]{0}', space=sflag, size = 0x4, scoped, tag = 'scoped memory for _lambda_.1']
    #allocation4 [shape = 's32[1]{0}', space=sflag, size = 0x4, scoped, tag = 'scoped memory for _lambda_.1']
    #allocation5 [shape = 'u8[16384]{0}', space=vmem, size = 0x4000, scoped, tag = 'input window, operand 1, single buffered']
    #allocation6 [shape = 's32[1]{0}', space=sflag, size = 0x4, scoped, tag = 'scoped memory for _lambda_.1']
    #allocation7 [shape = 'u8[8192]{0}', space=vmem, size = 0x2000, scoped, tag = 'input window, operand 2, single buffered']
    #allocation8 [shape = 'u8[2048]{0}', space=vmem, size = 0x800, scoped, tag = 'input window, operand 3, single buffered']
    #allocation9 [shape = 's32[1]{0}', space=sflag, size = 0x4, scoped, tag = 'scoped memory for _lambda_.1']
    #allocation10 [shape = 'u8[512]{0}', space=vmem, size = 0x400, scoped, tag = 'input window, operand 4, single buffered']
    #allocation11 [shape = 'u8[512]{0}', space=vmem, size = 0x400, scoped, tag = 'input window, operand 5, single buffered']
    #allocation12 [shape = 's32[1]{0}', space=sflag, size = 0x4, scoped, tag = 'scoped memory for _lambda_.1']
    #allocation13 [shape = 'u8[512]{0}', space=vmem, size = 0x400, scoped, tag = 'input window, operand 6, single buffered']
    #allocation14 [shape = 'u8[512]{0}', space=vmem, size = 0x400, scoped, tag = 'input window, operand 7, single buffered']
    #allocation15 [shape = 's32[1]{0}', space=sflag, size = 0x4, scoped, tag = 'scoped memory for _lambda_.1']
    #allocation16 [shape = 'u8[65536]{0}', space=vmem, size = 0x10000, scoped, tag = 'input window, operand 8, single buffered']
    #allocation17 [shape = 'u8[2048]{0}', space=vmem, size = 0x800, scoped, tag = 'input window, operand 9, single buffered']
    #allocation18 [shape = 's32[1]{0}', space=sflag, size = 0x4, scoped, tag = 'scoped memory for _lambda_.1']
    #allocation19 [shape = 'u8[512]{0}', space=vmem, size = 0x400, scoped, tag = 'input window, operand 10, single buffered']
    #allocation20 [shape = 'u8[512]{0}', space=vmem, size = 0x400, scoped, tag = 'input window, operand 11, single buffered']
    #allocation21 [shape = 's32[1]{0}', space=sflag, size = 0x4, scoped, tag = 'scoped memory for _lambda_.1']
    #allocation22 [shape = 'u8[512]{0}', space=vmem, size = 0x400, scoped, tag = 'input window, operand 12, single buffered']
    #allocation23 [shape = 'u8[512]{0}', space=vmem, size = 0x400, scoped, tag = 'input window, operand 13, single buffered']
    #allocation24 [shape = 's32[1]{0}', space=sflag, size = 0x4, scoped, tag = 'scoped memory for _lambda_.1']
    #allocation25 [shape = 'u8[65536]{0}', space=vmem, size = 0x10000, scoped, tag = 'input window, operand 14, single buffered']
    #allocation26 [shape = 'u8[2048]{0}', space=vmem, size = 0x800, scoped, tag = 'input window, operand 15, single buffered']
    #allocation27 [shape = 's32[1]{0}', space=sflag, size = 0x4, scoped, tag = 'scoped memory for _lambda_.1']
    #allocation28 [shape = 'u8[512]{0}', space=vmem, size = 0x400, scoped, tag = 'input window, operand 16, single buffered']
    #allocation29 [shape = 'u8[512]{0}', space=vmem, size = 0x400, scoped, tag = 'input window, operand 17, single buffered']
    #allocation30 [shape = 's32[1]{0}', space=sflag, size = 0x4, scoped, tag = 'scoped memory for _lambda_.1']
    #allocation31 [shape = 'u8[16384]{0}', space=vmem, size = 0x4000, scoped, tag = 'output window, operand 0, single buffered']
    %23 = vsyncpa [#allocation3], 0
    %24 = vsyncpa [#allocation6], 0
    %25 = vsyncpa [#allocation9], 0
    %26 = vsyncpa [#allocation12], 0
    %27 = vsyncpa [#allocation15], 0
    %28 = vsyncpa [#allocation18], 0
    %29 = vsyncpa [#allocation21], 0
    %30 = vsyncpa [#allocation24], 0
    %31 = vsyncpa [#allocation27], 0
    %32 = vsyncpa [#allocation30], 0
    %33 = vsyncpa [#allocation4], 0
    // Predicated region
    $region2: #{_lambda_.1} parent=1 // pred_check
      _
    $region3: #{_lambda_.1} parent=1 // pred_check_branch
      %35 = sbr.rel (0) target = $region5
    $region4: #{_lambda_.1} parent=1 // pred_region
      %s37 = ssub.s32 512, 512
      %38 = vsyncadd [#allocation3], %s37
      %s39 = sshll.u32 [#allocation2], 4
      %s40 = int_to_ptr.vmem [resolvable:$true] %s39
      %45 = dma.hbm_to_vmem [thread:$0]  %s0, 512, %s40, [#allocation3], 128, 128, 8
    $region5: #{_lambda_.1} parent=1 // pred_fallthru
      _
    // Predicated region
    $region6: #{_lambda_.1} parent=1 // pred_check
      _
    $region7: #{_lambda_.1} parent=1 // pred_check_branch
      %47 = sbr.rel (0) target = $region9
    $region8: #{_lambda_.1} parent=1 // pred_region
      %s49 = ssub.s32 512, 512
      %50 = vsyncadd [#allocation6], %s49
      %s51 = sshll.u32 [#allocation5], 4
      %s52 = int_to_ptr.vmem [resolvable:$true] %s51
      %57 = dma.hbm_to_vmem [thread:$0]  %s1, 512, %s52, [#allocation6], 128, 128, 8
    $region9: #{_lambda_.1} parent=1 // pred_fallthru
      _
    // Predicated region
    $region10: #{_lambda_.1} parent=1 // pred_check
      _
    $region11: #{_lambda_.1} parent=1 // pred_check_branch
      %59 = sbr.rel (0) target = $region13
    $region12: #{_lambda_.1} parent=1 // pred_region
      %s61 = ssub.s32 256, 256
      %62 = vsyncadd [#allocation6], %s61
      %s63 = sshll.u32 [#allocation7], 4
      %s64 = int_to_ptr.vmem [resolvable:$true] %s63
      %69 = dma.hbm_to_vmem [thread:$0]  %s2, 256, %s64, [#allocation6], 128, 128, 8
    $region13: #{_lambda_.1} parent=1 // pred_fallthru
      _
    // Predicated region
    $region14: #{_lambda_.1} parent=1 // pred_check
      _
    $region15: #{_lambda_.1} parent=1 // pred_check_branch
      %71 = sbr.rel (0) target = $region17
    $region16: #{_lambda_.1} parent=1 // pred_region
      %s73 = ssub.s32 64, 64
      %74 = vsyncadd [#allocation9], %s73
      %s76 = sshll.u32 [#allocation8], 4
      %s77 = int_to_ptr.vmem [resolvable:$true] %s76
      %79 = dma.hbm_to_vmem [thread:$0]  %s3, 64, %s77, [#allocation9]
    $region17: #{_lambda_.1} parent=1 // pred_fallthru
      _
    // Predicated region
    $region18: #{_lambda_.1} parent=1 // pred_check
      _
    $region19: #{_lambda_.1} parent=1 // pred_check_branch
      %81 = sbr.rel (0) target = $region21
    $region20: #{_lambda_.1} parent=1 // pred_region
      %s83 = ssub.s32 16, 16
      %84 = vsyncadd [#allocation9], %s83
      %s86 = sshll.u32 [#allocation10], 4
      %s87 = int_to_ptr.vmem [resolvable:$true] %s86
      %89 = dma.hbm_to_vmem [thread:$0]  %s4, 16, %s87, [#allocation9]
    $region21: #{_lambda_.1} parent=1 // pred_fallthru
      _
    // Predicated region
    $region22: #{_lambda_.1} parent=1 // pred_check
      _
    $region23: #{_lambda_.1} parent=1 // pred_check_branch
      %91 = sbr.rel (0) target = $region25
    $region24: #{_lambda_.1} parent=1 // pred_region
      %s93 = ssub.s32 16, 16
      %94 = vsyncadd [#allocation12], %s93
      %s96 = sshll.u32 [#allocation11], 4
      %s97 = int_to_ptr.vmem [resolvable:$true] %s96
      %99 = dma.hbm_to_vmem [thread:$0]  %s5, 16, %s97, [#allocation12]
    $region25: #{_lambda_.1} parent=1 // pred_fallthru
      _
    // Predicated region
    $region26: #{_lambda_.1} parent=1 // pred_check
      _
    $region27: #{_lambda_.1} parent=1 // pred_check_branch
      %101 = sbr.rel (0) target = $region29
    $region28: #{_lambda_.1} parent=1 // pred_region
      %s103 = ssub.s32 16, 16
      %104 = vsyncadd [#allocation12], %s103
      %s106 = sshll.u32 [#allocation13], 4
      %s107 = int_to_ptr.vmem [resolvable:$true] %s106
      %109 = dma.hbm_to_vmem [thread:$0]  %s6, 16, %s107, [#allocation12]
    $region29: #{_lambda_.1} parent=1 // pred_fallthru
      _
    // Predicated region
    $region30: #{_lambda_.1} parent=1 // pred_check
      _
    $region31: #{_lambda_.1} parent=1 // pred_check_branch
      %111 = sbr.rel (0) target = $region33
    $region32: #{_lambda_.1} parent=1 // pred_region
      %s113 = ssub.s32 16, 16
      %114 = vsyncadd [#allocation15], %s113
      %s116 = sshll.u32 [#allocation14], 4
      %s117 = int_to_ptr.vmem [resolvable:$true] %s116
      %119 = dma.hbm_to_vmem [thread:$0]  %s7, 16, %s117, [#allocation15]
    $region33: #{_lambda_.1} parent=1 // pred_fallthru
      _
    // Predicated region
    $region34: #{_lambda_.1} parent=1 // pred_check
      _
    $region35: #{_lambda_.1} parent=1 // pred_check_branch
      %121 = sbr.rel (0) target = $region37
    $region36: #{_lambda_.1} parent=1 // pred_region
      %s123 = ssub.s32 2048, 2048
      %124 = vsyncadd [#allocation15], %s123
      %s125 = sshll.u32 [#allocation16], 4
      %s126 = int_to_ptr.vmem [resolvable:$true] %s125
      %131 = dma.hbm_to_vmem [thread:$0]  %s8, 2048, %s126, [#allocation15], 128, 128, 8
    $region37: #{_lambda_.1} parent=1 // pred_fallthru
      _
    // Predicated region
    $region38: #{_lambda_.1} parent=1 // pred_check
      _
    $region39: #{_lambda_.1} parent=1 // pred_check_branch
      %133 = sbr.rel (0) target = $region41
    $region40: #{_lambda_.1} parent=1 // pred_region
      %s135 = ssub.s32 64, 64
      %136 = vsyncadd [#allocation18], %s135
      %s138 = sshll.u32 [#allocation17], 4
      %s139 = int_to_ptr.vmem [resolvable:$true] %s138
      %141 = dma.hbm_to_vmem [thread:$0]  %s9, 64, %s139, [#allocation18]
    $region41: #{_lambda_.1} parent=1 // pred_fallthru
      _
    // Predicated region
    $region42: #{_lambda_.1} parent=1 // pred_check
      _
    $region43: #{_lambda_.1} parent=1 // pred_check_branch
      %143 = sbr.rel (0) target = $region45
    $region44: #{_lambda_.1} parent=1 // pred_region
      %s145 = ssub.s32 16, 16
      %146 = vsyncadd [#allocation18], %s145
      %s148 = sshll.u32 [#allocation19], 4
      %s149 = int_to_ptr.vmem [resolvable:$true] %s148
      %151 = dma.hbm_to_vmem [thread:$0]  %s10, 16, %s149, [#allocation18]
    $region45: #{_lambda_.1} parent=1 // pred_fallthru
      _
    // Predicated region
    $region46: #{_lambda_.1} parent=1 // pred_check
      _
    $region47: #{_lambda_.1} parent=1 // pred_check_branch
      %153 = sbr.rel (0) target = $region49
    $region48: #{_lambda_.1} parent=1 // pred_region
      %s155 = ssub.s32 16, 16
      %156 = vsyncadd [#allocation21], %s155
      %s158 = sshll.u32 [#allocation20], 4
      %s159 = int_to_ptr.vmem [resolvable:$true] %s158
      %161 = dma.hbm_to_vmem [thread:$0]  %s11, 16, %s159, [#allocation21]
    $region49: #{_lambda_.1} parent=1 // pred_fallthru
      _
    // Predicated region
    $region50: #{_lambda_.1} parent=1 // pred_check
      _
    $region51: #{_lambda_.1} parent=1 // pred_check_branch
      %163 = sbr.rel (0) target = $region53
    $region52: #{_lambda_.1} parent=1 // pred_region
      %s165 = ssub.s32 16, 16
      %166 = vsyncadd [#allocation21], %s165
      %s168 = sshll.u32 [#allocation22], 4
      %s169 = int_to_ptr.vmem [resolvable:$true] %s168
      %171 = dma.hbm_to_vmem [thread:$0]  %s12, 16, %s169, [#allocation21]
    $region53: #{_lambda_.1} parent=1 // pred_fallthru
      _
    // Predicated region
    $region54: #{_lambda_.1} parent=1 // pred_check
      _
    $region55: #{_lambda_.1} parent=1 // pred_check_branch
      %173 = sbr.rel (0) target = $region57
    $region56: #{_lambda_.1} parent=1 // pred_region
      %s175 = ssub.s32 16, 16
      %176 = vsyncadd [#allocation24], %s175
      %s178 = sshll.u32 [#allocation23], 4
      %s179 = int_to_ptr.vmem [resolvable:$true] %s178
      %181 = dma.hbm_to_vmem [thread:$0]  %s13, 16, %s179, [#allocation24]
    $region57: #{_lambda_.1} parent=1 // pred_fallthru
      _
    // Predicated region
    $region58: #{_lambda_.1} parent=1 // pred_check
      _
    $region59: #{_lambda_.1} parent=1 // pred_check_branch
      %183 = sbr.rel (0) target = $region61
    $region60: #{_lambda_.1} parent=1 // pred_region
      %s185 = ssub.s32 2048, 2048
      %186 = vsyncadd [#allocation24], %s185
      %s187 = sshll.u32 [#allocation25], 4
      %s188 = int_to_ptr.vmem [resolvable:$true] %s187
      %193 = dma.hbm_to_vmem [thread:$0]  %s14, 2048, %s188, [#allocation24], 128, 128, 8
    $region61: #{_lambda_.1} parent=1 // pred_fallthru
      _
    // Predicated region
    $region62: #{_lambda_.1} parent=1 // pred_check
      _
    $region63: #{_lambda_.1} parent=1 // pred_check_branch
      %195 = sbr.rel (0) target = $region65
    $region64: #{_lambda_.1} parent=1 // pred_region
      %s197 = ssub.s32 64, 64
      %198 = vsyncadd [#allocation27], %s197
      %s200 = sshll.u32 [#allocation26], 4
      %s201 = int_to_ptr.vmem [resolvable:$true] %s200
      %203 = dma.hbm_to_vmem [thread:$0]  %s15, 64, %s201, [#allocation27]
    $region65: #{_lambda_.1} parent=1 // pred_fallthru
      _
    // Predicated region
    $region66: #{_lambda_.1} parent=1 // pred_check
      _
    $region67: #{_lambda_.1} parent=1 // pred_check_branch
      %205 = sbr.rel (0) target = $region69
    $region68: #{_lambda_.1} parent=1 // pred_region
      %s207 = ssub.s32 16, 16
      %208 = vsyncadd [#allocation27], %s207
      %s210 = sshll.u32 [#allocation28], 4
      %s211 = int_to_ptr.vmem [resolvable:$true] %s210
      %213 = dma.hbm_to_vmem [thread:$0]  %s16, 16, %s211, [#allocation27]
    $region69: #{_lambda_.1} parent=1 // pred_fallthru
      _
    // Predicated region
    $region70: #{_lambda_.1} parent=1 // pred_check
      _
    $region71: #{_lambda_.1} parent=1 // pred_check_branch
      %215 = sbr.rel (0) target = $region73
    $region72: #{_lambda_.1} parent=1 // pred_region
      %s217 = ssub.s32 16, 16
      %218 = vsyncadd [#allocation30], %s217
      %s220 = sshll.u32 [#allocation29], 4
      %s221 = int_to_ptr.vmem [resolvable:$true] %s220
      %223 = dma.hbm_to_vmem [thread:$0]  %s17, 16, %s221, [#allocation30]
    $region73: #{_lambda_.1} parent=1 // pred_fallthru
      _
    // Predicated region
    $region74: #{_lambda_.1} parent=1 // pred_check
      _
    $region75: #{_lambda_.1} parent=1 // pred_check_branch
      %225 = sbr.rel (0) target = $region77
    $region76: #{_lambda_.1} parent=1 // pred_region
      %226 = dma.done [#allocation3], 512
    $region77: #{_lambda_.1} parent=1 // pred_fallthru
      _
    // Predicated region
    $region78: #{_lambda_.1} parent=1 // pred_check
      _
    $region79: #{_lambda_.1} parent=1 // pred_check_branch
      %228 = sbr.rel (0) target = $region81
    $region80: #{_lambda_.1} parent=1 // pred_region
      %229 = dma.done [#allocation6], 512
    $region81: #{_lambda_.1} parent=1 // pred_fallthru
      _
    // Predicated region
    $region82: #{_lambda_.1} parent=1 // pred_check
      _
    $region83: #{_lambda_.1} parent=1 // pred_check_branch
      %231 = sbr.rel (0) target = $region85
    $region84: #{_lambda_.1} parent=1 // pred_region
      %232 = dma.done [#allocation6], 256
    $region85: #{_lambda_.1} parent=1 // pred_fallthru
      _
    // Predicated region
    $region86: #{_lambda_.1} parent=1 // pred_check
      _
    $region87: #{_lambda_.1} parent=1 // pred_check_branch
      %234 = sbr.rel (0) target = $region89
    $region88: #{_lambda_.1} parent=1 // pred_region
      %235 = dma.done [#allocation9], 64
    $region89: #{_lambda_.1} parent=1 // pred_fallthru
      _
    // Predicated region
    $region90: #{_lambda_.1} parent=1 // pred_check
      _
    $region91: #{_lambda_.1} parent=1 // pred_check_branch
      %237 = sbr.rel (0) target = $region93
    $region92: #{_lambda_.1} parent=1 // pred_region
      %238 = dma.done [#allocation9], 16
    $region93: #{_lambda_.1} parent=1 // pred_fallthru
      _
    // Predicated region
    $region94: #{_lambda_.1} parent=1 // pred_check
      _
    $region95: #{_lambda_.1} parent=1 // pred_check_branch
      %240 = sbr.rel (0) target = $region97
    $region96: #{_lambda_.1} parent=1 // pred_region
      %241 = dma.done [#allocation12], 16
    $region97: #{_lambda_.1} parent=1 // pred_fallthru
      _
    // Predicated region
    $region98: #{_lambda_.1} parent=1 // pred_check
      _
    $region99: #{_lambda_.1} parent=1 // pred_check_branch
      %243 = sbr.rel (0) target = $region101
    $region100: #{_lambda_.1} parent=1 // pred_region
      %244 = dma.done [#allocation12], 16
    $region101: #{_lambda_.1} parent=1 // pred_fallthru
      _
    // Predicated region
    $region102: #{_lambda_.1} parent=1 // pred_check
      _
    $region103: #{_lambda_.1} parent=1 // pred_check_branch
      %246 = sbr.rel (0) target = $region105
    $region104: #{_lambda_.1} parent=1 // pred_region
      %247 = dma.done [#allocation15], 16
    $region105: #{_lambda_.1} parent=1 // pred_fallthru
      _
    // Predicated region
    $region106: #{_lambda_.1} parent=1 // pred_check
      _
    $region107: #{_lambda_.1} parent=1 // pred_check_branch
      %249 = sbr.rel (0) target = $region109
    $region108: #{_lambda_.1} parent=1 // pred_region
      %250 = dma.done [#allocation15], 2048
    $region109: #{_lambda_.1} parent=1 // pred_fallthru
      _
    // Predicated region
    $region110: #{_lambda_.1} parent=1 // pred_check
      _
    $region111: #{_lambda_.1} parent=1 // pred_check_branch
      %252 = sbr.rel (0) target = $region113
    $region112: #{_lambda_.1} parent=1 // pred_region
      %253 = dma.done [#allocation18], 64
    $region113: #{_lambda_.1} parent=1 // pred_fallthru
      _
    // Predicated region
    $region114: #{_lambda_.1} parent=1 // pred_check
      _
    $region115: #{_lambda_.1} parent=1 // pred_check_branch
      %255 = sbr.rel (0) target = $region117
    $region116: #{_lambda_.1} parent=1 // pred_region
      %256 = dma.done [#allocation18], 16
    $region117: #{_lambda_.1} parent=1 // pred_fallthru
      _
    // Predicated region
    $region118: #{_lambda_.1} parent=1 // pred_check
      _
    $region119: #{_lambda_.1} parent=1 // pred_check_branch
      %258 = sbr.rel (0) target = $region121
    $region120: #{_lambda_.1} parent=1 // pred_region
      %259 = dma.done [#allocation21], 16
    $region121: #{_lambda_.1} parent=1 // pred_fallthru
      _
    // Predicated region
    $region122: #{_lambda_.1} parent=1 // pred_check
      _
    $region123: #{_lambda_.1} parent=1 // pred_check_branch
      %261 = sbr.rel (0) target = $region125
    $region124: #{_lambda_.1} parent=1 // pred_region
      %262 = dma.done [#allocation21], 16
    $region125: #{_lambda_.1} parent=1 // pred_fallthru
      _
    // Predicated region
    $region126: #{_lambda_.1} parent=1 // pred_check
      _
    $region127: #{_lambda_.1} parent=1 // pred_check_branch
      %264 = sbr.rel (0) target = $region129
    $region128: #{_lambda_.1} parent=1 // pred_region
      %265 = dma.done [#allocation24], 16
    $region129: #{_lambda_.1} parent=1 // pred_fallthru
      _
    // Predicated region
    $region130: #{_lambda_.1} parent=1 // pred_check
      _
    $region131: #{_lambda_.1} parent=1 // pred_check_branch
      %267 = sbr.rel (0) target = $region133
    $region132: #{_lambda_.1} parent=1 // pred_region
      %268 = dma.done [#allocation24], 2048
    $region133: #{_lambda_.1} parent=1 // pred_fallthru
      _
    // Predicated region
    $region134: #{_lambda_.1} parent=1 // pred_check
      _
    $region135: #{_lambda_.1} parent=1 // pred_check_branch
      %270 = sbr.rel (0) target = $region137
    $region136: #{_lambda_.1} parent=1 // pred_region
      %271 = dma.done [#allocation27], 64
    $region137: #{_lambda_.1} parent=1 // pred_fallthru
      _
    // Predicated region
    $region138: #{_lambda_.1} parent=1 // pred_check
      _
    $region139: #{_lambda_.1} parent=1 // pred_check_branch
      %273 = sbr.rel (0) target = $region141
    $region140: #{_lambda_.1} parent=1 // pred_region
      %274 = dma.done [#allocation27], 16
    $region141: #{_lambda_.1} parent=1 // pred_fallthru
      _
    // Predicated region
    $region142: #{_lambda_.1} parent=1 // pred_check
      _
    $region143: #{_lambda_.1} parent=1 // pred_check_branch
      %276 = sbr.rel (0) target = $region145
    $region144: #{_lambda_.1} parent=1 // pred_region
      %277 = dma.done [#allocation30], 16
    $region145: #{_lambda_.1} parent=1 // pred_fallthru
      _
    %v279 = vld [vmem:[#allocation2] sm:$0xff]
    %v280 = vld [vmem:[#allocation2 + $0x8] sm:$0xff]
    %v281 = vld [vmem:[#allocation2 + $0x10] sm:$0xff]
    %v282 = vld [vmem:[#allocation2 + $0x18] sm:$0xff]
    %v283 = vld [vmem:[#allocation5] sm:$0xff]
    %v284 = vld [vmem:[#allocation5 + $0x8] sm:$0xff]
    %v285 = vld [vmem:[#allocation5 + $0x10] sm:$0xff]
    %v286 = vld [vmem:[#allocation5 + $0x18] sm:$0xff]
    %vm287 = vcmp.gt.s32.totalorder %v283, 0
    %vm288 = vcmp.gt.s32.totalorder %v284, 0
    %vm289 = vcmp.gt.s32.totalorder %v285, 0
    %vm290 = vcmp.gt.s32.totalorder %v286, 0
    %v291 = vld [vmem:[#allocation7] sm:$0xff]
    %v292 = vld [vmem:[#allocation7 + $0x8] sm:$0xff]
    %v293 = vld [vmem:[#allocation8] sm:$0xf]
    %v294 = vld [vmem:[#allocation10] sm:$0x1]
    %v295 = vld [vmem:[#allocation11] sm:$0x1]
    %v296 = vld [vmem:[#allocation13] sm:$0x1]
    %v297 = vld [vmem:[#allocation14] sm:$0x1]
    %vm298 = vcmask 130048
    %v300 = vsel %vm298, %v279, 0
    %v303 = vsel %vm298, %v280, 0
    %v306 = vsel %vm298, %v281, 0
    %v309 = vsel %vm298, %v282, 0
    %311 = vmatprep.subr.mxu0 0.0
    %312 = vmatpush1.msra.mxu0 %v291
    %313 = vmatprep.subr.mxu0 0.0
    %314 = vmatpush1.msra.mxu0 %v292
    %315 = vmatprep.subr.mxu0 0.0
    %316 = vmatpush1.msra.mxu0 0.0
    %317 = vmatprep.subr.mxu0 0.0
    %318 = vmatpush1.msra.mxu0 0.0
    %319 = vmatprep.subr.mxu0 0.0
    %320 = vmatpush1.msra.mxu0 0.0
    %321 = vmatprep.subr.mxu0 0.0
    %322 = vmatpush1.msra.mxu0 0.0
    %323 = vmatprep.subr.mxu0 0.0
    %324 = vmatpush1.msra.mxu0 0.0
    %325 = vmatprep.subr.mxu0 0.0
    %326 = vmatpush1.msra.mxu0 0.0
    %327 = vmatprep.subr.mxu0 0.0
    %328 = vmatpush1.msra.mxu0 0.0
    %329 = vmatprep.subr.mxu0 0.0
    %330 = vmatpush1.msra.mxu0 0.0
    %331 = vmatprep.subr.mxu0 0.0
    %332 = vmatpush1.msra.mxu0 0.0
    %333 = vmatprep.subr.mxu0 0.0
    %334 = vmatpush1.msra.mxu0 0.0
    %335 = vmatprep.subr.mxu0 0.0
    %336 = vmatpush1.msra.mxu0 0.0
    %337 = vmatprep.subr.mxu0 0.0
    %338 = vmatpush1.msra.mxu0 0.0
    %339 = vmatprep.subr.mxu0 0.0
    %340 = vmatpush1.msra.mxu0 0.0
    %341 = vmatprep.subr.mxu0 0.0
    %342 = vmatpush1.msra.mxu0 0.0
    %343 = vmatprep.subr.mxu0 0.0
    %344 = vmatpush1.msra.mxu0 0.0
    %345 = vmatprep.subr.mxu0 0.0
    %346 = vmatpush1.msra.mxu0 0.0
    %347 = vmatprep.subr.mxu0 0.0
    %348 = vmatpush1.msra.mxu0 0.0
    %349 = vmatprep.subr.mxu0 0.0
    %350 = vmatpush1.msra.mxu0 0.0
    %351 = vmatprep.subr.mxu0 0.0
    %352 = vmatpush1.msra.mxu0 0.0
    %353 = vmatprep.subr.mxu0 0.0
    %354 = vmatpush1.msra.mxu0 0.0
    %355 = vmatprep.subr.mxu0 0.0
    %356 = vmatpush1.msra.mxu0 0.0
    %357 = vmatprep.subr.mxu0 0.0
    %358 = vmatpush1.msra.mxu0 0.0
    %359 = vmatprep.subr.mxu0 0.0
    %360 = vmatpush1.msra.mxu0 0.0
    %361 = vmatprep.subr.mxu0 0.0
    %362 = vmatpush1.msra.mxu0 0.0
    %363 = vmatprep.subr.mxu0 0.0
    %364 = vmatpush1.msra.mxu0 0.0
    %365 = vmatprep.subr.mxu0 0.0
    %366 = vmatpush1.msra.mxu0 0.0
    %367 = vmatprep.subr.mxu0 0.0
    %368 = vmatpush1.msra.mxu0 0.0
    %369 = vmatprep.subr.mxu0 0.0
    %370 = vmatpush1.msra.mxu0 0.0
    %371 = vmatprep.subr.mxu0 0.0
    %372 = vmatpush1.msra.mxu0 0.0
    %373 = vmatprep.subr.mxu0 0.0
    %374 = vmatpush1.msra.mxu0 0.0
    %375 = vmatprep.mubr.f32.mxu0 0.0
    %376 = vmatmul.mubr.f32.gmra.mrb[0].mxu0 %v300
    %v377 = vpop.f32.mrb[0].mxu0
    %v378 = vadd.f32 0.0, %v377
    %v379 = vpop.f32.mrb[0].mxu0
    %380 = vmatprep.mubr.f32.mxu0 0.0
    %381 = vmatmul.mubr.f32.gmra.mrb[0].mxu0 %v303
    %v382 = vpop.f32.mrb[0].mxu0
    %v383 = vadd.f32 0.0, %v382
    %v384 = vpop.f32.mrb[0].mxu0
    %385 = vmatprep.mubr.f32.mxu0 0.0
    %386 = vmatmul.mubr.f32.gmra.mrb[0].mxu0 %v306
    %v387 = vpop.f32.mrb[0].mxu0
    %v388 = vadd.f32 0.0, %v387
    %v389 = vpop.f32.mrb[0].mxu0
    %390 = vmatprep.mubr.f32.mxu0 0.0
    %391 = vmatmul.mubr.f32.gmra.mrb[0].mxu0 %v309
    %v392 = vpop.f32.mrb[0].mxu0
    %v393 = vadd.f32 0.0, %v392
    %v394 = vpop.f32.mrb[0].mxu0
    %395 = vdwg.mxu0
    %396 = vmatprep.subr.mxu0 0.0
    %397 = vmatpush1.xpose.msra.mxu0 %v378
    %398 = vmatprep.subr.mxu0 0.0
    %399 = vmatpush1.xpose.msra.mxu0 %v383
    %400 = vmatprep.subr.mxu0 0.0
    %401 = vmatpush1.xpose.msra.mxu0 %v388
    %402 = vmatprep.subr.mxu0 0.0
    %403 = vmatpush1.xpose.msra.mxu0 %v393
    %404 = vmatprep.subr.mxu0 0.0
    %405 = vmatpush1.xpose.msra.mxu0 0.0
    %406 = vmatprep.subr.mxu0 0.0
    %407 = vmatpush1.xpose.msra.mxu0 0.0
    %408 = vmatprep.subr.mxu0 0.0
    %409 = vmatpush1.xpose.msra.mxu0 0.0
    %410 = vmatprep.subr.mxu0 0.0
    %411 = vmatpush1.xpose.msra.mxu0 0.0
    %412 = vmatprep.subr.mxu0 0.0
    %413 = vmatpush1.xpose.msra.mxu0 0.0
    %414 = vmatprep.subr.mxu0 0.0
    %415 = vmatpush1.xpose.msra.mxu0 0.0
    %416 = vmatprep.subr.mxu0 0.0
    %417 = vmatpush1.xpose.msra.mxu0 0.0
    %418 = vmatprep.subr.mxu0 0.0
    %419 = vmatpush1.xpose.msra.mxu0 0.0
    %420 = vmatprep.subr.mxu0 0.0
    %421 = vmatpush1.xpose.msra.mxu0 0.0
    %422 = vmatprep.subr.mxu0 0.0
    %423 = vmatpush1.xpose.msra.mxu0 0.0
    %424 = vmatprep.subr.mxu0 0.0
    %425 = vmatpush1.xpose.msra.mxu0 0.0
    %426 = vmatprep.subr.mxu0 0.0
    %427 = vmatpush1.xpose.msra.mxu0 0.0
    %428 = vmatprep.subr.mxu0 0.0
    %429 = vmatpush1.xpose.msra.mxu0 0.0
    %430 = vmatprep.subr.mxu0 0.0
    %431 = vmatpush1.xpose.msra.mxu0 0.0
    %432 = vmatprep.subr.mxu0 0.0
    %433 = vmatpush1.xpose.msra.mxu0 0.0
    %434 = vmatprep.subr.mxu0 0.0
    %435 = vmatpush1.xpose.msra.mxu0 0.0
    %436 = vmatprep.subr.mxu0 0.0
    %437 = vmatpush1.xpose.msra.mxu0 0.0
    %438 = vmatprep.subr.mxu0 0.0
    %439 = vmatpush1.xpose.msra.mxu0 0.0
    %440 = vmatprep.subr.mxu0 0.0
    %441 = vmatpush1.xpose.msra.mxu0 0.0
    %442 = vmatprep.subr.mxu0 0.0
    %443 = vmatpush1.xpose.msra.mxu0 0.0
    %444 = vmatprep.subr.mxu0 0.0
    %445 = vmatpush1.xpose.msra.mxu0 0.0
    %446 = vmatprep.subr.mxu0 0.0
    %447 = vmatpush1.xpose.msra.mxu0 0.0
    %448 = vmatprep.subr.mxu0 0.0
    %449 = vmatpush1.xpose.msra.mxu0 0.0
    %450 = vmatprep.subr.mxu0 0.0
    %451 = vmatpush1.xpose.msra.mxu0 0.0
    %452 = vmatprep.subr.mxu0 0.0
    %453 = vmatpush1.xpose.msra.mxu0 0.0
    %454 = vmatprep.subr.mxu0 0.0
    %455 = vmatpush1.xpose.msra.mxu0 0.0
    %456 = vmatprep.subr.mxu0 0.0
    %457 = vmatpush1.xpose.msra.mxu0 0.0
    %458 = vmatprep.subr.mxu0 0.0
    %459 = vmatpush1.xpose.msra.mxu0 0.0
    %460 = vmatprep.mubr.f32.mxu0 0.0
    %461 = vmatmul.mubr.f32.gmra.mrb[0].mxu0 %v293
    %v462 = vpop.f32.mrb[0].mxu0
    %v463 = vadd.f32 0.0, %v462
    %v464 = vpop.f32.mrb[0].mxu0
    %465 = vdwg.mxu0
    %v467 = vlaneseq
    %v468 = vshrl.u32 %v467, 7
    %v469 = vsub.s32 0, %v468
    %v470 = vrot.slane %v294, %v469
    %v472 = vmul.f32 %v378, %v470
    %v473 = vmul.f32 %v383, %v470
    %v474 = vmul.f32 %v388, %v470
    %v475 = vmul.f32 %v393, %v470
    %vm476 = vcmask 261120
    %v477 = vsel %vm476, %v472, 0.0
    %478 = vadd.xlane.f32.xlu0 %v477
    %v479 = vpop.xlane.xlu0 %478
    %v480 = vsel %vm476, %v473, 0.0
    %481 = vadd.xlane.f32.xlu0 %v480
    %v482 = vpop.xlane.xlu0 %481
    %v483 = vsel %vm476, %v474, 0.0
    %484 = vadd.xlane.f32.xlu0 %v483
    %v485 = vpop.xlane.xlu0 %484
    %v486 = vsel %vm476, %v475, 0.0
    %487 = vadd.xlane.f32.xlu0 %v486
    %v488 = vpop.xlane.xlu0 %487
    %v489 = vlaneseq
    %v490 = vshrl.u32 %v489, 7
    %v491 = vsub.s32 0, %v490
    %v492 = vrot.slane %v463, %v491
    %v493 = vadd.f32 %v479, %v492
    %v494 = vadd.f32 %v482, %v492
    %v495 = vadd.f32 %v485, %v492
    %v496 = vadd.f32 %v488, %v492
    %vm497 = vcmp.gt.f32.partialorder %v493, 0.0
    %vm498 = vcmp.gt.f32.partialorder %v494, 0.0
    %vm499 = vcmp.gt.f32.partialorder %v495, 0.0
    %vm500 = vcmp.gt.f32.partialorder %v496, 0.0
    %v501 = vmul.f32 %v493, 0.2
    %v502 = vmul.f32 %v494, 0.2
    %v503 = vmul.f32 %v495, 0.2
    %v504 = vmul.f32 %v496, 0.2
    %v505 = vsel %vm497, %v493, %v501
    %v506 = vsel %vm498, %v494, %v502
    %v507 = vsel %vm499, %v495, %v503
    %v508 = vsel %vm500, %v496, %v504
    %v509 = vsel %vm287, %v505, -1e+30
    %v510 = vsel %vm288, %v506, -1e+30
    %v511 = vsel %vm289, %v507, -1e+30
    %v512 = vsel %vm290, %v508, -1e+30
    %v513 = vsel %vm476, %v509, -inf
    %514 = vmax.xlane.f32.xlu0 %v513
    %v515 = vpop.xlane.xlu0 %514
    %v516 = vsel %vm476, %v510, -inf
    %517 = vmax.xlane.f32.xlu0 %v516
    %v518 = vpop.xlane.xlu0 %517
    %v519 = vsel %vm476, %v511, -inf
    %520 = vmax.xlane.f32.xlu0 %v519
    %v521 = vpop.xlane.xlu0 %520
    %v522 = vsel %vm476, %v512, -inf
    %523 = vmax.xlane.f32.xlu0 %v522
    %v524 = vpop.xlane.xlu0 %523
    %v525 = vsub.f32 %v509, %v515
    %v526 = vsub.f32 %v510, %v518
    %v527 = vsub.f32 %v511, %v521
    %v528 = vsub.f32 %v512, %v524
    %v529 = vmul.f32 %v525, 1.442695
    %v530 = vpow.pop %v529
    %v531 = vmul.f32 %v526, 1.442695
    %v532 = vpow.pop %v531
    %v533 = vmul.f32 %v527, 1.442695
    %v534 = vpow.pop %v533
    %v535 = vmul.f32 %v528, 1.442695
    %v536 = vpow.pop %v535
    %v537 = vsel %vm287, %v530, 0.0
    %v538 = vsel %vm288, %v532, 0.0
    %v539 = vsel %vm289, %v534, 0.0
    %v540 = vsel %vm290, %v536, 0.0
    %v541 = vsel %vm476, %v537, 0.0
    %542 = vadd.xlane.f32.xlu0 %v541
    %v543 = vpop.xlane.xlu0 %542
    %v544 = vsel %vm476, %v538, 0.0
    %545 = vadd.xlane.f32.xlu0 %v544
    %v546 = vpop.xlane.xlu0 %545
    %v547 = vsel %vm476, %v539, 0.0
    %548 = vadd.xlane.f32.xlu0 %v547
    %v549 = vpop.xlane.xlu0 %548
    %v550 = vsel %vm476, %v540, 0.0
    %551 = vadd.xlane.f32.xlu0 %v550
    %v552 = vpop.xlane.xlu0 %551
    %v553 = vrcp.pop %v543
    %v554 = vrcp.pop %v546
    %v555 = vrcp.pop %v549
    %v556 = vrcp.pop %v552
    %v557 = vmul.f32 %v537, %v553
    %v558 = vmul.f32 %v538, %v554
    %v559 = vmul.f32 %v539, %v555
    %v560 = vmul.f32 %v540, %v556
    %v561 = vpack.c.bf16 %v558, %v557
    %v562 = vpack.c.bf16 %v560, %v559
    %v563 = vpack.c.bf16 %v383, %v378
    %v564 = vpack.c.bf16 %v393, %v388
    %v566 = vsel %vm476, %v561, 0
    %v569 = vsel %vm476, %v562, 0
    %571 = vmatprep.subr.bf16.mxu0 0
    %572 = vmatpush1.bf16.msra.mxu0 %v563
    %573 = vmatprep.subr.bf16.mxu0 0
    %574 = vmatpush1.bf16.msra.mxu0 %v564
    %575 = vmatprep.subr.bf16.mxu0 0
    %576 = vmatpush1.bf16.msra.mxu0 0
    %577 = vmatprep.subr.bf16.mxu0 0
    %578 = vmatpush1.bf16.msra.mxu0 0
    %579 = vmatprep.subr.bf16.mxu0 0
    %580 = vmatpush1.bf16.msra.mxu0 0
    %581 = vmatprep.subr.bf16.mxu0 0
    %582 = vmatpush1.bf16.msra.mxu0 0
    %583 = vmatprep.subr.bf16.mxu0 0
    %584 = vmatpush1.bf16.msra.mxu0 0
    %585 = vmatprep.subr.bf16.mxu0 0
    %586 = vmatpush1.bf16.msra.mxu0 0
    %587 = vmatprep.subr.bf16.mxu0 0
    %588 = vmatpush1.bf16.msra.mxu0 0
    %589 = vmatprep.subr.bf16.mxu0 0
    %590 = vmatpush1.bf16.msra.mxu0 0
    %591 = vmatprep.subr.bf16.mxu0 0
    %592 = vmatpush1.bf16.msra.mxu0 0
    %593 = vmatprep.subr.bf16.mxu0 0
    %594 = vmatpush1.bf16.msra.mxu0 0
    %595 = vmatprep.subr.bf16.mxu0 0
    %596 = vmatpush1.bf16.msra.mxu0 0
    %597 = vmatprep.subr.bf16.mxu0 0
    %598 = vmatpush1.bf16.msra.mxu0 0
    %599 = vmatprep.subr.bf16.mxu0 0
    %600 = vmatpush1.bf16.msra.mxu0 0
    %601 = vmatprep.subr.bf16.mxu0 0
    %602 = vmatpush1.bf16.msra.mxu0 0
    %603 = vmatprep.mubr.bf16.mxu0 0
    %604 = vmatmul.mubr.bf16.gmra.mrb[0].mxu0 %v566
    %v605 = vpop.f32.mrb[0].mxu0
    %v606 = vadd.f32 0.0, %v605
    %v607 = vpop.f32.mrb[0].mxu0
    %v608 = vpop.f32.mrb[0].mxu0
    %v609 = vadd.f32 0.0, %v608
    %v610 = vpop.f32.mrb[0].mxu0
    %611 = vmatprep.mubr.bf16.mxu0 0
    %612 = vmatmul.mubr.bf16.gmra.mrb[0].mxu0 %v569
    %v613 = vpop.f32.mrb[0].mxu0
    %v614 = vadd.f32 0.0, %v613
    %v615 = vpop.f32.mrb[0].mxu0
    %v616 = vpop.f32.mrb[0].mxu0
    %v617 = vadd.f32 0.0, %v616
    %v618 = vpop.f32.mrb[0].mxu0
    %619 = vdwg.mxu0
    %624 = vrot.lane.b32.xlu0 %v472, 96
    %v625 = vpop.permute.xlu0 %624
    %626 = vrot.lane.b32.xlu0 %v473, 96
    %v627 = vpop.permute.xlu0 %626
    %628 = vrot.lane.b32.xlu0 %v474, 96
    %v629 = vpop.permute.xlu0 %628
    %630 = vrot.lane.b32.xlu0 %v475, 96
    %v631 = vpop.permute.xlu0 %630
    %v636 = vsel %vm476, %v625, 0.0
    %637 = vadd.xlane.f32.xlu0 %v636
    %v638 = vpop.xlane.xlu0 %637
    %v639 = vsel %vm476, %v627, 0.0
    %640 = vadd.xlane.f32.xlu0 %v639
    %v641 = vpop.xlane.xlu0 %640
    %v642 = vsel %vm476, %v629, 0.0
    %643 = vadd.xlane.f32.xlu0 %v642
    %v644 = vpop.xlane.xlu0 %643
    %v645 = vsel %vm476, %v631, 0.0
    %646 = vadd.xlane.f32.xlu0 %v645
    %v647 = vpop.xlane.xlu0 %646
    %v648 = vlaneseq
    %v649 = vshrl.u32 %v648, 7
    %v650 = vsub.s32 1, %v649
    %v651 = vrot.slane %v463, %v650
    %v652 = vadd.f32 %v638, %v651
    %v653 = vadd.f32 %v641, %v651
    %v654 = vadd.f32 %v644, %v651
    %v655 = vadd.f32 %v647, %v651
    %vm656 = vcmp.gt.f32.partialorder %v652, 0.0
    %vm657 = vcmp.gt.f32.partialorder %v653, 0.0
    %vm658 = vcmp.gt.f32.partialorder %v654, 0.0
    %vm659 = vcmp.gt.f32.partialorder %v655, 0.0
    %v660 = vmul.f32 %v652, 0.2
    %v661 = vmul.f32 %v653, 0.2
    %v662 = vmul.f32 %v654, 0.2
    %v663 = vmul.f32 %v655, 0.2
    %v664 = vsel %vm656, %v652, %v660
    %v665 = vsel %vm657, %v653, %v661
    %v666 = vsel %vm658, %v654, %v662
    %v667 = vsel %vm659, %v655, %v663
    %v668 = vsel %vm287, %v664, -1e+30
    %v669 = vsel %vm288, %v665, -1e+30
    %v670 = vsel %vm289, %v666, -1e+30
    %v671 = vsel %vm290, %v667, -1e+30
    %v672 = vsel %vm476, %v668, -inf
    %673 = vmax.xlane.f32.xlu0 %v672
    %v674 = vpop.xlane.xlu0 %673
    %v675 = vsel %vm476, %v669, -inf
    %676 = vmax.xlane.f32.xlu0 %v675
    %v677 = vpop.xlane.xlu0 %676
    %v678 = vsel %vm476, %v670, -inf
    %679 = vmax.xlane.f32.xlu0 %v678
    %v680 = vpop.xlane.xlu0 %679
    %v681 = vsel %vm476, %v671, -inf
    %682 = vmax.xlane.f32.xlu0 %v681
    %v683 = vpop.xlane.xlu0 %682
    %v684 = vsub.f32 %v668, %v674
    %v685 = vsub.f32 %v669, %v677
    %v686 = vsub.f32 %v670, %v680
    %v687 = vsub.f32 %v671, %v683
    %v688 = vmul.f32 %v684, 1.442695
    %v689 = vpow.pop %v688
    %v690 = vmul.f32 %v685, 1.442695
    %v691 = vpow.pop %v690
    %v692 = vmul.f32 %v686, 1.442695
    %v693 = vpow.pop %v692
    %v694 = vmul.f32 %v687, 1.442695
    %v695 = vpow.pop %v694
    %v696 = vsel %vm287, %v689, 0.0
    %v697 = vsel %vm288, %v691, 0.0
    %v698 = vsel %vm289, %v693, 0.0
    %v699 = vsel %vm290, %v695, 0.0
    %v700 = vsel %vm476, %v696, 0.0
    %701 = vadd.xlane.f32.xlu0 %v700
    %v702 = vpop.xlane.xlu0 %701
    %v703 = vsel %vm476, %v697, 0.0
    %704 = vadd.xlane.f32.xlu0 %v703
    %v705 = vpop.xlane.xlu0 %704
    %v706 = vsel %vm476, %v698, 0.0
    %707 = vadd.xlane.f32.xlu0 %v706
    %v708 = vpop.xlane.xlu0 %707
    %v709 = vsel %vm476, %v699, 0.0
    %710 = vadd.xlane.f32.xlu0 %v709
    %v711 = vpop.xlane.xlu0 %710
    %v712 = vrcp.pop %v702
    %v713 = vrcp.pop %v705
    %v714 = vrcp.pop %v708
    %v715 = vrcp.pop %v711
    %v716 = vmul.f32 %v696, %v712
    %v717 = vmul.f32 %v697, %v713
    %v718 = vmul.f32 %v698, %v714
    %v719 = vmul.f32 %v699, %v715
    %v720 = vpack.c.bf16 %v717, %v716
    %v721 = vpack.c.bf16 %v719, %v718
    %724 = vrot.lane.b32.xlu0 %v563, 96
    %v725 = vpop.permute.xlu0 %724
    %726 = vrot.lane.b32.xlu0 %v564, 96
    %v727 = vpop.permute.xlu0 %726
    %v731 = vsel %vm476, %v720, 0
    %v734 = vsel %vm476, %v721, 0
    %736 = vmatprep.subr.bf16.mxu0 0
    %737 = vmatpush1.bf16.msra.mxu0 %v725
    %738 = vmatprep.subr.bf16.mxu0 0
    %739 = vmatpush1.bf16.msra.mxu0 %v727
    %740 = vmatprep.subr.bf16.mxu0 0
    %741 = vmatpush1.bf16.msra.mxu0 0
    %742 = vmatprep.subr.bf16.mxu0 0
    %743 = vmatpush1.bf16.msra.mxu0 0
    %744 = vmatprep.subr.bf16.mxu0 0
    %745 = vmatpush1.bf16.msra.mxu0 0
    %746 = vmatprep.subr.bf16.mxu0 0
    %747 = vmatpush1.bf16.msra.mxu0 0
    %748 = vmatprep.subr.bf16.mxu0 0
    %749 = vmatpush1.bf16.msra.mxu0 0
    %750 = vmatprep.subr.bf16.mxu0 0
    %751 = vmatpush1.bf16.msra.mxu0 0
    %752 = vmatprep.subr.bf16.mxu0 0
    %753 = vmatpush1.bf16.msra.mxu0 0
    %754 = vmatprep.subr.bf16.mxu0 0
    %755 = vmatpush1.bf16.msra.mxu0 0
    %756 = vmatprep.subr.bf16.mxu0 0
    %757 = vmatpush1.bf16.msra.mxu0 0
    %758 = vmatprep.subr.bf16.mxu0 0
    %759 = vmatpush1.bf16.msra.mxu0 0
    %760 = vmatprep.subr.bf16.mxu0 0
    %761 = vmatpush1.bf16.msra.mxu0 0
    %762 = vmatprep.subr.bf16.mxu0 0
    %763 = vmatpush1.bf16.msra.mxu0 0
    %764 = vmatprep.subr.bf16.mxu0 0
    %765 = vmatpush1.bf16.msra.mxu0 0
    %766 = vmatprep.subr.bf16.mxu0 0
    %767 = vmatpush1.bf16.msra.mxu0 0
    %768 = vmatprep.mubr.bf16.mxu0 0
    %769 = vmatmul.mubr.bf16.gmra.mrb[0].mxu0 %v731
    %v770 = vpop.f32.mrb[0].mxu0
    %v771 = vadd.f32 0.0, %v770
    %v772 = vpop.f32.mrb[0].mxu0
    %v773 = vpop.f32.mrb[0].mxu0
    %v774 = vadd.f32 0.0, %v773
    %v775 = vpop.f32.mrb[0].mxu0
    %776 = vmatprep.mubr.bf16.mxu0 0
    %777 = vmatmul.mubr.bf16.gmra.mrb[0].mxu0 %v734
    %v778 = vpop.f32.mrb[0].mxu0
    %v779 = vadd.f32 0.0, %v778
    %v780 = vpop.f32.mrb[0].mxu0
    %v781 = vpop.f32.mrb[0].mxu0
    %v782 = vadd.f32 0.0, %v781
    %v783 = vpop.f32.mrb[0].mxu0
    %784 = vdwg.mxu0
    %785 = vrot.lane.b32.xlu0 %v472, 64
    %v786 = vpop.permute.xlu0 %785
    %787 = vrot.lane.b32.xlu0 %v473, 64
    %v788 = vpop.permute.xlu0 %787
    %789 = vrot.lane.b32.xlu0 %v474, 64
    %v790 = vpop.permute.xlu0 %789
    %791 = vrot.lane.b32.xlu0 %v475, 64
    %v792 = vpop.permute.xlu0 %791
    %v797 = vsel %vm476, %v786, 0.0
    %798 = vadd.xlane.f32.xlu0 %v797
    %v799 = vpop.xlane.xlu0 %798
    %v800 = vsel %vm476, %v788, 0.0
    %801 = vadd.xlane.f32.xlu0 %v800
    %v802 = vpop.xlane.xlu0 %801
    %v803 = vsel %vm476, %v790, 0.0
    %804 = vadd.xlane.f32.xlu0 %v803
    %v805 = vpop.xlane.xlu0 %804
    %v806 = vsel %vm476, %v792, 0.0
    %807 = vadd.xlane.f32.xlu0 %v806
    %v808 = vpop.xlane.xlu0 %807
    %v809 = vlaneseq
    %v810 = vshrl.u32 %v809, 7
    %v811 = vsub.s32 2, %v810
    %v812 = vrot.slane %v463, %v811
    %v813 = vadd.f32 %v799, %v812
    %v814 = vadd.f32 %v802, %v812
    %v815 = vadd.f32 %v805, %v812
    %v816 = vadd.f32 %v808, %v812
    %vm817 = vcmp.gt.f32.partialorder %v813, 0.0
    %vm818 = vcmp.gt.f32.partialorder %v814, 0.0
    %vm819 = vcmp.gt.f32.partialorder %v815, 0.0
    %vm820 = vcmp.gt.f32.partialorder %v816, 0.0
    %v821 = vmul.f32 %v813, 0.2
    %v822 = vmul.f32 %v814, 0.2
    %v823 = vmul.f32 %v815, 0.2
    %v824 = vmul.f32 %v816, 0.2
    %v825 = vsel %vm817, %v813, %v821
    %v826 = vsel %vm818, %v814, %v822
    %v827 = vsel %vm819, %v815, %v823
    %v828 = vsel %vm820, %v816, %v824
    %v829 = vsel %vm287, %v825, -1e+30
    %v830 = vsel %vm288, %v826, -1e+30
    %v831 = vsel %vm289, %v827, -1e+30
    %v832 = vsel %vm290, %v828, -1e+30
    %v833 = vsel %vm476, %v829, -inf
    %834 = vmax.xlane.f32.xlu0 %v833
    %v835 = vpop.xlane.xlu0 %834
    %v836 = vsel %vm476, %v830, -inf
    %837 = vmax.xlane.f32.xlu0 %v836
    %v838 = vpop.xlane.xlu0 %837
    %v839 = vsel %vm476, %v831, -inf
    %840 = vmax.xlane.f32.xlu0 %v839
    %v841 = vpop.xlane.xlu0 %840
    %v842 = vsel %vm476, %v832, -inf
    %843 = vmax.xlane.f32.xlu0 %v842
    %v844 = vpop.xlane.xlu0 %843
    %v845 = vsub.f32 %v829, %v835
    %v846 = vsub.f32 %v830, %v838
    %v847 = vsub.f32 %v831, %v841
    %v848 = vsub.f32 %v832, %v844
    %v849 = vmul.f32 %v845, 1.442695
    %v850 = vpow.pop %v849
    %v851 = vmul.f32 %v846, 1.442695
    %v852 = vpow.pop %v851
    %v853 = vmul.f32 %v847, 1.442695
    %v854 = vpow.pop %v853
    %v855 = vmul.f32 %v848, 1.442695
    %v856 = vpow.pop %v855
    %v857 = vsel %vm287, %v850, 0.0
    %v858 = vsel %vm288, %v852, 0.0
    %v859 = vsel %vm289, %v854, 0.0
    %v860 = vsel %vm290, %v856, 0.0
    %v861 = vsel %vm476, %v857, 0.0
    %862 = vadd.xlane.f32.xlu0 %v861
    %v863 = vpop.xlane.xlu0 %862
    %v864 = vsel %vm476, %v858, 0.0
    %865 = vadd.xlane.f32.xlu0 %v864
    %v866 = vpop.xlane.xlu0 %865
    %v867 = vsel %vm476, %v859, 0.0
    %868 = vadd.xlane.f32.xlu0 %v867
    %v869 = vpop.xlane.xlu0 %868
    %v870 = vsel %vm476, %v860, 0.0
    %871 = vadd.xlane.f32.xlu0 %v870
    %v872 = vpop.xlane.xlu0 %871
    %v873 = vrcp.pop %v863
    %v874 = vrcp.pop %v866
    %v875 = vrcp.pop %v869
    %v876 = vrcp.pop %v872
    %v877 = vmul.f32 %v857, %v873
    %v878 = vmul.f32 %v858, %v874
    %v879 = vmul.f32 %v859, %v875
    %v880 = vmul.f32 %v860, %v876
    %v881 = vpack.c.bf16 %v878, %v877
    %v882 = vpack.c.bf16 %v880, %v879
    %883 = vrot.lane.b32.xlu0 %v563, 64
    %v884 = vpop.permute.xlu0 %883
    %885 = vrot.lane.b32.xlu0 %v564, 64
    %v886 = vpop.permute.xlu0 %885
    %v890 = vsel %vm476, %v881, 0
    %v893 = vsel %vm476, %v882, 0
    %895 = vmatprep.subr.bf16.mxu0 0
    %896 = vmatpush1.bf16.msra.mxu0 %v884
    %897 = vmatprep.subr.bf16.mxu0 0
    %898 = vmatpush1.bf16.msra.mxu0 %v886
    %899 = vmatprep.subr.bf16.mxu0 0
    %900 = vmatpush1.bf16.msra.mxu0 0
    %901 = vmatprep.subr.bf16.mxu0 0
    %902 = vmatpush1.bf16.msra.mxu0 0
    %903 = vmatprep.subr.bf16.mxu0 0
    %904 = vmatpush1.bf16.msra.mxu0 0
    %905 = vmatprep.subr.bf16.mxu0 0
    %906 = vmatpush1.bf16.msra.mxu0 0
    %907 = vmatprep.subr.bf16.mxu0 0
    %908 = vmatpush1.bf16.msra.mxu0 0
    %909 = vmatprep.subr.bf16.mxu0 0
    %910 = vmatpush1.bf16.msra.mxu0 0
    %911 = vmatprep.subr.bf16.mxu0 0
    %912 = vmatpush1.bf16.msra.mxu0 0
    %913 = vmatprep.subr.bf16.mxu0 0
    %914 = vmatpush1.bf16.msra.mxu0 0
    %915 = vmatprep.subr.bf16.mxu0 0
    %916 = vmatpush1.bf16.msra.mxu0 0
    %917 = vmatprep.subr.bf16.mxu0 0
    %918 = vmatpush1.bf16.msra.mxu0 0
    %919 = vmatprep.subr.bf16.mxu0 0
    %920 = vmatpush1.bf16.msra.mxu0 0
    %921 = vmatprep.subr.bf16.mxu0 0
    %922 = vmatpush1.bf16.msra.mxu0 0
    %923 = vmatprep.subr.bf16.mxu0 0
    %924 = vmatpush1.bf16.msra.mxu0 0
    %925 = vmatprep.subr.bf16.mxu0 0
    %926 = vmatpush1.bf16.msra.mxu0 0
    %927 = vmatprep.mubr.bf16.mxu0 0
    %928 = vmatmul.mubr.bf16.gmra.mrb[0].mxu0 %v890
    %v929 = vpop.f32.mrb[0].mxu0
    %v930 = vadd.f32 0.0, %v929
    %v931 = vpop.f32.mrb[0].mxu0
    %v932 = vpop.f32.mrb[0].mxu0
    %v933 = vadd.f32 0.0, %v932
    %v934 = vpop.f32.mrb[0].mxu0
    %935 = vmatprep.mubr.bf16.mxu0 0
    %936 = vmatmul.mubr.bf16.gmra.mrb[0].mxu0 %v893
    %v937 = vpop.f32.mrb[0].mxu0
    %v938 = vadd.f32 0.0, %v937
    %v939 = vpop.f32.mrb[0].mxu0
    %v940 = vpop.f32.mrb[0].mxu0
    %v941 = vadd.f32 0.0, %v940
    %v942 = vpop.f32.mrb[0].mxu0
    %943 = vdwg.mxu0
    %944 = vrot.lane.b32.xlu0 %v472, 32
    %v945 = vpop.permute.xlu0 %944
    %946 = vrot.lane.b32.xlu0 %v473, 32
    %v947 = vpop.permute.xlu0 %946
    %948 = vrot.lane.b32.xlu0 %v474, 32
    %v949 = vpop.permute.xlu0 %948
    %950 = vrot.lane.b32.xlu0 %v475, 32
    %v951 = vpop.permute.xlu0 %950
    %v956 = vsel %vm476, %v945, 0.0
    %957 = vadd.xlane.f32.xlu0 %v956
    %v958 = vpop.xlane.xlu0 %957
    %v959 = vsel %vm476, %v947, 0.0
    %960 = vadd.xlane.f32.xlu0 %v959
    %v961 = vpop.xlane.xlu0 %960
    %v962 = vsel %vm476, %v949, 0.0
    %963 = vadd.xlane.f32.xlu0 %v962
    %v964 = vpop.xlane.xlu0 %963
    %v965 = vsel %vm476, %v951, 0.0
    %966 = vadd.xlane.f32.xlu0 %v965
    %v967 = vpop.xlane.xlu0 %966
    %v968 = vlaneseq
    %v969 = vshrl.u32 %v968, 7
    %v970 = vsub.s32 3, %v969
    %v971 = vrot.slane %v463, %v970
    %v972 = vadd.f32 %v958, %v971
    %v973 = vadd.f32 %v961, %v971
    %v974 = vadd.f32 %v964, %v971
    %v975 = vadd.f32 %v967, %v971
    %vm976 = vcmp.gt.f32.partialorder %v972, 0.0
    %vm977 = vcmp.gt.f32.partialorder %v973, 0.0
    %vm978 = vcmp.gt.f32.partialorder %v974, 0.0
    %vm979 = vcmp.gt.f32.partialorder %v975, 0.0
    %v980 = vmul.f32 %v972, 0.2
    %v981 = vmul.f32 %v973, 0.2
    %v982 = vmul.f32 %v974, 0.2
    %v983 = vmul.f32 %v975, 0.2
    %v984 = vsel %vm976, %v972, %v980
    %v985 = vsel %vm977, %v973, %v981
    %v986 = vsel %vm978, %v974, %v982
    %v987 = vsel %vm979, %v975, %v983
    %v988 = vsel %vm287, %v984, -1e+30
    %v989 = vsel %vm288, %v985, -1e+30
    %v990 = vsel %vm289, %v986, -1e+30
    %v991 = vsel %vm290, %v987, -1e+30
    %v992 = vsel %vm476, %v988, -inf
    %993 = vmax.xlane.f32.xlu0 %v992
    %v994 = vpop.xlane.xlu0 %993
    %v995 = vsel %vm476, %v989, -inf
    %996 = vmax.xlane.f32.xlu0 %v995
    %v997 = vpop.xlane.xlu0 %996
    %v998 = vsel %vm476, %v990, -inf
    %999 = vmax.xlane.f32.xlu0 %v998
    %v1000 = vpop.xlane.xlu0 %999
    %v1001 = vsel %vm476, %v991, -inf
    %1002 = vmax.xlane.f32.xlu0 %v1001
    %v1003 = vpop.xlane.xlu0 %1002
    %v1004 = vsub.f32 %v988, %v994
    %v1005 = vsub.f32 %v989, %v997
    %v1006 = vsub.f32 %v990, %v1000
    %v1007 = vsub.f32 %v991, %v1003
    %v1008 = vmul.f32 %v1004, 1.442695
    %v1009 = vpow.pop %v1008
    %v1010 = vmul.f32 %v1005, 1.442695
    %v1011 = vpow.pop %v1010
    %v1012 = vmul.f32 %v1006, 1.442695
    %v1013 = vpow.pop %v1012
    %v1014 = vmul.f32 %v1007, 1.442695
    %v1015 = vpow.pop %v1014
    %v1016 = vsel %vm287, %v1009, 0.0
    %v1017 = vsel %vm288, %v1011, 0.0
    %v1018 = vsel %vm289, %v1013, 0.0
    %v1019 = vsel %vm290, %v1015, 0.0
    %v1020 = vsel %vm476, %v1016, 0.0
    %1021 = vadd.xlane.f32.xlu0 %v1020
    %v1022 = vpop.xlane.xlu0 %1021
    %v1023 = vsel %vm476, %v1017, 0.0
    %1024 = vadd.xlane.f32.xlu0 %v1023
    %v1025 = vpop.xlane.xlu0 %1024
    %v1026 = vsel %vm476, %v1018, 0.0
    %1027 = vadd.xlane.f32.xlu0 %v1026
    %v1028 = vpop.xlane.xlu0 %1027
    %v1029 = vsel %vm476, %v1019, 0.0
    %1030 = vadd.xlane.f32.xlu0 %v1029
    %v1031 = vpop.xlane.xlu0 %1030
    %v1032 = vrcp.pop %v1022
    %v1033 = vrcp.pop %v1025
    %v1034 = vrcp.pop %v1028
    %v1035 = vrcp.pop %v1031
    %v1036 = vmul.f32 %v1016, %v1032
    %v1037 = vmul.f32 %v1017, %v1033
    %v1038 = vmul.f32 %v1018, %v1034
    %v1039 = vmul.f32 %v1019, %v1035
    %v1040 = vpack.c.bf16 %v1037, %v1036
    %v1041 = vpack.c.bf16 %v1039, %v1038
    %1042 = vrot.lane.b32.xlu0 %v563, 32
    %v1043 = vpop.permute.xlu0 %1042
    %1044 = vrot.lane.b32.xlu0 %v564, 32
    %v1045 = vpop.permute.xlu0 %1044
    %v1049 = vsel %vm476, %v1040, 0
    %v1052 = vsel %vm476, %v1041, 0
    %1054 = vmatprep.subr.bf16.mxu0 0
    %1055 = vmatpush1.bf16.msra.mxu0 %v1043
    %1056 = vmatprep.subr.bf16.mxu0 0
    %1057 = vmatpush1.bf16.msra.mxu0 %v1045
    %1058 = vmatprep.subr.bf16.mxu0 0
    %1059 = vmatpush1.bf16.msra.mxu0 0
    %1060 = vmatprep.subr.bf16.mxu0 0
    %1061 = vmatpush1.bf16.msra.mxu0 0
    %1062 = vmatprep.subr.bf16.mxu0 0
    %1063 = vmatpush1.bf16.msra.mxu0 0
    %1064 = vmatprep.subr.bf16.mxu0 0
    %1065 = vmatpush1.bf16.msra.mxu0 0
    %1066 = vmatprep.subr.bf16.mxu0 0
    %1067 = vmatpush1.bf16.msra.mxu0 0
    %1068 = vmatprep.subr.bf16.mxu0 0
    %1069 = vmatpush1.bf16.msra.mxu0 0
    %1070 = vmatprep.subr.bf16.mxu0 0
    %1071 = vmatpush1.bf16.msra.mxu0 0
    %1072 = vmatprep.subr.bf16.mxu0 0
    %1073 = vmatpush1.bf16.msra.mxu0 0
    %1074 = vmatprep.subr.bf16.mxu0 0
    %1075 = vmatpush1.bf16.msra.mxu0 0
    %1076 = vmatprep.subr.bf16.mxu0 0
    %1077 = vmatpush1.bf16.msra.mxu0 0
    %1078 = vmatprep.subr.bf16.mxu0 0
    %1079 = vmatpush1.bf16.msra.mxu0 0
    %1080 = vmatprep.subr.bf16.mxu0 0
    %1081 = vmatpush1.bf16.msra.mxu0 0
    %1082 = vmatprep.subr.bf16.mxu0 0
    %1083 = vmatpush1.bf16.msra.mxu0 0
    %1084 = vmatprep.subr.bf16.mxu0 0
    %1085 = vmatpush1.bf16.msra.mxu0 0
    %1086 = vmatprep.mubr.bf16.mxu0 0
    %1087 = vmatmul.mubr.bf16.gmra.mrb[0].mxu0 %v1049
    %v1088 = vpop.f32.mrb[0].mxu0
    %v1089 = vadd.f32 0.0, %v1088
    %v1090 = vpop.f32.mrb[0].mxu0
    %v1091 = vpop.f32.mrb[0].mxu0
    %v1092 = vadd.f32 0.0, %v1091
    %v1093 = vpop.f32.mrb[0].mxu0
    %1094 = vmatprep.mubr.bf16.mxu0 0
    %1095 = vmatmul.mubr.bf16.gmra.mrb[0].mxu0 %v1052
    %v1096 = vpop.f32.mrb[0].mxu0
    %v1097 = vadd.f32 0.0, %v1096
    %v1098 = vpop.f32.mrb[0].mxu0
    %v1099 = vpop.f32.mrb[0].mxu0
    %v1100 = vadd.f32 0.0, %v1099
    %v1101 = vpop.f32.mrb[0].mxu0
    %1102 = vdwg.mxu0
    %1107 = vrot.lane.b32.xlu0 %v771, 32
    %v1108 = vpop.permute.xlu0 %1107
    %1109 = vrot.lane.b32.xlu0 %v774, 32
    %v1110 = vpop.permute.xlu0 %1109
    %1111 = vrot.lane.b32.xlu0 %v779, 32
    %v1112 = vpop.permute.xlu0 %1111
    %1113 = vrot.lane.b32.xlu0 %v782, 32
    %v1114 = vpop.permute.xlu0 %1113
    %1123 = vrot.lane.b32.xlu0 %v930, 64
    %v1124 = vpop.permute.xlu0 %1123
    %1125 = vrot.lane.b32.xlu0 %v933, 64
    %v1126 = vpop.permute.xlu0 %1125
    %1127 = vrot.lane.b32.xlu0 %v938, 64
    %v1128 = vpop.permute.xlu0 %1127
    %1129 = vrot.lane.b32.xlu0 %v941, 64
    %v1130 = vpop.permute.xlu0 %1129
    %1139 = vrot.lane.b32.xlu0 %v1089, 96
    %v1140 = vpop.permute.xlu0 %1139
    %1141 = vrot.lane.b32.xlu0 %v1092, 96
    %v1142 = vpop.permute.xlu0 %1141
    %1143 = vrot.lane.b32.xlu0 %v1097, 96
    %v1144 = vpop.permute.xlu0 %1143
    %1145 = vrot.lane.b32.xlu0 %v1100, 96
    %v1146 = vpop.permute.xlu0 %1145
    %v1151 = vsel %vm476, %v606, %v1108
    %v1152 = vsel %vm476, %v609, %v1110
    %v1153 = vsel %vm476, %v614, %v1112
    %v1154 = vsel %vm476, %v617, %v1114
    %vm1155 = vcmask 523264
    %v1156 = vsel %vm1155, %v1151, %v1124
    %v1157 = vsel %vm1155, %v1152, %v1126
    %v1158 = vsel %vm1155, %v1153, %v1128
    %v1159 = vsel %vm1155, %v1154, %v1130
    %vm1160 = vcmask 785408
    %v1161 = vsel %vm1160, %v1156, %v1140
    %v1162 = vsel %vm1160, %v1157, %v1142
    %v1163 = vsel %vm1160, %v1158, %v1144
    %v1164 = vsel %vm1160, %v1159, %v1146
    %v1166 = vlaneseq
    %v1167 = vshrl.u32 %v1166, 7
    %v1168 = vsub.s32 0, %v1167
    %v1169 = vrot.slane %v295, %v1168
    %v1171 = vadd.f32 %v1161, %v1169
    %v1172 = vadd.f32 %v1162, %v1169
    %v1173 = vadd.f32 %v1163, %v1169
    %v1174 = vadd.f32 %v1164, %v1169
    %v1176 = vlaneseq
    %v1177 = vshrl.u32 %v1176, 7
    %v1178 = vsub.s32 0, %v1177
    %v1179 = vrot.slane %v296, %v1178
    %v1181 = vmul.f32 %v1171, %v1179
    %v1182 = vmul.f32 %v1172, %v1179
    %v1183 = vmul.f32 %v1173, %v1179
    %v1184 = vmul.f32 %v1174, %v1179
    %v1186 = vlaneseq
    %v1187 = vshrl.u32 %v1186, 7
    %v1188 = vsub.s32 0, %v1187
    %v1189 = vrot.slane %v297, %v1188
    %v1191 = vadd.f32 %v1181, %v1189
    %v1192 = vadd.f32 %v1182, %v1189
    %v1193 = vadd.f32 %v1183, %v1189
    %v1194 = vadd.f32 %v1184, %v1189
    %vm1195 = vcmp.gt.f32.partialorder %v1191, 0.0
    %vm1196 = vcmp.gt.f32.partialorder %v1192, 0.0
    %vm1197 = vcmp.gt.f32.partialorder %v1193, 0.0
    %vm1198 = vcmp.gt.f32.partialorder %v1194, 0.0
    %v1199 = vmin.f32 %v1191, 0.0
    %v1200 = vmin.f32 %v1192, 0.0
    %v1201 = vmin.f32 %v1193, 0.0
    %v1202 = vmin.f32 %v1194, 0.0
    %v1203 = vmul.f32 %v1199, 1.442695
    %v1204 = vpow.pop %v1203
    %v1205 = vmul.f32 %v1200, 1.442695
    %v1206 = vpow.pop %v1205
    %v1207 = vmul.f32 %v1201, 1.442695
    %v1208 = vpow.pop %v1207
    %v1209 = vmul.f32 %v1202, 1.442695
    %v1210 = vpow.pop %v1209
    %v1211 = vsub.f32 %v1204, 1.0
    %v1212 = vsub.f32 %v1206, 1.0
    %v1213 = vsub.f32 %v1208, 1.0
    %v1214 = vsub.f32 %v1210, 1.0
    %v1215 = vsel %vm1195, %v1191, %v1211
    %v1216 = vsel %vm1196, %v1192, %v1212
    %v1217 = vsel %vm1197, %v1193, %v1213
    %v1218 = vsel %vm1198, %v1194, %v1214
    %v1219 = vld [vmem:[#allocation16] sm:$0xff]
    %v1220 = vld [vmem:[#allocation16 + $0x8] sm:$0xff]
    %v1221 = vld [vmem:[#allocation16 + $0x10] sm:$0xff]
    %v1222 = vld [vmem:[#allocation16 + $0x18] sm:$0xff]
    %v1223 = vld [vmem:[#allocation16 + $0x20] sm:$0xff]
    %v1224 = vld [vmem:[#allocation16 + $0x28] sm:$0xff]
    %v1225 = vld [vmem:[#allocation16 + $0x30] sm:$0xff]
    %v1226 = vld [vmem:[#allocation16 + $0x38] sm:$0xff]
    %v1227 = vld [vmem:[#allocation16 + $0x40] sm:$0xff]
    %v1228 = vld [vmem:[#allocation16 + $0x48] sm:$0xff]
    %v1229 = vld [vmem:[#allocation16 + $0x50] sm:$0xff]
    %v1230 = vld [vmem:[#allocation16 + $0x58] sm:$0xff]
    %v1231 = vld [vmem:[#allocation16 + $0x60] sm:$0xff]
    %v1232 = vld [vmem:[#allocation16 + $0x68] sm:$0xff]
    %v1233 = vld [vmem:[#allocation16 + $0x70] sm:$0xff]
    %v1234 = vld [vmem:[#allocation16 + $0x78] sm:$0xff]
    %v1235 = vld [vmem:[#allocation17] sm:$0xf]
    %v1236 = vld [vmem:[#allocation19] sm:$0x1]
    %v1237 = vld [vmem:[#allocation20] sm:$0x1]
    %v1238 = vld [vmem:[#allocation22] sm:$0x1]
    %v1239 = vld [vmem:[#allocation23] sm:$0x1]
    %1240 = vmatprep.subr.mxu0 0.0
    %1241 = vmatpush1.msra.mxu0 %v1219
    %1242 = vmatprep.subr.mxu0 0.0
    %1243 = vmatpush1.msra.mxu0 %v1220
    %1244 = vmatprep.subr.mxu0 0.0
    %1245 = vmatpush1.msra.mxu0 %v1221
    %1246 = vmatprep.subr.mxu0 0.0
    %1247 = vmatpush1.msra.mxu0 %v1222
    %1248 = vmatprep.subr.mxu0 0.0
    %1249 = vmatpush1.msra.mxu0 %v1223
    %1250 = vmatprep.subr.mxu0 0.0
    %1251 = vmatpush1.msra.mxu0 %v1224
    %1252 = vmatprep.subr.mxu0 0.0
    %1253 = vmatpush1.msra.mxu0 %v1225
    %1254 = vmatprep.subr.mxu0 0.0
    %1255 = vmatpush1.msra.mxu0 %v1226
    %1256 = vmatprep.subr.mxu0 0.0
    %1257 = vmatpush1.msra.mxu0 %v1227
    %1258 = vmatprep.subr.mxu0 0.0
    %1259 = vmatpush1.msra.mxu0 %v1228
    %1260 = vmatprep.subr.mxu0 0.0
    %1261 = vmatpush1.msra.mxu0 %v1229
    %1262 = vmatprep.subr.mxu0 0.0
    %1263 = vmatpush1.msra.mxu0 %v1230
    %1264 = vmatprep.subr.mxu0 0.0
    %1265 = vmatpush1.msra.mxu0 %v1231
    %1266 = vmatprep.subr.mxu0 0.0
    %1267 = vmatpush1.msra.mxu0 %v1232
    %1268 = vmatprep.subr.mxu0 0.0
    %1269 = vmatpush1.msra.mxu0 %v1233
    %1270 = vmatprep.subr.mxu0 0.0
    %1271 = vmatpush1.msra.mxu0 %v1234
    %1272 = vmatprep.subr.mxu0 0.0
    %1273 = vmatpush1.msra.mxu0 0.0
    %1274 = vmatprep.subr.mxu0 0.0
    %1275 = vmatpush1.msra.mxu0 0.0
    %1276 = vmatprep.subr.mxu0 0.0
    %1277 = vmatpush1.msra.mxu0 0.0
    %1278 = vmatprep.subr.mxu0 0.0
    %1279 = vmatpush1.msra.mxu0 0.0
    %1280 = vmatprep.subr.mxu0 0.0
    %1281 = vmatpush1.msra.mxu0 0.0
    %1282 = vmatprep.subr.mxu0 0.0
    %1283 = vmatpush1.msra.mxu0 0.0
    %1284 = vmatprep.subr.mxu0 0.0
    %1285 = vmatpush1.msra.mxu0 0.0
    %1286 = vmatprep.subr.mxu0 0.0
    %1287 = vmatpush1.msra.mxu0 0.0
    %1288 = vmatprep.subr.mxu0 0.0
    %1289 = vmatpush1.msra.mxu0 0.0
    %1290 = vmatprep.subr.mxu0 0.0
    %1291 = vmatpush1.msra.mxu0 0.0
    %1292 = vmatprep.subr.mxu0 0.0
    %1293 = vmatpush1.msra.mxu0 0.0
    %1294 = vmatprep.subr.mxu0 0.0
    %1295 = vmatpush1.msra.mxu0 0.0
    %1296 = vmatprep.subr.mxu0 0.0
    %1297 = vmatpush1.msra.mxu0 0.0
    %1298 = vmatprep.subr.mxu0 0.0
    %1299 = vmatpush1.msra.mxu0 0.0
    %1300 = vmatprep.subr.mxu0 0.0
    %1301 = vmatpush1.msra.mxu0 0.0
    %1302 = vmatprep.subr.mxu0 0.0
    %1303 = vmatpush1.msra.mxu0 0.0
    %1304 = vmatprep.mubr.f32.mxu0 0.0
    %1305 = vmatmul.mubr.f32.gmra.mrb[0].mxu0 %v1215
    %v1306 = vpop.f32.mrb[0].mxu0
    %v1307 = vadd.f32 0.0, %v1306
    %v1308 = vpop.f32.mrb[0].mxu0
    %1309 = vmatprep.mubr.f32.mxu0 0.0
    %1310 = vmatmul.mubr.f32.gmra.mrb[0].mxu0 %v1216
    %v1311 = vpop.f32.mrb[0].mxu0
    %v1312 = vadd.f32 0.0, %v1311
    %v1313 = vpop.f32.mrb[0].mxu0
    %1314 = vmatprep.mubr.f32.mxu0 0.0
    %1315 = vmatmul.mubr.f32.gmra.mrb[0].mxu0 %v1217
    %v1316 = vpop.f32.mrb[0].mxu0
    %v1317 = vadd.f32 0.0, %v1316
    %v1318 = vpop.f32.mrb[0].mxu0
    %1319 = vmatprep.mubr.f32.mxu0 0.0
    %1320 = vmatmul.mubr.f32.gmra.mrb[0].mxu0 %v1218
    %v1321 = vpop.f32.mrb[0].mxu0
    %v1322 = vadd.f32 0.0, %v1321
    %v1323 = vpop.f32.mrb[0].mxu0
    %1324 = vdwg.mxu0
    %1325 = vmatprep.subr.mxu0 0.0
    %1326 = vmatpush1.xpose.msra.mxu0 %v1307
    %1327 = vmatprep.subr.mxu0 0.0
    %1328 = vmatpush1.xpose.msra.mxu0 %v1312
    %1329 = vmatprep.subr.mxu0 0.0
    %1330 = vmatpush1.xpose.msra.mxu0 %v1317
    %1331 = vmatprep.subr.mxu0 0.0
    %1332 = vmatpush1.xpose.msra.mxu0 %v1322
    %1333 = vmatprep.subr.mxu0 0.0
    %1334 = vmatpush1.xpose.msra.mxu0 0.0
    %1335 = vmatprep.subr.mxu0 0.0
    %1336 = vmatpush1.xpose.msra.mxu0 0.0
    %1337 = vmatprep.subr.mxu0 0.0
    %1338 = vmatpush1.xpose.msra.mxu0 0.0
    %1339 = vmatprep.subr.mxu0 0.0
    %1340 = vmatpush1.xpose.msra.mxu0 0.0
    %1341 = vmatprep.subr.mxu0 0.0
    %1342 = vmatpush1.xpose.msra.mxu0 0.0
    %1343 = vmatprep.subr.mxu0 0.0
    %1344 = vmatpush1.xpose.msra.mxu0 0.0
    %1345 = vmatprep.subr.mxu0 0.0
    %1346 = vmatpush1.xpose.msra.mxu0 0.0
    %1347 = vmatprep.subr.mxu0 0.0
    %1348 = vmatpush1.xpose.msra.mxu0 0.0
    %1349 = vmatprep.subr.mxu0 0.0
    %1350 = vmatpush1.xpose.msra.mxu0 0.0
    %1351 = vmatprep.subr.mxu0 0.0
    %1352 = vmatpush1.xpose.msra.mxu0 0.0
    %1353 = vmatprep.subr.mxu0 0.0
    %1354 = vmatpush1.xpose.msra.mxu0 0.0
    %1355 = vmatprep.subr.mxu0 0.0
    %1356 = vmatpush1.xpose.msra.mxu0 0.0
    %1357 = vmatprep.subr.mxu0 0.0
    %1358 = vmatpush1.xpose.msra.mxu0 0.0
    %1359 = vmatprep.subr.mxu0 0.0
    %1360 = vmatpush1.xpose.msra.mxu0 0.0
    %1361 = vmatprep.subr.mxu0 0.0
    %1362 = vmatpush1.xpose.msra.mxu0 0.0
    %1363 = vmatprep.subr.mxu0 0.0
    %1364 = vmatpush1.xpose.msra.mxu0 0.0
    %1365 = vmatprep.subr.mxu0 0.0
    %1366 = vmatpush1.xpose.msra.mxu0 0.0
    %1367 = vmatprep.subr.mxu0 0.0
    %1368 = vmatpush1.xpose.msra.mxu0 0.0
    %1369 = vmatprep.subr.mxu0 0.0
    %1370 = vmatpush1.xpose.msra.mxu0 0.0
    %1371 = vmatprep.subr.mxu0 0.0
    %1372 = vmatpush1.xpose.msra.mxu0 0.0
    %1373 = vmatprep.subr.mxu0 0.0
    %1374 = vmatpush1.xpose.msra.mxu0 0.0
    %1375 = vmatprep.subr.mxu0 0.0
    %1376 = vmatpush1.xpose.msra.mxu0 0.0
    %1377 = vmatprep.subr.mxu0 0.0
    %1378 = vmatpush1.xpose.msra.mxu0 0.0
    %1379 = vmatprep.subr.mxu0 0.0
    %1380 = vmatpush1.xpose.msra.mxu0 0.0
    %1381 = vmatprep.subr.mxu0 0.0
    %1382 = vmatpush1.xpose.msra.mxu0 0.0
    %1383 = vmatprep.subr.mxu0 0.0
    %1384 = vmatpush1.xpose.msra.mxu0 0.0
    %1385 = vmatprep.subr.mxu0 0.0
    %1386 = vmatpush1.xpose.msra.mxu0 0.0
    %1387 = vmatprep.subr.mxu0 0.0
    %1388 = vmatpush1.xpose.msra.mxu0 0.0
    %1389 = vmatprep.mubr.f32.mxu0 0.0
    %1390 = vmatmul.mubr.f32.gmra.mrb[0].mxu0 %v1235
    %v1391 = vpop.f32.mrb[0].mxu0
    %v1392 = vadd.f32 0.0, %v1391
    %v1393 = vpop.f32.mrb[0].mxu0
    %1394 = vdwg.mxu0
    %v1396 = vlaneseq
    %v1397 = vshrl.u32 %v1396, 7
    %v1398 = vsub.s32 0, %v1397
    %v1399 = vrot.slane %v1236, %v1398
    %v1401 = vmul.f32 %v1307, %v1399
    %v1402 = vmul.f32 %v1312, %v1399
    %v1403 = vmul.f32 %v1317, %v1399
    %v1404 = vmul.f32 %v1322, %v1399
    %v1405 = vsel %vm476, %v1401, 0.0
    %1406 = vadd.xlane.f32.xlu0 %v1405
    %v1407 = vpop.xlane.xlu0 %1406
    %v1408 = vsel %vm476, %v1402, 0.0
    %1409 = vadd.xlane.f32.xlu0 %v1408
    %v1410 = vpop.xlane.xlu0 %1409
    %v1411 = vsel %vm476, %v1403, 0.0
    %1412 = vadd.xlane.f32.xlu0 %v1411
    %v1413 = vpop.xlane.xlu0 %1412
    %v1414 = vsel %vm476, %v1404, 0.0
    %1415 = vadd.xlane.f32.xlu0 %v1414
    %v1416 = vpop.xlane.xlu0 %1415
    %v1417 = vlaneseq
    %v1418 = vshrl.u32 %v1417, 7
    %v1419 = vsub.s32 0, %v1418
    %v1420 = vrot.slane %v1392, %v1419
    %v1421 = vadd.f32 %v1407, %v1420
    %v1422 = vadd.f32 %v1410, %v1420
    %v1423 = vadd.f32 %v1413, %v1420
    %v1424 = vadd.f32 %v1416, %v1420
    %vm1425 = vcmp.gt.f32.partialorder %v1421, 0.0
    %vm1426 = vcmp.gt.f32.partialorder %v1422, 0.0
    %vm1427 = vcmp.gt.f32.partialorder %v1423, 0.0
    %vm1428 = vcmp.gt.f32.partialorder %v1424, 0.0
    %v1429 = vmul.f32 %v1421, 0.2
    %v1430 = vmul.f32 %v1422, 0.2
    %v1431 = vmul.f32 %v1423, 0.2
    %v1432 = vmul.f32 %v1424, 0.2
    %v1433 = vsel %vm1425, %v1421, %v1429
    %v1434 = vsel %vm1426, %v1422, %v1430
    %v1435 = vsel %vm1427, %v1423, %v1431
    %v1436 = vsel %vm1428, %v1424, %v1432
    %v1437 = vsel %vm287, %v1433, -1e+30
    %v1438 = vsel %vm288, %v1434, -1e+30
    %v1439 = vsel %vm289, %v1435, -1e+30
    %v1440 = vsel %vm290, %v1436, -1e+30
    %v1441 = vsel %vm476, %v1437, -inf
    %1442 = vmax.xlane.f32.xlu0 %v1441
    %v1443 = vpop.xlane.xlu0 %1442
    %v1444 = vsel %vm476, %v1438, -inf
    %1445 = vmax.xlane.f32.xlu0 %v1444
    %v1446 = vpop.xlane.xlu0 %1445
    %v1447 = vsel %vm476, %v1439, -inf
    %1448 = vmax.xlane.f32.xlu0 %v1447
    %v1449 = vpop.xlane.xlu0 %1448
    %v1450 = vsel %vm476, %v1440, -inf
    %1451 = vmax.xlane.f32.xlu0 %v1450
    %v1452 = vpop.xlane.xlu0 %1451
    %v1453 = vsub.f32 %v1437, %v1443
    %v1454 = vsub.f32 %v1438, %v1446
    %v1455 = vsub.f32 %v1439, %v1449
    %v1456 = vsub.f32 %v1440, %v1452
    %v1457 = vmul.f32 %v1453, 1.442695
    %v1458 = vpow.pop %v1457
    %v1459 = vmul.f32 %v1454, 1.442695
    %v1460 = vpow.pop %v1459
    %v1461 = vmul.f32 %v1455, 1.442695
    %v1462 = vpow.pop %v1461
    %v1463 = vmul.f32 %v1456, 1.442695
    %v1464 = vpow.pop %v1463
    %v1465 = vsel %vm287, %v1458, 0.0
    %v1466 = vsel %vm288, %v1460, 0.0
    %v1467 = vsel %vm289, %v1462, 0.0
    %v1468 = vsel %vm290, %v1464, 0.0
    %v1469 = vsel %vm476, %v1465, 0.0
    %1470 = vadd.xlane.f32.xlu0 %v1469
    %v1471 = vpop.xlane.xlu0 %1470
    %v1472 = vsel %vm476, %v1466, 0.0
    %1473 = vadd.xlane.f32.xlu0 %v1472
    %v1474 = vpop.xlane.xlu0 %1473
    %v1475 = vsel %vm476, %v1467, 0.0
    %1476 = vadd.xlane.f32.xlu0 %v1475
    %v1477 = vpop.xlane.xlu0 %1476
    %v1478 = vsel %vm476, %v1468, 0.0
    %1479 = vadd.xlane.f32.xlu0 %v1478
    %v1480 = vpop.xlane.xlu0 %1479
    %v1481 = vrcp.pop %v1471
    %v1482 = vrcp.pop %v1474
    %v1483 = vrcp.pop %v1477
    %v1484 = vrcp.pop %v1480
    %v1485 = vmul.f32 %v1465, %v1481
    %v1486 = vmul.f32 %v1466, %v1482
    %v1487 = vmul.f32 %v1467, %v1483
    %v1488 = vmul.f32 %v1468, %v1484
    %v1489 = vpack.c.bf16 %v1486, %v1485
    %v1490 = vpack.c.bf16 %v1488, %v1487
    %v1491 = vpack.c.bf16 %v1312, %v1307
    %v1492 = vpack.c.bf16 %v1322, %v1317
    %v1494 = vsel %vm476, %v1489, 0
    %v1497 = vsel %vm476, %v1490, 0
    %1499 = vmatprep.subr.bf16.mxu0 0
    %1500 = vmatpush1.bf16.msra.mxu0 %v1491
    %1501 = vmatprep.subr.bf16.mxu0 0
    %1502 = vmatpush1.bf16.msra.mxu0 %v1492
    %1503 = vmatprep.subr.bf16.mxu0 0
    %1504 = vmatpush1.bf16.msra.mxu0 0
    %1505 = vmatprep.subr.bf16.mxu0 0
    %1506 = vmatpush1.bf16.msra.mxu0 0
    %1507 = vmatprep.subr.bf16.mxu0 0
    %1508 = vmatpush1.bf16.msra.mxu0 0
    %1509 = vmatprep.subr.bf16.mxu0 0
    %1510 = vmatpush1.bf16.msra.mxu0 0
    %1511 = vmatprep.subr.bf16.mxu0 0
    %1512 = vmatpush1.bf16.msra.mxu0 0
    %1513 = vmatprep.subr.bf16.mxu0 0
    %1514 = vmatpush1.bf16.msra.mxu0 0
    %1515 = vmatprep.subr.bf16.mxu0 0
    %1516 = vmatpush1.bf16.msra.mxu0 0
    %1517 = vmatprep.subr.bf16.mxu0 0
    %1518 = vmatpush1.bf16.msra.mxu0 0
    %1519 = vmatprep.subr.bf16.mxu0 0
    %1520 = vmatpush1.bf16.msra.mxu0 0
    %1521 = vmatprep.subr.bf16.mxu0 0
    %1522 = vmatpush1.bf16.msra.mxu0 0
    %1523 = vmatprep.subr.bf16.mxu0 0
    %1524 = vmatpush1.bf16.msra.mxu0 0
    %1525 = vmatprep.subr.bf16.mxu0 0
    %1526 = vmatpush1.bf16.msra.mxu0 0
    %1527 = vmatprep.subr.bf16.mxu0 0
    %1528 = vmatpush1.bf16.msra.mxu0 0
    %1529 = vmatprep.subr.bf16.mxu0 0
    %1530 = vmatpush1.bf16.msra.mxu0 0
    %1531 = vmatprep.mubr.bf16.mxu0 0
    %1532 = vmatmul.mubr.bf16.gmra.mrb[0].mxu0 %v1494
    %v1533 = vpop.f32.mrb[0].mxu0
    %v1534 = vadd.f32 0.0, %v1533
    %v1535 = vpop.f32.mrb[0].mxu0
    %v1536 = vpop.f32.mrb[0].mxu0
    %v1537 = vadd.f32 0.0, %v1536
    %v1538 = vpop.f32.mrb[0].mxu0
    %1539 = vmatprep.mubr.bf16.mxu0 0
    %1540 = vmatmul.mubr.bf16.gmra.mrb[0].mxu0 %v1497
    %v1541 = vpop.f32.mrb[0].mxu0
    %v1542 = vadd.f32 0.0, %v1541
    %v1543 = vpop.f32.mrb[0].mxu0
    %v1544 = vpop.f32.mrb[0].mxu0
    %v1545 = vadd.f32 0.0, %v1544
    %v1546 = vpop.f32.mrb[0].mxu0
    %1547 = vdwg.mxu0
    %1552 = vrot.lane.b32.xlu0 %v1401, 96
    %v1553 = vpop.permute.xlu0 %1552
    %1554 = vrot.lane.b32.xlu0 %v1402, 96
    %v1555 = vpop.permute.xlu0 %1554
    %1556 = vrot.lane.b32.xlu0 %v1403, 96
    %v1557 = vpop.permute.xlu0 %1556
    %1558 = vrot.lane.b32.xlu0 %v1404, 96
    %v1559 = vpop.permute.xlu0 %1558
    %v1564 = vsel %vm476, %v1553, 0.0
    %1565 = vadd.xlane.f32.xlu0 %v1564
    %v1566 = vpop.xlane.xlu0 %1565
    %v1567 = vsel %vm476, %v1555, 0.0
    %1568 = vadd.xlane.f32.xlu0 %v1567
    %v1569 = vpop.xlane.xlu0 %1568
    %v1570 = vsel %vm476, %v1557, 0.0
    %1571 = vadd.xlane.f32.xlu0 %v1570
    %v1572 = vpop.xlane.xlu0 %1571
    %v1573 = vsel %vm476, %v1559, 0.0
    %1574 = vadd.xlane.f32.xlu0 %v1573
    %v1575 = vpop.xlane.xlu0 %1574
    %v1576 = vlaneseq
    %v1577 = vshrl.u32 %v1576, 7
    %v1578 = vsub.s32 1, %v1577
    %v1579 = vrot.slane %v1392, %v1578
    %v1580 = vadd.f32 %v1566, %v1579
    %v1581 = vadd.f32 %v1569, %v1579
    %v1582 = vadd.f32 %v1572, %v1579
    %v1583 = vadd.f32 %v1575, %v1579
    %vm1584 = vcmp.gt.f32.partialorder %v1580, 0.0
    %vm1585 = vcmp.gt.f32.partialorder %v1581, 0.0
    %vm1586 = vcmp.gt.f32.partialorder %v1582, 0.0
    %vm1587 = vcmp.gt.f32.partialorder %v1583, 0.0
    %v1588 = vmul.f32 %v1580, 0.2
    %v1589 = vmul.f32 %v1581, 0.2
    %v1590 = vmul.f32 %v1582, 0.2
    %v1591 = vmul.f32 %v1583, 0.2
    %v1592 = vsel %vm1584, %v1580, %v1588
    %v1593 = vsel %vm1585, %v1581, %v1589
    %v1594 = vsel %vm1586, %v1582, %v1590
    %v1595 = vsel %vm1587, %v1583, %v1591
    %v1596 = vsel %vm287, %v1592, -1e+30
    %v1597 = vsel %vm288, %v1593, -1e+30
    %v1598 = vsel %vm289, %v1594, -1e+30
    %v1599 = vsel %vm290, %v1595, -1e+30
    %v1600 = vsel %vm476, %v1596, -inf
    %1601 = vmax.xlane.f32.xlu0 %v1600
    %v1602 = vpop.xlane.xlu0 %1601
    %v1603 = vsel %vm476, %v1597, -inf
    %1604 = vmax.xlane.f32.xlu0 %v1603
    %v1605 = vpop.xlane.xlu0 %1604
    %v1606 = vsel %vm476, %v1598, -inf
    %1607 = vmax.xlane.f32.xlu0 %v1606
    %v1608 = vpop.xlane.xlu0 %1607
    %v1609 = vsel %vm476, %v1599, -inf
    %1610 = vmax.xlane.f32.xlu0 %v1609
    %v1611 = vpop.xlane.xlu0 %1610
    %v1612 = vsub.f32 %v1596, %v1602
    %v1613 = vsub.f32 %v1597, %v1605
    %v1614 = vsub.f32 %v1598, %v1608
    %v1615 = vsub.f32 %v1599, %v1611
    %v1616 = vmul.f32 %v1612, 1.442695
    %v1617 = vpow.pop %v1616
    %v1618 = vmul.f32 %v1613, 1.442695
    %v1619 = vpow.pop %v1618
    %v1620 = vmul.f32 %v1614, 1.442695
    %v1621 = vpow.pop %v1620
    %v1622 = vmul.f32 %v1615, 1.442695
    %v1623 = vpow.pop %v1622
    %v1624 = vsel %vm287, %v1617, 0.0
    %v1625 = vsel %vm288, %v1619, 0.0
    %v1626 = vsel %vm289, %v1621, 0.0
    %v1627 = vsel %vm290, %v1623, 0.0
    %v1628 = vsel %vm476, %v1624, 0.0
    %1629 = vadd.xlane.f32.xlu0 %v1628
    %v1630 = vpop.xlane.xlu0 %1629
    %v1631 = vsel %vm476, %v1625, 0.0
    %1632 = vadd.xlane.f32.xlu0 %v1631
    %v1633 = vpop.xlane.xlu0 %1632
    %v1634 = vsel %vm476, %v1626, 0.0
    %1635 = vadd.xlane.f32.xlu0 %v1634
    %v1636 = vpop.xlane.xlu0 %1635
    %v1637 = vsel %vm476, %v1627, 0.0
    %1638 = vadd.xlane.f32.xlu0 %v1637
    %v1639 = vpop.xlane.xlu0 %1638
    %v1640 = vrcp.pop %v1630
    %v1641 = vrcp.pop %v1633
    %v1642 = vrcp.pop %v1636
    %v1643 = vrcp.pop %v1639
    %v1644 = vmul.f32 %v1624, %v1640
    %v1645 = vmul.f32 %v1625, %v1641
    %v1646 = vmul.f32 %v1626, %v1642
    %v1647 = vmul.f32 %v1627, %v1643
    %v1648 = vpack.c.bf16 %v1645, %v1644
    %v1649 = vpack.c.bf16 %v1647, %v1646
    %1652 = vrot.lane.b32.xlu0 %v1491, 96
    %v1653 = vpop.permute.xlu0 %1652
    %1654 = vrot.lane.b32.xlu0 %v1492, 96
    %v1655 = vpop.permute.xlu0 %1654
    %v1659 = vsel %vm476, %v1648, 0
    %v1662 = vsel %vm476, %v1649, 0
    %1664 = vmatprep.subr.bf16.mxu0 0
    %1665 = vmatpush1.bf16.msra.mxu0 %v1653
    %1666 = vmatprep.subr.bf16.mxu0 0
    %1667 = vmatpush1.bf16.msra.mxu0 %v1655
    %1668 = vmatprep.subr.bf16.mxu0 0
    %1669 = vmatpush1.bf16.msra.mxu0 0
    %1670 = vmatprep.subr.bf16.mxu0 0
    %1671 = vmatpush1.bf16.msra.mxu0 0
    %1672 = vmatprep.subr.bf16.mxu0 0
    %1673 = vmatpush1.bf16.msra.mxu0 0
    %1674 = vmatprep.subr.bf16.mxu0 0
    %1675 = vmatpush1.bf16.msra.mxu0 0
    %1676 = vmatprep.subr.bf16.mxu0 0
    %1677 = vmatpush1.bf16.msra.mxu0 0
    %1678 = vmatprep.subr.bf16.mxu0 0
    %1679 = vmatpush1.bf16.msra.mxu0 0
    %1680 = vmatprep.subr.bf16.mxu0 0
    %1681 = vmatpush1.bf16.msra.mxu0 0
    %1682 = vmatprep.subr.bf16.mxu0 0
    %1683 = vmatpush1.bf16.msra.mxu0 0
    %1684 = vmatprep.subr.bf16.mxu0 0
    %1685 = vmatpush1.bf16.msra.mxu0 0
    %1686 = vmatprep.subr.bf16.mxu0 0
    %1687 = vmatpush1.bf16.msra.mxu0 0
    %1688 = vmatprep.subr.bf16.mxu0 0
    %1689 = vmatpush1.bf16.msra.mxu0 0
    %1690 = vmatprep.subr.bf16.mxu0 0
    %1691 = vmatpush1.bf16.msra.mxu0 0
    %1692 = vmatprep.subr.bf16.mxu0 0
    %1693 = vmatpush1.bf16.msra.mxu0 0
    %1694 = vmatprep.subr.bf16.mxu0 0
    %1695 = vmatpush1.bf16.msra.mxu0 0
    %1696 = vmatprep.mubr.bf16.mxu0 0
    %1697 = vmatmul.mubr.bf16.gmra.mrb[0].mxu0 %v1659
    %v1698 = vpop.f32.mrb[0].mxu0
    %v1699 = vadd.f32 0.0, %v1698
    %v1700 = vpop.f32.mrb[0].mxu0
    %v1701 = vpop.f32.mrb[0].mxu0
    %v1702 = vadd.f32 0.0, %v1701
    %v1703 = vpop.f32.mrb[0].mxu0
    %1704 = vmatprep.mubr.bf16.mxu0 0
    %1705 = vmatmul.mubr.bf16.gmra.mrb[0].mxu0 %v1662
    %v1706 = vpop.f32.mrb[0].mxu0
    %v1707 = vadd.f32 0.0, %v1706
    %v1708 = vpop.f32.mrb[0].mxu0
    %v1709 = vpop.f32.mrb[0].mxu0
    %v1710 = vadd.f32 0.0, %v1709
    %v1711 = vpop.f32.mrb[0].mxu0
    %1712 = vdwg.mxu0
    %1713 = vrot.lane.b32.xlu0 %v1401, 64
    %v1714 = vpop.permute.xlu0 %1713
    %1715 = vrot.lane.b32.xlu0 %v1402, 64
    %v1716 = vpop.permute.xlu0 %1715
    %1717 = vrot.lane.b32.xlu0 %v1403, 64
    %v1718 = vpop.permute.xlu0 %1717
    %1719 = vrot.lane.b32.xlu0 %v1404, 64
    %v1720 = vpop.permute.xlu0 %1719
    %v1725 = vsel %vm476, %v1714, 0.0
    %1726 = vadd.xlane.f32.xlu0 %v1725
    %v1727 = vpop.xlane.xlu0 %1726
    %v1728 = vsel %vm476, %v1716, 0.0
    %1729 = vadd.xlane.f32.xlu0 %v1728
    %v1730 = vpop.xlane.xlu0 %1729
    %v1731 = vsel %vm476, %v1718, 0.0
    %1732 = vadd.xlane.f32.xlu0 %v1731
    %v1733 = vpop.xlane.xlu0 %1732
    %v1734 = vsel %vm476, %v1720, 0.0
    %1735 = vadd.xlane.f32.xlu0 %v1734
    %v1736 = vpop.xlane.xlu0 %1735
    %v1737 = vlaneseq
    %v1738 = vshrl.u32 %v1737, 7
    %v1739 = vsub.s32 2, %v1738
    %v1740 = vrot.slane %v1392, %v1739
    %v1741 = vadd.f32 %v1727, %v1740
    %v1742 = vadd.f32 %v1730, %v1740
    %v1743 = vadd.f32 %v1733, %v1740
    %v1744 = vadd.f32 %v1736, %v1740
    %vm1745 = vcmp.gt.f32.partialorder %v1741, 0.0
    %vm1746 = vcmp.gt.f32.partialorder %v1742, 0.0
    %vm1747 = vcmp.gt.f32.partialorder %v1743, 0.0
    %vm1748 = vcmp.gt.f32.partialorder %v1744, 0.0
    %v1749 = vmul.f32 %v1741, 0.2
    %v1750 = vmul.f32 %v1742, 0.2
    %v1751 = vmul.f32 %v1743, 0.2
    %v1752 = vmul.f32 %v1744, 0.2
    %v1753 = vsel %vm1745, %v1741, %v1749
    %v1754 = vsel %vm1746, %v1742, %v1750
    %v1755 = vsel %vm1747, %v1743, %v1751
    %v1756 = vsel %vm1748, %v1744, %v1752
    %v1757 = vsel %vm287, %v1753, -1e+30
    %v1758 = vsel %vm288, %v1754, -1e+30
    %v1759 = vsel %vm289, %v1755, -1e+30
    %v1760 = vsel %vm290, %v1756, -1e+30
    %v1761 = vsel %vm476, %v1757, -inf
    %1762 = vmax.xlane.f32.xlu0 %v1761
    %v1763 = vpop.xlane.xlu0 %1762
    %v1764 = vsel %vm476, %v1758, -inf
    %1765 = vmax.xlane.f32.xlu0 %v1764
    %v1766 = vpop.xlane.xlu0 %1765
    %v1767 = vsel %vm476, %v1759, -inf
    %1768 = vmax.xlane.f32.xlu0 %v1767
    %v1769 = vpop.xlane.xlu0 %1768
    %v1770 = vsel %vm476, %v1760, -inf
    %1771 = vmax.xlane.f32.xlu0 %v1770
    %v1772 = vpop.xlane.xlu0 %1771
    %v1773 = vsub.f32 %v1757, %v1763
    %v1774 = vsub.f32 %v1758, %v1766
    %v1775 = vsub.f32 %v1759, %v1769
    %v1776 = vsub.f32 %v1760, %v1772
    %v1777 = vmul.f32 %v1773, 1.442695
    %v1778 = vpow.pop %v1777
    %v1779 = vmul.f32 %v1774, 1.442695
    %v1780 = vpow.pop %v1779
    %v1781 = vmul.f32 %v1775, 1.442695
    %v1782 = vpow.pop %v1781
    %v1783 = vmul.f32 %v1776, 1.442695
    %v1784 = vpow.pop %v1783
    %v1785 = vsel %vm287, %v1778, 0.0
    %v1786 = vsel %vm288, %v1780, 0.0
    %v1787 = vsel %vm289, %v1782, 0.0
    %v1788 = vsel %vm290, %v1784, 0.0
    %v1789 = vsel %vm476, %v1785, 0.0
    %1790 = vadd.xlane.f32.xlu0 %v1789
    %v1791 = vpop.xlane.xlu0 %1790
    %v1792 = vsel %vm476, %v1786, 0.0
    %1793 = vadd.xlane.f32.xlu0 %v1792
    %v1794 = vpop.xlane.xlu0 %1793
    %v1795 = vsel %vm476, %v1787, 0.0
    %1796 = vadd.xlane.f32.xlu0 %v1795
    %v1797 = vpop.xlane.xlu0 %1796
    %v1798 = vsel %vm476, %v1788, 0.0
    %1799 = vadd.xlane.f32.xlu0 %v1798
    %v1800 = vpop.xlane.xlu0 %1799
    %v1801 = vrcp.pop %v1791
    %v1802 = vrcp.pop %v1794
    %v1803 = vrcp.pop %v1797
    %v1804 = vrcp.pop %v1800
    %v1805 = vmul.f32 %v1785, %v1801
    %v1806 = vmul.f32 %v1786, %v1802
    %v1807 = vmul.f32 %v1787, %v1803
    %v1808 = vmul.f32 %v1788, %v1804
    %v1809 = vpack.c.bf16 %v1806, %v1805
    %v1810 = vpack.c.bf16 %v1808, %v1807
    %1811 = vrot.lane.b32.xlu0 %v1491, 64
    %v1812 = vpop.permute.xlu0 %1811
    %1813 = vrot.lane.b32.xlu0 %v1492, 64
    %v1814 = vpop.permute.xlu0 %1813
    %v1818 = vsel %vm476, %v1809, 0
    %v1821 = vsel %vm476, %v1810, 0
    %1823 = vmatprep.subr.bf16.mxu0 0
    %1824 = vmatpush1.bf16.msra.mxu0 %v1812
    %1825 = vmatprep.subr.bf16.mxu0 0
    %1826 = vmatpush1.bf16.msra.mxu0 %v1814
    %1827 = vmatprep.subr.bf16.mxu0 0
    %1828 = vmatpush1.bf16.msra.mxu0 0
    %1829 = vmatprep.subr.bf16.mxu0 0
    %1830 = vmatpush1.bf16.msra.mxu0 0
    %1831 = vmatprep.subr.bf16.mxu0 0
    %1832 = vmatpush1.bf16.msra.mxu0 0
    %1833 = vmatprep.subr.bf16.mxu0 0
    %1834 = vmatpush1.bf16.msra.mxu0 0
    %1835 = vmatprep.subr.bf16.mxu0 0
    %1836 = vmatpush1.bf16.msra.mxu0 0
    %1837 = vmatprep.subr.bf16.mxu0 0
    %1838 = vmatpush1.bf16.msra.mxu0 0
    %1839 = vmatprep.subr.bf16.mxu0 0
    %1840 = vmatpush1.bf16.msra.mxu0 0
    %1841 = vmatprep.subr.bf16.mxu0 0
    %1842 = vmatpush1.bf16.msra.mxu0 0
    %1843 = vmatprep.subr.bf16.mxu0 0
    %1844 = vmatpush1.bf16.msra.mxu0 0
    %1845 = vmatprep.subr.bf16.mxu0 0
    %1846 = vmatpush1.bf16.msra.mxu0 0
    %1847 = vmatprep.subr.bf16.mxu0 0
    %1848 = vmatpush1.bf16.msra.mxu0 0
    %1849 = vmatprep.subr.bf16.mxu0 0
    %1850 = vmatpush1.bf16.msra.mxu0 0
    %1851 = vmatprep.subr.bf16.mxu0 0
    %1852 = vmatpush1.bf16.msra.mxu0 0
    %1853 = vmatprep.subr.bf16.mxu0 0
    %1854 = vmatpush1.bf16.msra.mxu0 0
    %1855 = vmatprep.mubr.bf16.mxu0 0
    %1856 = vmatmul.mubr.bf16.gmra.mrb[0].mxu0 %v1818
    %v1857 = vpop.f32.mrb[0].mxu0
    %v1858 = vadd.f32 0.0, %v1857
    %v1859 = vpop.f32.mrb[0].mxu0
    %v1860 = vpop.f32.mrb[0].mxu0
    %v1861 = vadd.f32 0.0, %v1860
    %v1862 = vpop.f32.mrb[0].mxu0
    %1863 = vmatprep.mubr.bf16.mxu0 0
    %1864 = vmatmul.mubr.bf16.gmra.mrb[0].mxu0 %v1821
    %v1865 = vpop.f32.mrb[0].mxu0
    %v1866 = vadd.f32 0.0, %v1865
    %v1867 = vpop.f32.mrb[0].mxu0
    %v1868 = vpop.f32.mrb[0].mxu0
    %v1869 = vadd.f32 0.0, %v1868
    %v1870 = vpop.f32.mrb[0].mxu0
    %1871 = vdwg.mxu0
    %1872 = vrot.lane.b32.xlu0 %v1401, 32
    %v1873 = vpop.permute.xlu0 %1872
    %1874 = vrot.lane.b32.xlu0 %v1402, 32
    %v1875 = vpop.permute.xlu0 %1874
    %1876 = vrot.lane.b32.xlu0 %v1403, 32
    %v1877 = vpop.permute.xlu0 %1876
    %1878 = vrot.lane.b32.xlu0 %v1404, 32
    %v1879 = vpop.permute.xlu0 %1878
    %v1884 = vsel %vm476, %v1873, 0.0
    %1885 = vadd.xlane.f32.xlu0 %v1884
    %v1886 = vpop.xlane.xlu0 %1885
    %v1887 = vsel %vm476, %v1875, 0.0
    %1888 = vadd.xlane.f32.xlu0 %v1887
    %v1889 = vpop.xlane.xlu0 %1888
    %v1890 = vsel %vm476, %v1877, 0.0
    %1891 = vadd.xlane.f32.xlu0 %v1890
    %v1892 = vpop.xlane.xlu0 %1891
    %v1893 = vsel %vm476, %v1879, 0.0
    %1894 = vadd.xlane.f32.xlu0 %v1893
    %v1895 = vpop.xlane.xlu0 %1894
    %v1896 = vlaneseq
    %v1897 = vshrl.u32 %v1896, 7
    %v1898 = vsub.s32 3, %v1897
    %v1899 = vrot.slane %v1392, %v1898
    %v1900 = vadd.f32 %v1886, %v1899
    %v1901 = vadd.f32 %v1889, %v1899
    %v1902 = vadd.f32 %v1892, %v1899
    %v1903 = vadd.f32 %v1895, %v1899
    %vm1904 = vcmp.gt.f32.partialorder %v1900, 0.0
    %vm1905 = vcmp.gt.f32.partialorder %v1901, 0.0
    %vm1906 = vcmp.gt.f32.partialorder %v1902, 0.0
    %vm1907 = vcmp.gt.f32.partialorder %v1903, 0.0
    %v1908 = vmul.f32 %v1900, 0.2
    %v1909 = vmul.f32 %v1901, 0.2
    %v1910 = vmul.f32 %v1902, 0.2
    %v1911 = vmul.f32 %v1903, 0.2
    %v1912 = vsel %vm1904, %v1900, %v1908
    %v1913 = vsel %vm1905, %v1901, %v1909
    %v1914 = vsel %vm1906, %v1902, %v1910
    %v1915 = vsel %vm1907, %v1903, %v1911
    %v1916 = vsel %vm287, %v1912, -1e+30
    %v1917 = vsel %vm288, %v1913, -1e+30
    %v1918 = vsel %vm289, %v1914, -1e+30
    %v1919 = vsel %vm290, %v1915, -1e+30
    %v1920 = vsel %vm476, %v1916, -inf
    %1921 = vmax.xlane.f32.xlu0 %v1920
    %v1922 = vpop.xlane.xlu0 %1921
    %v1923 = vsel %vm476, %v1917, -inf
    %1924 = vmax.xlane.f32.xlu0 %v1923
    %v1925 = vpop.xlane.xlu0 %1924
    %v1926 = vsel %vm476, %v1918, -inf
    %1927 = vmax.xlane.f32.xlu0 %v1926
    %v1928 = vpop.xlane.xlu0 %1927
    %v1929 = vsel %vm476, %v1919, -inf
    %1930 = vmax.xlane.f32.xlu0 %v1929
    %v1931 = vpop.xlane.xlu0 %1930
    %v1932 = vsub.f32 %v1916, %v1922
    %v1933 = vsub.f32 %v1917, %v1925
    %v1934 = vsub.f32 %v1918, %v1928
    %v1935 = vsub.f32 %v1919, %v1931
    %v1936 = vmul.f32 %v1932, 1.442695
    %v1937 = vpow.pop %v1936
    %v1938 = vmul.f32 %v1933, 1.442695
    %v1939 = vpow.pop %v1938
    %v1940 = vmul.f32 %v1934, 1.442695
    %v1941 = vpow.pop %v1940
    %v1942 = vmul.f32 %v1935, 1.442695
    %v1943 = vpow.pop %v1942
    %v1944 = vsel %vm287, %v1937, 0.0
    %v1945 = vsel %vm288, %v1939, 0.0
    %v1946 = vsel %vm289, %v1941, 0.0
    %v1947 = vsel %vm290, %v1943, 0.0
    %v1948 = vsel %vm476, %v1944, 0.0
    %1949 = vadd.xlane.f32.xlu0 %v1948
    %v1950 = vpop.xlane.xlu0 %1949
    %v1951 = vsel %vm476, %v1945, 0.0
    %1952 = vadd.xlane.f32.xlu0 %v1951
    %v1953 = vpop.xlane.xlu0 %1952
    %v1954 = vsel %vm476, %v1946, 0.0
    %1955 = vadd.xlane.f32.xlu0 %v1954
    %v1956 = vpop.xlane.xlu0 %1955
    %v1957 = vsel %vm476, %v1947, 0.0
    %1958 = vadd.xlane.f32.xlu0 %v1957
    %v1959 = vpop.xlane.xlu0 %1958
    %v1960 = vrcp.pop %v1950
    %v1961 = vrcp.pop %v1953
    %v1962 = vrcp.pop %v1956
    %v1963 = vrcp.pop %v1959
    %v1964 = vmul.f32 %v1944, %v1960
    %v1965 = vmul.f32 %v1945, %v1961
    %v1966 = vmul.f32 %v1946, %v1962
    %v1967 = vmul.f32 %v1947, %v1963
    %v1968 = vpack.c.bf16 %v1965, %v1964
    %v1969 = vpack.c.bf16 %v1967, %v1966
    %1970 = vrot.lane.b32.xlu0 %v1491, 32
    %v1971 = vpop.permute.xlu0 %1970
    %1972 = vrot.lane.b32.xlu0 %v1492, 32
    %v1973 = vpop.permute.xlu0 %1972
    %v1977 = vsel %vm476, %v1968, 0
    %v1980 = vsel %vm476, %v1969, 0
    %1982 = vmatprep.subr.bf16.mxu0 0
    %1983 = vmatpush1.bf16.msra.mxu0 %v1971
    %1984 = vmatprep.subr.bf16.mxu0 0
    %1985 = vmatpush1.bf16.msra.mxu0 %v1973
    %1986 = vmatprep.subr.bf16.mxu0 0
    %1987 = vmatpush1.bf16.msra.mxu0 0
    %1988 = vmatprep.subr.bf16.mxu0 0
    %1989 = vmatpush1.bf16.msra.mxu0 0
    %1990 = vmatprep.subr.bf16.mxu0 0
    %1991 = vmatpush1.bf16.msra.mxu0 0
    %1992 = vmatprep.subr.bf16.mxu0 0
    %1993 = vmatpush1.bf16.msra.mxu0 0
    %1994 = vmatprep.subr.bf16.mxu0 0
    %1995 = vmatpush1.bf16.msra.mxu0 0
    %1996 = vmatprep.subr.bf16.mxu0 0
    %1997 = vmatpush1.bf16.msra.mxu0 0
    %1998 = vmatprep.subr.bf16.mxu0 0
    %1999 = vmatpush1.bf16.msra.mxu0 0
    %2000 = vmatprep.subr.bf16.mxu0 0
    %2001 = vmatpush1.bf16.msra.mxu0 0
    %2002 = vmatprep.subr.bf16.mxu0 0
    %2003 = vmatpush1.bf16.msra.mxu0 0
    %2004 = vmatprep.subr.bf16.mxu0 0
    %2005 = vmatpush1.bf16.msra.mxu0 0
    %2006 = vmatprep.subr.bf16.mxu0 0
    %2007 = vmatpush1.bf16.msra.mxu0 0
    %2008 = vmatprep.subr.bf16.mxu0 0
    %2009 = vmatpush1.bf16.msra.mxu0 0
    %2010 = vmatprep.subr.bf16.mxu0 0
    %2011 = vmatpush1.bf16.msra.mxu0 0
    %2012 = vmatprep.subr.bf16.mxu0 0
    %2013 = vmatpush1.bf16.msra.mxu0 0
    %2014 = vmatprep.mubr.bf16.mxu0 0
    %2015 = vmatmul.mubr.bf16.gmra.mrb[0].mxu0 %v1977
    %v2016 = vpop.f32.mrb[0].mxu0
    %v2017 = vadd.f32 0.0, %v2016
    %v2018 = vpop.f32.mrb[0].mxu0
    %v2019 = vpop.f32.mrb[0].mxu0
    %v2020 = vadd.f32 0.0, %v2019
    %v2021 = vpop.f32.mrb[0].mxu0
    %2022 = vmatprep.mubr.bf16.mxu0 0
    %2023 = vmatmul.mubr.bf16.gmra.mrb[0].mxu0 %v1980
    %v2024 = vpop.f32.mrb[0].mxu0
    %v2025 = vadd.f32 0.0, %v2024
    %v2026 = vpop.f32.mrb[0].mxu0
    %v2027 = vpop.f32.mrb[0].mxu0
    %v2028 = vadd.f32 0.0, %v2027
    %v2029 = vpop.f32.mrb[0].mxu0
    %2030 = vdwg.mxu0
    %2035 = vrot.lane.b32.xlu0 %v1699, 32
    %v2036 = vpop.permute.xlu0 %2035
    %2037 = vrot.lane.b32.xlu0 %v1702, 32
    %v2038 = vpop.permute.xlu0 %2037
    %2039 = vrot.lane.b32.xlu0 %v1707, 32
    %v2040 = vpop.permute.xlu0 %2039
    %2041 = vrot.lane.b32.xlu0 %v1710, 32
    %v2042 = vpop.permute.xlu0 %2041
    %2051 = vrot.lane.b32.xlu0 %v1858, 64
    %v2052 = vpop.permute.xlu0 %2051
    %2053 = vrot.lane.b32.xlu0 %v1861, 64
    %v2054 = vpop.permute.xlu0 %2053
    %2055 = vrot.lane.b32.xlu0 %v1866, 64
    %v2056 = vpop.permute.xlu0 %2055
    %2057 = vrot.lane.b32.xlu0 %v1869, 64
    %v2058 = vpop.permute.xlu0 %2057
    %2067 = vrot.lane.b32.xlu0 %v2017, 96
    %v2068 = vpop.permute.xlu0 %2067
    %2069 = vrot.lane.b32.xlu0 %v2020, 96
    %v2070 = vpop.permute.xlu0 %2069
    %2071 = vrot.lane.b32.xlu0 %v2025, 96
    %v2072 = vpop.permute.xlu0 %2071
    %2073 = vrot.lane.b32.xlu0 %v2028, 96
    %v2074 = vpop.permute.xlu0 %2073
    %v2079 = vsel %vm476, %v1534, %v2036
    %v2080 = vsel %vm476, %v1537, %v2038
    %v2081 = vsel %vm476, %v1542, %v2040
    %v2082 = vsel %vm476, %v1545, %v2042
    %v2083 = vsel %vm1155, %v2079, %v2052
    %v2084 = vsel %vm1155, %v2080, %v2054
    %v2085 = vsel %vm1155, %v2081, %v2056
    %v2086 = vsel %vm1155, %v2082, %v2058
    %v2087 = vsel %vm1160, %v2083, %v2068
    %v2088 = vsel %vm1160, %v2084, %v2070
    %v2089 = vsel %vm1160, %v2085, %v2072
    %v2090 = vsel %vm1160, %v2086, %v2074
    %v2092 = vlaneseq
    %v2093 = vshrl.u32 %v2092, 7
    %v2094 = vsub.s32 0, %v2093
    %v2095 = vrot.slane %v1237, %v2094
    %v2097 = vadd.f32 %v2087, %v2095
    %v2098 = vadd.f32 %v2088, %v2095
    %v2099 = vadd.f32 %v2089, %v2095
    %v2100 = vadd.f32 %v2090, %v2095
    %v2102 = vlaneseq
    %v2103 = vshrl.u32 %v2102, 7
    %v2104 = vsub.s32 0, %v2103
    %v2105 = vrot.slane %v1238, %v2104
    %v2107 = vmul.f32 %v2097, %v2105
    %v2108 = vmul.f32 %v2098, %v2105
    %v2109 = vmul.f32 %v2099, %v2105
    %v2110 = vmul.f32 %v2100, %v2105
    %v2112 = vlaneseq
    %v2113 = vshrl.u32 %v2112, 7
    %v2114 = vsub.s32 0, %v2113
    %v2115 = vrot.slane %v1239, %v2114
    %v2117 = vadd.f32 %v2107, %v2115
    %v2118 = vadd.f32 %v2108, %v2115
    %v2119 = vadd.f32 %v2109, %v2115
    %v2120 = vadd.f32 %v2110, %v2115
    %vm2121 = vcmp.gt.f32.partialorder %v2117, 0.0
    %vm2122 = vcmp.gt.f32.partialorder %v2118, 0.0
    %vm2123 = vcmp.gt.f32.partialorder %v2119, 0.0
    %vm2124 = vcmp.gt.f32.partialorder %v2120, 0.0
    %v2125 = vmin.f32 %v2117, 0.0
    %v2126 = vmin.f32 %v2118, 0.0
    %v2127 = vmin.f32 %v2119, 0.0
    %v2128 = vmin.f32 %v2120, 0.0
    %v2129 = vmul.f32 %v2125, 1.442695
    %v2130 = vpow.pop %v2129
    %v2131 = vmul.f32 %v2126, 1.442695
    %v2132 = vpow.pop %v2131
    %v2133 = vmul.f32 %v2127, 1.442695
    %v2134 = vpow.pop %v2133
    %v2135 = vmul.f32 %v2128, 1.442695
    %v2136 = vpow.pop %v2135
    %v2137 = vsub.f32 %v2130, 1.0
    %v2138 = vsub.f32 %v2132, 1.0
    %v2139 = vsub.f32 %v2134, 1.0
    %v2140 = vsub.f32 %v2136, 1.0
    %v2141 = vsel %vm2121, %v2117, %v2137
    %v2142 = vsel %vm2122, %v2118, %v2138
    %v2143 = vsel %vm2123, %v2119, %v2139
    %v2144 = vsel %vm2124, %v2120, %v2140
    %v2145 = vld [vmem:[#allocation25] sm:$0xff]
    %v2146 = vld [vmem:[#allocation25 + $0x8] sm:$0xff]
    %v2147 = vld [vmem:[#allocation25 + $0x10] sm:$0xff]
    %v2148 = vld [vmem:[#allocation25 + $0x18] sm:$0xff]
    %v2149 = vld [vmem:[#allocation25 + $0x20] sm:$0xff]
    %v2150 = vld [vmem:[#allocation25 + $0x28] sm:$0xff]
    %v2151 = vld [vmem:[#allocation25 + $0x30] sm:$0xff]
    %v2152 = vld [vmem:[#allocation25 + $0x38] sm:$0xff]
    %v2153 = vld [vmem:[#allocation25 + $0x40] sm:$0xff]
    %v2154 = vld [vmem:[#allocation25 + $0x48] sm:$0xff]
    %v2155 = vld [vmem:[#allocation25 + $0x50] sm:$0xff]
    %v2156 = vld [vmem:[#allocation25 + $0x58] sm:$0xff]
    %v2157 = vld [vmem:[#allocation25 + $0x60] sm:$0xff]
    %v2158 = vld [vmem:[#allocation25 + $0x68] sm:$0xff]
    %v2159 = vld [vmem:[#allocation25 + $0x70] sm:$0xff]
    %v2160 = vld [vmem:[#allocation25 + $0x78] sm:$0xff]
    %v2161 = vld [vmem:[#allocation26] sm:$0xf]
    %v2162 = vld [vmem:[#allocation28] sm:$0x1]
    %v2163 = vld [vmem:[#allocation29] sm:$0x1]
    %2164 = vmatprep.subr.mxu0 0.0
    %2165 = vmatpush1.msra.mxu0 %v2145
    %2166 = vmatprep.subr.mxu0 0.0
    %2167 = vmatpush1.msra.mxu0 %v2146
    %2168 = vmatprep.subr.mxu0 0.0
    %2169 = vmatpush1.msra.mxu0 %v2147
    %2170 = vmatprep.subr.mxu0 0.0
    %2171 = vmatpush1.msra.mxu0 %v2148
    %2172 = vmatprep.subr.mxu0 0.0
    %2173 = vmatpush1.msra.mxu0 %v2149
    %2174 = vmatprep.subr.mxu0 0.0
    %2175 = vmatpush1.msra.mxu0 %v2150
    %2176 = vmatprep.subr.mxu0 0.0
    %2177 = vmatpush1.msra.mxu0 %v2151
    %2178 = vmatprep.subr.mxu0 0.0
    %2179 = vmatpush1.msra.mxu0 %v2152
    %2180 = vmatprep.subr.mxu0 0.0
    %2181 = vmatpush1.msra.mxu0 %v2153
    %2182 = vmatprep.subr.mxu0 0.0
    %2183 = vmatpush1.msra.mxu0 %v2154
    %2184 = vmatprep.subr.mxu0 0.0
    %2185 = vmatpush1.msra.mxu0 %v2155
    %2186 = vmatprep.subr.mxu0 0.0
    %2187 = vmatpush1.msra.mxu0 %v2156
    %2188 = vmatprep.subr.mxu0 0.0
    %2189 = vmatpush1.msra.mxu0 %v2157
    %2190 = vmatprep.subr.mxu0 0.0
    %2191 = vmatpush1.msra.mxu0 %v2158
    %2192 = vmatprep.subr.mxu0 0.0
    %2193 = vmatpush1.msra.mxu0 %v2159
    %2194 = vmatprep.subr.mxu0 0.0
    %2195 = vmatpush1.msra.mxu0 %v2160
    %2196 = vmatprep.subr.mxu0 0.0
    %2197 = vmatpush1.msra.mxu0 0.0
    %2198 = vmatprep.subr.mxu0 0.0
    %2199 = vmatpush1.msra.mxu0 0.0
    %2200 = vmatprep.subr.mxu0 0.0
    %2201 = vmatpush1.msra.mxu0 0.0
    %2202 = vmatprep.subr.mxu0 0.0
    %2203 = vmatpush1.msra.mxu0 0.0
    %2204 = vmatprep.subr.mxu0 0.0
    %2205 = vmatpush1.msra.mxu0 0.0
    %2206 = vmatprep.subr.mxu0 0.0
    %2207 = vmatpush1.msra.mxu0 0.0
    %2208 = vmatprep.subr.mxu0 0.0
    %2209 = vmatpush1.msra.mxu0 0.0
    %2210 = vmatprep.subr.mxu0 0.0
    %2211 = vmatpush1.msra.mxu0 0.0
    %2212 = vmatprep.subr.mxu0 0.0
    %2213 = vmatpush1.msra.mxu0 0.0
    %2214 = vmatprep.subr.mxu0 0.0
    %2215 = vmatpush1.msra.mxu0 0.0
    %2216 = vmatprep.subr.mxu0 0.0
    %2217 = vmatpush1.msra.mxu0 0.0
    %2218 = vmatprep.subr.mxu0 0.0
    %2219 = vmatpush1.msra.mxu0 0.0
    %2220 = vmatprep.subr.mxu0 0.0
    %2221 = vmatpush1.msra.mxu0 0.0
    %2222 = vmatprep.subr.mxu0 0.0
    %2223 = vmatpush1.msra.mxu0 0.0
    %2224 = vmatprep.subr.mxu0 0.0
    %2225 = vmatpush1.msra.mxu0 0.0
    %2226 = vmatprep.subr.mxu0 0.0
    %2227 = vmatpush1.msra.mxu0 0.0
    %2228 = vmatprep.mubr.f32.mxu0 0.0
    %2229 = vmatmul.mubr.f32.gmra.mrb[0].mxu0 %v2141
    %v2230 = vpop.f32.mrb[0].mxu0
    %v2231 = vadd.f32 0.0, %v2230
    %v2232 = vpop.f32.mrb[0].mxu0
    %2233 = vmatprep.mubr.f32.mxu0 0.0
    %2234 = vmatmul.mubr.f32.gmra.mrb[0].mxu0 %v2142
    %v2235 = vpop.f32.mrb[0].mxu0
    %v2236 = vadd.f32 0.0, %v2235
    %v2237 = vpop.f32.mrb[0].mxu0
    %2238 = vmatprep.mubr.f32.mxu0 0.0
    %2239 = vmatmul.mubr.f32.gmra.mrb[0].mxu0 %v2143
    %v2240 = vpop.f32.mrb[0].mxu0
    %v2241 = vadd.f32 0.0, %v2240
    %v2242 = vpop.f32.mrb[0].mxu0
    %2243 = vmatprep.mubr.f32.mxu0 0.0
    %2244 = vmatmul.mubr.f32.gmra.mrb[0].mxu0 %v2144
    %v2245 = vpop.f32.mrb[0].mxu0
    %v2246 = vadd.f32 0.0, %v2245
    %v2247 = vpop.f32.mrb[0].mxu0
    %2248 = vdwg.mxu0
    %vm2249 = vcmask 228352
    %v2251 = vsel %vm2249, %v2161, 0
    %v2254 = vsel %vm2249, %v2231, 0
    %v2257 = vsel %vm2249, %v2236, 0
    %v2260 = vsel %vm2249, %v2241, 0
    %v2263 = vsel %vm2249, %v2246, 0
    %2265 = vmatprep.subr.mxu0 0.0
    %2266 = vmatpush1.xpose.msra.mxu0 %v2254
    %2267 = vmatprep.subr.mxu0 0.0
    %2268 = vmatpush1.xpose.msra.mxu0 %v2257
    %2269 = vmatprep.subr.mxu0 0.0
    %2270 = vmatpush1.xpose.msra.mxu0 %v2260
    %2271 = vmatprep.subr.mxu0 0.0
    %2272 = vmatpush1.xpose.msra.mxu0 %v2263
    %2273 = vmatprep.subr.mxu0 0.0
    %2274 = vmatpush1.xpose.msra.mxu0 0.0
    %2275 = vmatprep.subr.mxu0 0.0
    %2276 = vmatpush1.xpose.msra.mxu0 0.0
    %2277 = vmatprep.subr.mxu0 0.0
    %2278 = vmatpush1.xpose.msra.mxu0 0.0
    %2279 = vmatprep.subr.mxu0 0.0
    %2280 = vmatpush1.xpose.msra.mxu0 0.0
    %2281 = vmatprep.subr.mxu0 0.0
    %2282 = vmatpush1.xpose.msra.mxu0 0.0
    %2283 = vmatprep.subr.mxu0 0.0
    %2284 = vmatpush1.xpose.msra.mxu0 0.0
    %2285 = vmatprep.subr.mxu0 0.0
    %2286 = vmatpush1.xpose.msra.mxu0 0.0
    %2287 = vmatprep.subr.mxu0 0.0
    %2288 = vmatpush1.xpose.msra.mxu0 0.0
    %2289 = vmatprep.subr.mxu0 0.0
    %2290 = vmatpush1.xpose.msra.mxu0 0.0
    %2291 = vmatprep.subr.mxu0 0.0
    %2292 = vmatpush1.xpose.msra.mxu0 0.0
    %2293 = vmatprep.subr.mxu0 0.0
    %2294 = vmatpush1.xpose.msra.mxu0 0.0
    %2295 = vmatprep.subr.mxu0 0.0
    %2296 = vmatpush1.xpose.msra.mxu0 0.0
    %2297 = vmatprep.subr.mxu0 0.0
    %2298 = vmatpush1.xpose.msra.mxu0 0.0
    %2299 = vmatprep.subr.mxu0 0.0
    %2300 = vmatpush1.xpose.msra.mxu0 0.0
    %2301 = vmatprep.subr.mxu0 0.0
    %2302 = vmatpush1.xpose.msra.mxu0 0.0
    %2303 = vmatprep.subr.mxu0 0.0
    %2304 = vmatpush1.xpose.msra.mxu0 0.0
    %2305 = vmatprep.subr.mxu0 0.0
    %2306 = vmatpush1.xpose.msra.mxu0 0.0
    %2307 = vmatprep.subr.mxu0 0.0
    %2308 = vmatpush1.xpose.msra.mxu0 0.0
    %2309 = vmatprep.subr.mxu0 0.0
    %2310 = vmatpush1.xpose.msra.mxu0 0.0
    %2311 = vmatprep.subr.mxu0 0.0
    %2312 = vmatpush1.xpose.msra.mxu0 0.0
    %2313 = vmatprep.subr.mxu0 0.0
    %2314 = vmatpush1.xpose.msra.mxu0 0.0
    %2315 = vmatprep.subr.mxu0 0.0
    %2316 = vmatpush1.xpose.msra.mxu0 0.0
    %2317 = vmatprep.subr.mxu0 0.0
    %2318 = vmatpush1.xpose.msra.mxu0 0.0
    %2319 = vmatprep.subr.mxu0 0.0
    %2320 = vmatpush1.xpose.msra.mxu0 0.0
    %2321 = vmatprep.subr.mxu0 0.0
    %2322 = vmatpush1.xpose.msra.mxu0 0.0
    %2323 = vmatprep.subr.mxu0 0.0
    %2324 = vmatpush1.xpose.msra.mxu0 0.0
    %2325 = vmatprep.subr.mxu0 0.0
    %2326 = vmatpush1.xpose.msra.mxu0 0.0
    %2327 = vmatprep.subr.mxu0 0.0
    %2328 = vmatpush1.xpose.msra.mxu0 0.0
    %2329 = vmatprep.mubr.f32.mxu0 0.0
    %2330 = vmatmul.mubr.f32.gmra.mrb[0].mxu0 %v2251
    %v2331 = vpop.f32.mrb[0].mxu0
    %v2332 = vadd.f32 0.0, %v2331
    %v2333 = vpop.f32.mrb[0].mxu0
    %2334 = vdwg.mxu0
    %v2336 = vlaneseq
    %v2337 = vshrl.u32 %v2336, 7
    %v2338 = vsub.s32 0, %v2337
    %v2339 = vrot.slane %v2162, %v2338
    %v2341 = vmul.f32 %v2231, %v2339
    %v2342 = vmul.f32 %v2236, %v2339
    %v2343 = vmul.f32 %v2241, %v2339
    %v2344 = vmul.f32 %v2246, %v2339
    %vm2345 = vcmask 56320
    %v2346 = vsel %vm2345, %v2341, 0.0
    %2347 = vadd.xlane.f32.xlu0 %v2346
    %v2348 = vpop.xlane.xlu0 %2347
    %v2349 = vsel %vm2345, %v2342, 0.0
    %2350 = vadd.xlane.f32.xlu0 %v2349
    %v2351 = vpop.xlane.xlu0 %2350
    %v2352 = vsel %vm2345, %v2343, 0.0
    %2353 = vadd.xlane.f32.xlu0 %v2352
    %v2354 = vpop.xlane.xlu0 %2353
    %v2355 = vsel %vm2345, %v2344, 0.0
    %2356 = vadd.xlane.f32.xlu0 %v2355
    %v2357 = vpop.xlane.xlu0 %2356
    %v2358 = vlaneseq
    %v2359 = vshrl.u32 %v2358, 7
    %v2360 = vsub.s32 0, %v2359
    %v2361 = vrot.slane %v2332, %v2360
    %v2362 = vadd.f32 %v2348, %v2361
    %v2363 = vadd.f32 %v2351, %v2361
    %v2364 = vadd.f32 %v2354, %v2361
    %v2365 = vadd.f32 %v2357, %v2361
    %vm2366 = vcmp.gt.f32.partialorder %v2362, 0.0
    %vm2367 = vcmp.gt.f32.partialorder %v2363, 0.0
    %vm2368 = vcmp.gt.f32.partialorder %v2364, 0.0
    %vm2369 = vcmp.gt.f32.partialorder %v2365, 0.0
    %v2370 = vmul.f32 %v2362, 0.2
    %v2371 = vmul.f32 %v2363, 0.2
    %v2372 = vmul.f32 %v2364, 0.2
    %v2373 = vmul.f32 %v2365, 0.2
    %v2374 = vsel %vm2366, %v2362, %v2370
    %v2375 = vsel %vm2367, %v2363, %v2371
    %v2376 = vsel %vm2368, %v2364, %v2372
    %v2377 = vsel %vm2369, %v2365, %v2373
    %v2378 = vsel %vm287, %v2374, -1e+30
    %v2379 = vsel %vm288, %v2375, -1e+30
    %v2380 = vsel %vm289, %v2376, -1e+30
    %v2381 = vsel %vm290, %v2377, -1e+30
    %v2382 = vsel %vm476, %v2378, -inf
    %2383 = vmax.xlane.f32.xlu0 %v2382
    %v2384 = vpop.xlane.xlu0 %2383
    %v2385 = vsel %vm476, %v2379, -inf
    %2386 = vmax.xlane.f32.xlu0 %v2385
    %v2387 = vpop.xlane.xlu0 %2386
    %v2388 = vsel %vm476, %v2380, -inf
    %2389 = vmax.xlane.f32.xlu0 %v2388
    %v2390 = vpop.xlane.xlu0 %2389
    %v2391 = vsel %vm476, %v2381, -inf
    %2392 = vmax.xlane.f32.xlu0 %v2391
    %v2393 = vpop.xlane.xlu0 %2392
    %v2394 = vsub.f32 %v2378, %v2384
    %v2395 = vsub.f32 %v2379, %v2387
    %v2396 = vsub.f32 %v2380, %v2390
    %v2397 = vsub.f32 %v2381, %v2393
    %v2398 = vmul.f32 %v2394, 1.442695
    %v2399 = vpow.pop %v2398
    %v2400 = vmul.f32 %v2395, 1.442695
    %v2401 = vpow.pop %v2400
    %v2402 = vmul.f32 %v2396, 1.442695
    %v2403 = vpow.pop %v2402
    %v2404 = vmul.f32 %v2397, 1.442695
    %v2405 = vpow.pop %v2404
    %v2406 = vsel %vm287, %v2399, 0.0
    %v2407 = vsel %vm288, %v2401, 0.0
    %v2408 = vsel %vm289, %v2403, 0.0
    %v2409 = vsel %vm290, %v2405, 0.0
    %v2410 = vsel %vm476, %v2406, 0.0
    %2411 = vadd.xlane.f32.xlu0 %v2410
    %v2412 = vpop.xlane.xlu0 %2411
    %v2413 = vsel %vm476, %v2407, 0.0
    %2414 = vadd.xlane.f32.xlu0 %v2413
    %v2415 = vpop.xlane.xlu0 %2414
    %v2416 = vsel %vm476, %v2408, 0.0
    %2417 = vadd.xlane.f32.xlu0 %v2416
    %v2418 = vpop.xlane.xlu0 %2417
    %v2419 = vsel %vm476, %v2409, 0.0
    %2420 = vadd.xlane.f32.xlu0 %v2419
    %v2421 = vpop.xlane.xlu0 %2420
    %v2422 = vrcp.pop %v2412
    %v2423 = vrcp.pop %v2415
    %v2424 = vrcp.pop %v2418
    %v2425 = vrcp.pop %v2421
    %v2426 = vmul.f32 %v2406, %v2422
    %v2427 = vmul.f32 %v2407, %v2423
    %v2428 = vmul.f32 %v2408, %v2424
    %v2429 = vmul.f32 %v2409, %v2425
    %v2430 = vpack.c.bf16 %v2427, %v2426
    %v2431 = vpack.c.bf16 %v2429, %v2428
    %v2432 = vpack.c.bf16 %v2236, %v2231
    %v2433 = vpack.c.bf16 %v2246, %v2241
    %2438 = vrot.lane.b32.xlu0 %v2341, 121
    %v2439 = vpop.permute.xlu0 %2438
    %2440 = vrot.lane.b32.xlu0 %v2342, 121
    %v2441 = vpop.permute.xlu0 %2440
    %2442 = vrot.lane.b32.xlu0 %v2343, 121
    %v2443 = vpop.permute.xlu0 %2442
    %2444 = vrot.lane.b32.xlu0 %v2344, 121
    %v2445 = vpop.permute.xlu0 %2444
    %v2450 = vsel %vm2345, %v2439, 0.0
    %2451 = vadd.xlane.f32.xlu0 %v2450
    %v2452 = vpop.xlane.xlu0 %2451
    %v2453 = vsel %vm2345, %v2441, 0.0
    %2454 = vadd.xlane.f32.xlu0 %v2453
    %v2455 = vpop.xlane.xlu0 %2454
    %v2456 = vsel %vm2345, %v2443, 0.0
    %2457 = vadd.xlane.f32.xlu0 %v2456
    %v2458 = vpop.xlane.xlu0 %2457
    %v2459 = vsel %vm2345, %v2445, 0.0
    %2460 = vadd.xlane.f32.xlu0 %v2459
    %v2461 = vpop.xlane.xlu0 %2460
    %v2462 = vlaneseq
    %v2463 = vshrl.u32 %v2462, 7
    %v2464 = vsub.s32 1, %v2463
    %v2465 = vrot.slane %v2332, %v2464
    %v2466 = vadd.f32 %v2452, %v2465
    %v2467 = vadd.f32 %v2455, %v2465
    %v2468 = vadd.f32 %v2458, %v2465
    %v2469 = vadd.f32 %v2461, %v2465
    %vm2470 = vcmp.gt.f32.partialorder %v2466, 0.0
    %vm2471 = vcmp.gt.f32.partialorder %v2467, 0.0
    %vm2472 = vcmp.gt.f32.partialorder %v2468, 0.0
    %vm2473 = vcmp.gt.f32.partialorder %v2469, 0.0
    %v2474 = vmul.f32 %v2466, 0.2
    %v2475 = vmul.f32 %v2467, 0.2
    %v2476 = vmul.f32 %v2468, 0.2
    %v2477 = vmul.f32 %v2469, 0.2
    %v2478 = vsel %vm2470, %v2466, %v2474
    %v2479 = vsel %vm2471, %v2467, %v2475
    %v2480 = vsel %vm2472, %v2468, %v2476
    %v2481 = vsel %vm2473, %v2469, %v2477
    %v2482 = vsel %vm287, %v2478, -1e+30
    %v2483 = vsel %vm288, %v2479, -1e+30
    %v2484 = vsel %vm289, %v2480, -1e+30
    %v2485 = vsel %vm290, %v2481, -1e+30
    %v2486 = vsel %vm476, %v2482, -inf
    %2487 = vmax.xlane.f32.xlu0 %v2486
    %v2488 = vpop.xlane.xlu0 %2487
    %v2489 = vsel %vm476, %v2483, -inf
    %2490 = vmax.xlane.f32.xlu0 %v2489
    %v2491 = vpop.xlane.xlu0 %2490
    %v2492 = vsel %vm476, %v2484, -inf
    %2493 = vmax.xlane.f32.xlu0 %v2492
    %v2494 = vpop.xlane.xlu0 %2493
    %v2495 = vsel %vm476, %v2485, -inf
    %2496 = vmax.xlane.f32.xlu0 %v2495
    %v2497 = vpop.xlane.xlu0 %2496
    %v2498 = vsub.f32 %v2482, %v2488
    %v2499 = vsub.f32 %v2483, %v2491
    %v2500 = vsub.f32 %v2484, %v2494
    %v2501 = vsub.f32 %v2485, %v2497
    %v2502 = vmul.f32 %v2498, 1.442695
    %v2503 = vpow.pop %v2502
    %v2504 = vmul.f32 %v2499, 1.442695
    %v2505 = vpow.pop %v2504
    %v2506 = vmul.f32 %v2500, 1.442695
    %v2507 = vpow.pop %v2506
    %v2508 = vmul.f32 %v2501, 1.442695
    %v2509 = vpow.pop %v2508
    %v2510 = vsel %vm287, %v2503, 0.0
    %v2511 = vsel %vm288, %v2505, 0.0
    %v2512 = vsel %vm289, %v2507, 0.0
    %v2513 = vsel %vm290, %v2509, 0.0
    %v2514 = vsel %vm476, %v2510, 0.0
    %2515 = vadd.xlane.f32.xlu0 %v2514
    %v2516 = vpop.xlane.xlu0 %2515
    %v2517 = vsel %vm476, %v2511, 0.0
    %2518 = vadd.xlane.f32.xlu0 %v2517
    %v2519 = vpop.xlane.xlu0 %2518
    %v2520 = vsel %vm476, %v2512, 0.0
    %2521 = vadd.xlane.f32.xlu0 %v2520
    %v2522 = vpop.xlane.xlu0 %2521
    %v2523 = vsel %vm476, %v2513, 0.0
    %2524 = vadd.xlane.f32.xlu0 %v2523
    %v2525 = vpop.xlane.xlu0 %2524
    %v2526 = vrcp.pop %v2516
    %v2527 = vrcp.pop %v2519
    %v2528 = vrcp.pop %v2522
    %v2529 = vrcp.pop %v2525
    %v2530 = vmul.f32 %v2510, %v2526
    %v2531 = vmul.f32 %v2511, %v2527
    %v2532 = vmul.f32 %v2512, %v2528
    %v2533 = vmul.f32 %v2513, %v2529
    %v2534 = vpack.c.bf16 %v2531, %v2530
    %v2535 = vpack.c.bf16 %v2533, %v2532
    %2538 = vrot.lane.b32.xlu0 %v2432, 121
    %v2539 = vpop.permute.xlu0 %2538
    %2540 = vrot.lane.b32.xlu0 %v2433, 121
    %v2541 = vpop.permute.xlu0 %2540
    %v2545 = vsel %vm476, %v2534, 0
    %v2548 = vsel %vm476, %v2535, 0
    %2550 = vmatprep.subr.bf16.mxu0 0
    %2551 = vmatpush1.bf16.msra.mxu0 %v2539
    %2552 = vmatprep.subr.bf16.mxu0 0
    %2553 = vmatpush1.bf16.msra.mxu0 %v2541
    %2554 = vmatprep.subr.bf16.mxu0 0
    %2555 = vmatpush1.bf16.msra.mxu0 0
    %2556 = vmatprep.subr.bf16.mxu0 0
    %2557 = vmatpush1.bf16.msra.mxu0 0
    %2558 = vmatprep.subr.bf16.mxu0 0
    %2559 = vmatpush1.bf16.msra.mxu0 0
    %2560 = vmatprep.subr.bf16.mxu0 0
    %2561 = vmatpush1.bf16.msra.mxu0 0
    %2562 = vmatprep.subr.bf16.mxu0 0
    %2563 = vmatpush1.bf16.msra.mxu0 0
    %2564 = vmatprep.subr.bf16.mxu0 0
    %2565 = vmatpush1.bf16.msra.mxu0 0
    %2566 = vmatprep.subr.bf16.mxu0 0
    %2567 = vmatpush1.bf16.msra.mxu0 0
    %2568 = vmatprep.subr.bf16.mxu0 0
    %2569 = vmatpush1.bf16.msra.mxu0 0
    %2570 = vmatprep.subr.bf16.mxu0 0
    %2571 = vmatpush1.bf16.msra.mxu0 0
    %2572 = vmatprep.subr.bf16.mxu0 0
    %2573 = vmatpush1.bf16.msra.mxu0 0
    %2574 = vmatprep.subr.bf16.mxu0 0
    %2575 = vmatpush1.bf16.msra.mxu0 0
    %2576 = vmatprep.subr.bf16.mxu0 0
    %2577 = vmatpush1.bf16.msra.mxu0 0
    %2578 = vmatprep.subr.bf16.mxu0 0
    %2579 = vmatpush1.bf16.msra.mxu0 0
    %2580 = vmatprep.subr.bf16.mxu0 0
    %2581 = vmatpush1.bf16.msra.mxu0 0
    %2582 = vmatprep.mubr.bf16.mxu0 0
    %2583 = vmatmul.mubr.bf16.gmra.mrb[0].mxu0 %v2545
    %v2584 = vpop.f32.mrb[0].mxu0
    %v2585 = vadd.f32 0.0, %v2584
    %v2586 = vpop.f32.mrb[0].mxu0
    %v2587 = vpop.f32.mrb[0].mxu0
    %v2588 = vadd.f32 0.0, %v2587
    %v2589 = vpop.f32.mrb[0].mxu0
    %2590 = vmatprep.mubr.bf16.mxu0 0
    %2591 = vmatmul.mubr.bf16.gmra.mrb[0].mxu0 %v2548
    %v2592 = vpop.f32.mrb[0].mxu0
    %v2593 = vadd.f32 0.0, %v2592
    %v2594 = vpop.f32.mrb[0].mxu0
    %v2595 = vpop.f32.mrb[0].mxu0
    %v2596 = vadd.f32 0.0, %v2595
    %v2597 = vpop.f32.mrb[0].mxu0
    %2598 = vdwg.mxu0
    %2599 = vrot.lane.b32.xlu0 %v2341, 114
    %v2600 = vpop.permute.xlu0 %2599
    %2601 = vrot.lane.b32.xlu0 %v2342, 114
    %v2602 = vpop.permute.xlu0 %2601
    %2603 = vrot.lane.b32.xlu0 %v2343, 114
    %v2604 = vpop.permute.xlu0 %2603
    %2605 = vrot.lane.b32.xlu0 %v2344, 114
    %v2606 = vpop.permute.xlu0 %2605
    %v2611 = vsel %vm2345, %v2600, 0.0
    %2612 = vadd.xlane.f32.xlu0 %v2611
    %v2613 = vpop.xlane.xlu0 %2612
    %v2614 = vsel %vm2345, %v2602, 0.0
    %2615 = vadd.xlane.f32.xlu0 %v2614
    %v2616 = vpop.xlane.xlu0 %2615
    %v2617 = vsel %vm2345, %v2604, 0.0
    %2618 = vadd.xlane.f32.xlu0 %v2617
    %v2619 = vpop.xlane.xlu0 %2618
    %v2620 = vsel %vm2345, %v2606, 0.0
    %2621 = vadd.xlane.f32.xlu0 %v2620
    %v2622 = vpop.xlane.xlu0 %2621
    %v2623 = vlaneseq
    %v2624 = vshrl.u32 %v2623, 7
    %v2625 = vsub.s32 2, %v2624
    %v2626 = vrot.slane %v2332, %v2625
    %v2627 = vadd.f32 %v2613, %v2626
    %v2628 = vadd.f32 %v2616, %v2626
    %v2629 = vadd.f32 %v2619, %v2626
    %v2630 = vadd.f32 %v2622, %v2626
    %vm2631 = vcmp.gt.f32.partialorder %v2627, 0.0
    %vm2632 = vcmp.gt.f32.partialorder %v2628, 0.0
    %vm2633 = vcmp.gt.f32.partialorder %v2629, 0.0
    %vm2634 = vcmp.gt.f32.partialorder %v2630, 0.0
    %v2635 = vmul.f32 %v2627, 0.2
    %v2636 = vmul.f32 %v2628, 0.2
    %v2637 = vmul.f32 %v2629, 0.2
    %v2638 = vmul.f32 %v2630, 0.2
    %v2639 = vsel %vm2631, %v2627, %v2635
    %v2640 = vsel %vm2632, %v2628, %v2636
    %v2641 = vsel %vm2633, %v2629, %v2637
    %v2642 = vsel %vm2634, %v2630, %v2638
    %v2643 = vsel %vm287, %v2639, -1e+30
    %v2644 = vsel %vm288, %v2640, -1e+30
    %v2645 = vsel %vm289, %v2641, -1e+30
    %v2646 = vsel %vm290, %v2642, -1e+30
    %v2647 = vsel %vm476, %v2643, -inf
    %2648 = vmax.xlane.f32.xlu0 %v2647
    %v2649 = vpop.xlane.xlu0 %2648
    %v2650 = vsel %vm476, %v2644, -inf
    %2651 = vmax.xlane.f32.xlu0 %v2650
    %v2652 = vpop.xlane.xlu0 %2651
    %v2653 = vsel %vm476, %v2645, -inf
    %2654 = vmax.xlane.f32.xlu0 %v2653
    %v2655 = vpop.xlane.xlu0 %2654
    %v2656 = vsel %vm476, %v2646, -inf
    %2657 = vmax.xlane.f32.xlu0 %v2656
    %v2658 = vpop.xlane.xlu0 %2657
    %v2659 = vsub.f32 %v2643, %v2649
    %v2660 = vsub.f32 %v2644, %v2652
    %v2661 = vsub.f32 %v2645, %v2655
    %v2662 = vsub.f32 %v2646, %v2658
    %v2663 = vmul.f32 %v2659, 1.442695
    %v2664 = vpow.pop %v2663
    %v2665 = vmul.f32 %v2660, 1.442695
    %v2666 = vpow.pop %v2665
    %v2667 = vmul.f32 %v2661, 1.442695
    %v2668 = vpow.pop %v2667
    %v2669 = vmul.f32 %v2662, 1.442695
    %v2670 = vpow.pop %v2669
    %v2671 = vsel %vm287, %v2664, 0.0
    %v2672 = vsel %vm288, %v2666, 0.0
    %v2673 = vsel %vm289, %v2668, 0.0
    %v2674 = vsel %vm290, %v2670, 0.0
    %v2675 = vsel %vm476, %v2671, 0.0
    %2676 = vadd.xlane.f32.xlu0 %v2675
    %v2677 = vpop.xlane.xlu0 %2676
    %v2678 = vsel %vm476, %v2672, 0.0
    %2679 = vadd.xlane.f32.xlu0 %v2678
    %v2680 = vpop.xlane.xlu0 %2679
    %v2681 = vsel %vm476, %v2673, 0.0
    %2682 = vadd.xlane.f32.xlu0 %v2681
    %v2683 = vpop.xlane.xlu0 %2682
    %v2684 = vsel %vm476, %v2674, 0.0
    %2685 = vadd.xlane.f32.xlu0 %v2684
    %v2686 = vpop.xlane.xlu0 %2685
    %v2687 = vrcp.pop %v2677
    %v2688 = vrcp.pop %v2680
    %v2689 = vrcp.pop %v2683
    %v2690 = vrcp.pop %v2686
    %v2691 = vmul.f32 %v2671, %v2687
    %v2692 = vmul.f32 %v2672, %v2688
    %v2693 = vmul.f32 %v2673, %v2689
    %v2694 = vmul.f32 %v2674, %v2690
    %v2695 = vpack.c.bf16 %v2692, %v2691
    %v2696 = vpack.c.bf16 %v2694, %v2693
    %2697 = vrot.lane.b32.xlu0 %v2432, 114
    %v2698 = vpop.permute.xlu0 %2697
    %2699 = vrot.lane.b32.xlu0 %v2433, 114
    %v2700 = vpop.permute.xlu0 %2699
    %v2704 = vsel %vm476, %v2695, 0
    %v2707 = vsel %vm476, %v2696, 0
    %2709 = vmatprep.subr.bf16.mxu0 0
    %2710 = vmatpush1.bf16.msra.mxu0 %v2698
    %2711 = vmatprep.subr.bf16.mxu0 0
    %2712 = vmatpush1.bf16.msra.mxu0 %v2700
    %2713 = vmatprep.subr.bf16.mxu0 0
    %2714 = vmatpush1.bf16.msra.mxu0 0
    %2715 = vmatprep.subr.bf16.mxu0 0
    %2716 = vmatpush1.bf16.msra.mxu0 0
    %2717 = vmatprep.subr.bf16.mxu0 0
    %2718 = vmatpush1.bf16.msra.mxu0 0
    %2719 = vmatprep.subr.bf16.mxu0 0
    %2720 = vmatpush1.bf16.msra.mxu0 0
    %2721 = vmatprep.subr.bf16.mxu0 0
    %2722 = vmatpush1.bf16.msra.mxu0 0
    %2723 = vmatprep.subr.bf16.mxu0 0
    %2724 = vmatpush1.bf16.msra.mxu0 0
    %2725 = vmatprep.subr.bf16.mxu0 0
    %2726 = vmatpush1.bf16.msra.mxu0 0
    %2727 = vmatprep.subr.bf16.mxu0 0
    %2728 = vmatpush1.bf16.msra.mxu0 0
    %2729 = vmatprep.subr.bf16.mxu0 0
    %2730 = vmatpush1.bf16.msra.mxu0 0
    %2731 = vmatprep.subr.bf16.mxu0 0
    %2732 = vmatpush1.bf16.msra.mxu0 0
    %2733 = vmatprep.subr.bf16.mxu0 0
    %2734 = vmatpush1.bf16.msra.mxu0 0
    %2735 = vmatprep.subr.bf16.mxu0 0
    %2736 = vmatpush1.bf16.msra.mxu0 0
    %2737 = vmatprep.subr.bf16.mxu0 0
    %2738 = vmatpush1.bf16.msra.mxu0 0
    %2739 = vmatprep.subr.bf16.mxu0 0
    %2740 = vmatpush1.bf16.msra.mxu0 0
    %2741 = vmatprep.mubr.bf16.mxu0 0
    %2742 = vmatmul.mubr.bf16.gmra.mrb[0].mxu0 %v2704
    %v2743 = vpop.f32.mrb[0].mxu0
    %v2744 = vadd.f32 0.0, %v2743
    %v2745 = vpop.f32.mrb[0].mxu0
    %v2746 = vpop.f32.mrb[0].mxu0
    %v2747 = vadd.f32 0.0, %v2746
    %v2748 = vpop.f32.mrb[0].mxu0
    %2749 = vmatprep.mubr.bf16.mxu0 0
    %2750 = vmatmul.mubr.bf16.gmra.mrb[0].mxu0 %v2707
    %v2751 = vpop.f32.mrb[0].mxu0
    %v2752 = vadd.f32 0.0, %v2751
    %v2753 = vpop.f32.mrb[0].mxu0
    %v2754 = vpop.f32.mrb[0].mxu0
    %v2755 = vadd.f32 0.0, %v2754
    %v2756 = vpop.f32.mrb[0].mxu0
    %2757 = vdwg.mxu0
    %2758 = vrot.lane.b32.xlu0 %v2341, 107
    %v2759 = vpop.permute.xlu0 %2758
    %2760 = vrot.lane.b32.xlu0 %v2342, 107
    %v2761 = vpop.permute.xlu0 %2760
    %2762 = vrot.lane.b32.xlu0 %v2343, 107
    %v2763 = vpop.permute.xlu0 %2762
    %2764 = vrot.lane.b32.xlu0 %v2344, 107
    %v2765 = vpop.permute.xlu0 %2764
    %v2770 = vsel %vm2345, %v2759, 0.0
    %2771 = vadd.xlane.f32.xlu0 %v2770
    %v2772 = vpop.xlane.xlu0 %2771
    %v2773 = vsel %vm2345, %v2761, 0.0
    %2774 = vadd.xlane.f32.xlu0 %v2773
    %v2775 = vpop.xlane.xlu0 %2774
    %v2776 = vsel %vm2345, %v2763, 0.0
    %2777 = vadd.xlane.f32.xlu0 %v2776
    %v2778 = vpop.xlane.xlu0 %2777
    %v2779 = vsel %vm2345, %v2765, 0.0
    %2780 = vadd.xlane.f32.xlu0 %v2779
    %v2781 = vpop.xlane.xlu0 %2780
    %v2782 = vlaneseq
    %v2783 = vshrl.u32 %v2782, 7
    %v2784 = vsub.s32 3, %v2783
    %v2785 = vrot.slane %v2332, %v2784
    %v2786 = vadd.f32 %v2772, %v2785
    %v2787 = vadd.f32 %v2775, %v2785
    %v2788 = vadd.f32 %v2778, %v2785
    %v2789 = vadd.f32 %v2781, %v2785
    %vm2790 = vcmp.gt.f32.partialorder %v2786, 0.0
    %vm2791 = vcmp.gt.f32.partialorder %v2787, 0.0
    %vm2792 = vcmp.gt.f32.partialorder %v2788, 0.0
    %vm2793 = vcmp.gt.f32.partialorder %v2789, 0.0
    %v2794 = vmul.f32 %v2786, 0.2
    %v2795 = vmul.f32 %v2787, 0.2
    %v2796 = vmul.f32 %v2788, 0.2
    %v2797 = vmul.f32 %v2789, 0.2
    %v2798 = vsel %vm2790, %v2786, %v2794
    %v2799 = vsel %vm2791, %v2787, %v2795
    %v2800 = vsel %vm2792, %v2788, %v2796
    %v2801 = vsel %vm2793, %v2789, %v2797
    %v2802 = vsel %vm287, %v2798, -1e+30
    %v2803 = vsel %vm288, %v2799, -1e+30
    %v2804 = vsel %vm289, %v2800, -1e+30
    %v2805 = vsel %vm290, %v2801, -1e+30
    %v2806 = vsel %vm476, %v2802, -inf
    %2807 = vmax.xlane.f32.xlu0 %v2806
    %v2808 = vpop.xlane.xlu0 %2807
    %v2809 = vsel %vm476, %v2803, -inf
    %2810 = vmax.xlane.f32.xlu0 %v2809
    %v2811 = vpop.xlane.xlu0 %2810
    %v2812 = vsel %vm476, %v2804, -inf
    %2813 = vmax.xlane.f32.xlu0 %v2812
    %v2814 = vpop.xlane.xlu0 %2813
    %v2815 = vsel %vm476, %v2805, -inf
    %2816 = vmax.xlane.f32.xlu0 %v2815
    %v2817 = vpop.xlane.xlu0 %2816
    %v2818 = vsub.f32 %v2802, %v2808
    %v2819 = vsub.f32 %v2803, %v2811
    %v2820 = vsub.f32 %v2804, %v2814
    %v2821 = vsub.f32 %v2805, %v2817
    %v2822 = vmul.f32 %v2818, 1.442695
    %v2823 = vpow.pop %v2822
    %v2824 = vmul.f32 %v2819, 1.442695
    %v2825 = vpow.pop %v2824
    %v2826 = vmul.f32 %v2820, 1.442695
    %v2827 = vpow.pop %v2826
    %v2828 = vmul.f32 %v2821, 1.442695
    %v2829 = vpow.pop %v2828
    %v2830 = vsel %vm287, %v2823, 0.0
    %v2831 = vsel %vm288, %v2825, 0.0
    %v2832 = vsel %vm289, %v2827, 0.0
    %v2833 = vsel %vm290, %v2829, 0.0
    %v2834 = vsel %vm476, %v2830, 0.0
    %2835 = vadd.xlane.f32.xlu0 %v2834
    %v2836 = vpop.xlane.xlu0 %2835
    %v2837 = vsel %vm476, %v2831, 0.0
    %2838 = vadd.xlane.f32.xlu0 %v2837
    %v2839 = vpop.xlane.xlu0 %2838
    %v2840 = vsel %vm476, %v2832, 0.0
    %2841 = vadd.xlane.f32.xlu0 %v2840
    %v2842 = vpop.xlane.xlu0 %2841
    %v2843 = vsel %vm476, %v2833, 0.0
    %2844 = vadd.xlane.f32.xlu0 %v2843
    %v2845 = vpop.xlane.xlu0 %2844
    %v2846 = vrcp.pop %v2836
    %v2847 = vrcp.pop %v2839
    %v2848 = vrcp.pop %v2842
    %v2849 = vrcp.pop %v2845
    %v2850 = vmul.f32 %v2830, %v2846
    %v2851 = vmul.f32 %v2831, %v2847
    %v2852 = vmul.f32 %v2832, %v2848
    %v2853 = vmul.f32 %v2833, %v2849
    %v2854 = vpack.c.bf16 %v2851, %v2850
    %v2855 = vpack.c.bf16 %v2853, %v2852
    %2856 = vrot.lane.b32.xlu0 %v2432, 107
    %v2857 = vpop.permute.xlu0 %2856
    %2858 = vrot.lane.b32.xlu0 %v2433, 107
    %v2859 = vpop.permute.xlu0 %2858
    %v2863 = vsel %vm476, %v2854, 0
    %v2866 = vsel %vm476, %v2855, 0
    %2868 = vmatprep.subr.bf16.mxu0 0
    %2869 = vmatpush1.bf16.msra.mxu0 %v2857
    %2870 = vmatprep.subr.bf16.mxu0 0
    %2871 = vmatpush1.bf16.msra.mxu0 %v2859
    %2872 = vmatprep.subr.bf16.mxu0 0
    %2873 = vmatpush1.bf16.msra.mxu0 0
    %2874 = vmatprep.subr.bf16.mxu0 0
    %2875 = vmatpush1.bf16.msra.mxu0 0
    %2876 = vmatprep.subr.bf16.mxu0 0
    %2877 = vmatpush1.bf16.msra.mxu0 0
    %2878 = vmatprep.subr.bf16.mxu0 0
    %2879 = vmatpush1.bf16.msra.mxu0 0
    %2880 = vmatprep.subr.bf16.mxu0 0
    %2881 = vmatpush1.bf16.msra.mxu0 0
    %2882 = vmatprep.subr.bf16.mxu0 0
    %2883 = vmatpush1.bf16.msra.mxu0 0
    %2884 = vmatprep.subr.bf16.mxu0 0
    %2885 = vmatpush1.bf16.msra.mxu0 0
    %2886 = vmatprep.subr.bf16.mxu0 0
    %2887 = vmatpush1.bf16.msra.mxu0 0
    %2888 = vmatprep.subr.bf16.mxu0 0
    %2889 = vmatpush1.bf16.msra.mxu0 0
    %2890 = vmatprep.subr.bf16.mxu0 0
    %2891 = vmatpush1.bf16.msra.mxu0 0
    %2892 = vmatprep.subr.bf16.mxu0 0
    %2893 = vmatpush1.bf16.msra.mxu0 0
    %2894 = vmatprep.subr.bf16.mxu0 0
    %2895 = vmatpush1.bf16.msra.mxu0 0
    %2896 = vmatprep.subr.bf16.mxu0 0
    %2897 = vmatpush1.bf16.msra.mxu0 0
    %2898 = vmatprep.subr.bf16.mxu0 0
    %2899 = vmatpush1.bf16.msra.mxu0 0
    %2900 = vmatprep.mubr.bf16.mxu0 0
    %2901 = vmatmul.mubr.bf16.gmra.mrb[0].mxu0 %v2863
    %v2902 = vpop.f32.mrb[0].mxu0
    %v2903 = vadd.f32 0.0, %v2902
    %v2904 = vpop.f32.mrb[0].mxu0
    %v2905 = vpop.f32.mrb[0].mxu0
    %v2906 = vadd.f32 0.0, %v2905
    %v2907 = vpop.f32.mrb[0].mxu0
    %2908 = vmatprep.mubr.bf16.mxu0 0
    %2909 = vmatmul.mubr.bf16.gmra.mrb[0].mxu0 %v2866
    %v2910 = vpop.f32.mrb[0].mxu0
    %v2911 = vadd.f32 0.0, %v2910
    %v2912 = vpop.f32.mrb[0].mxu0
    %v2913 = vpop.f32.mrb[0].mxu0
    %v2914 = vadd.f32 0.0, %v2913
    %v2915 = vpop.f32.mrb[0].mxu0
    %2916 = vdwg.mxu0
    %v2918 = vsel %vm476, %v2430, 0
    %v2921 = vsel %vm476, %v2431, 0
    %2923 = vmatprep.subr.bf16.mxu0 0
    %2924 = vmatpush1.bf16.msra.mxu0 %v2432
    %2925 = vmatprep.subr.bf16.mxu0 0
    %2926 = vmatpush1.bf16.msra.mxu0 %v2433
    %2927 = vmatprep.subr.bf16.mxu0 0
    %2928 = vmatpush1.bf16.msra.mxu0 0
    %2929 = vmatprep.subr.bf16.mxu0 0
    %2930 = vmatpush1.bf16.msra.mxu0 0
    %2931 = vmatprep.subr.bf16.mxu0 0
    %2932 = vmatpush1.bf16.msra.mxu0 0
    %2933 = vmatprep.subr.bf16.mxu0 0
    %2934 = vmatpush1.bf16.msra.mxu0 0
    %2935 = vmatprep.subr.bf16.mxu0 0
    %2936 = vmatpush1.bf16.msra.mxu0 0
    %2937 = vmatprep.subr.bf16.mxu0 0
    %2938 = vmatpush1.bf16.msra.mxu0 0
    %2939 = vmatprep.subr.bf16.mxu0 0
    %2940 = vmatpush1.bf16.msra.mxu0 0
    %2941 = vmatprep.subr.bf16.mxu0 0
    %2942 = vmatpush1.bf16.msra.mxu0 0
    %2943 = vmatprep.subr.bf16.mxu0 0
    %2944 = vmatpush1.bf16.msra.mxu0 0
    %2945 = vmatprep.subr.bf16.mxu0 0
    %2946 = vmatpush1.bf16.msra.mxu0 0
    %2947 = vmatprep.subr.bf16.mxu0 0
    %2948 = vmatpush1.bf16.msra.mxu0 0
    %2949 = vmatprep.subr.bf16.mxu0 0
    %2950 = vmatpush1.bf16.msra.mxu0 0
    %2951 = vmatprep.subr.bf16.mxu0 0
    %2952 = vmatpush1.bf16.msra.mxu0 0
    %2953 = vmatprep.subr.bf16.mxu0 0
    %2954 = vmatpush1.bf16.msra.mxu0 0
    %2955 = vmatprep.mubr.bf16.mxu0 0
    %2956 = vmatmul.mubr.bf16.gmra.mrb[0].mxu0 %v2918
    %v2957 = vpop.f32.mrb[0].mxu0
    %v2958 = vadd.f32 %v2585, %v2957
    %v2959 = vpop.f32.mrb[0].mxu0
    %v2960 = vpop.f32.mrb[0].mxu0
    %v2961 = vadd.f32 %v2588, %v2960
    %v2962 = vpop.f32.mrb[0].mxu0
    %2963 = vmatprep.mubr.bf16.mxu0 0
    %2964 = vmatmul.mubr.bf16.gmra.mrb[0].mxu0 %v2921
    %v2965 = vpop.f32.mrb[0].mxu0
    %v2966 = vadd.f32 %v2593, %v2965
    %v2967 = vpop.f32.mrb[0].mxu0
    %v2968 = vpop.f32.mrb[0].mxu0
    %v2969 = vadd.f32 %v2596, %v2968
    %v2970 = vpop.f32.mrb[0].mxu0
    %2971 = vdwg.mxu0
    %v2972 = vadd.f32 %v2958, %v2744
    %v2973 = vadd.f32 %v2961, %v2747
    %v2974 = vadd.f32 %v2966, %v2752
    %v2975 = vadd.f32 %v2969, %v2755
    %v2976 = vadd.f32 %v2972, %v2903
    %v2977 = vadd.f32 %v2973, %v2906
    %v2978 = vadd.f32 %v2974, %v2911
    %v2979 = vadd.f32 %v2975, %v2914
    %v2980 = vmul.f32 %v2976, 0.25
    %v2981 = vmul.f32 %v2977, 0.25
    %v2982 = vmul.f32 %v2978, 0.25
    %v2983 = vmul.f32 %v2979, 0.25
    %v2985 = vlaneseq
    %v2986 = vshrl.u32 %v2985, 7
    %v2987 = vsub.s32 0, %v2986
    %v2988 = vrot.slane %v2163, %v2987
    %v2990 = vadd.f32 %v2980, %v2988
    %v2991 = vadd.f32 %v2981, %v2988
    %v2992 = vadd.f32 %v2982, %v2988
    %v2993 = vadd.f32 %v2983, %v2988
    %2994 = vst.msk [vmem:[#allocation31] sm:$0xff] %vm2345, %v2990
    %2995 = vst.msk [vmem:[#allocation31 + $0x8] sm:$0xff] %vm2345, %v2991
    %2996 = vst.msk [vmem:[#allocation31 + $0x10] sm:$0xff] %vm2345, %v2992
    %2997 = vst.msk [vmem:[#allocation31 + $0x18] sm:$0xff] %vm2345, %v2993
    // Predicated region
    $region146: #{_lambda_.1} parent=1 // pred_check
      _
    $region147: #{_lambda_.1} parent=1 // pred_check_branch
      %2999 = sbr.rel (0) target = $region149
    $region148: #{_lambda_.1} parent=1 // pred_region
      %s3001 = ssub.s32 512, 512
      %3002 = vsyncadd [#allocation4], %s3001
      %s3003 = sshll.u32 [#allocation31], 4
      %s3004 = int_to_ptr.vmem [resolvable:$true] %s3003
      %3009 = dma.vmem_to_hbm [thread:$0]  %s3004, 512, %s18, [#allocation4], 128, 128, 8
    $region149: #{_lambda_.1} parent=1 // pred_fallthru
      _
    // Predicated region
    $region150: #{_lambda_.1} parent=1 // pred_check
      _
    $region151: #{_lambda_.1} parent=1 // pred_check_branch
      %3011 = sbr.rel (0) target = $region153
    $region152: #{_lambda_.1} parent=1 // pred_region
      %3012 = dma.done [#allocation4], 512
    $region153: #{_lambda_.1} parent=1 // pred_fallthru
      _
    %3013 = vsyncpa [#allocation3], 1
    %3014 = vsyncpa [#allocation6], 1
    %3015 = vsyncpa [#allocation9], 1
    %3016 = vsyncpa [#allocation12], 1
    %3017 = vsyncpa [#allocation15], 1
    %3018 = vsyncpa [#allocation18], 1
    %3019 = vsyncpa [#allocation21], 1
    %3020 = vsyncpa [#allocation24], 1
    %3021 = vsyncpa [#allocation27], 1
    %3022 = vsyncpa [#allocation30], 1
    %3023 = vsyncpa [#allocation4], 1

</llo_original>
